<compile_context>
chip_gen: v6e
topology: v6e:2x2x1
jax: 0.10.0
libtpu: 0.0.40
codegen_flags: <defaults>
</compile_context>

<pallas_src>
import functools

import jax
import jax.numpy as jnp
from jax import lax
from jax.experimental import pallas as pl
from jax.experimental.pallas import tpu as pltpu


def _knn_softmax_kernel(x_ref, xt_ref, sqr_ref, sqc_ref, labr_ref, labc_ref,
                        out_ref, *, n_real, n_pad, tm, k, alpha, exact_ties):
    i = pl.program_id(0)
    row0 = i * tm

    x_blk = x_ref[...]        # (tm, d_pad)   bf16 queries of this row block
    x_t = xt_ref[...]         # (d_pad, n_pad) bf16 keys, pre-transposed, resident
    sq_row = sqr_ref[...]     # (1, n_pad)    f32 per-key |x|^2  (padded keys = +BIG)
    sq_col = sqc_ref[...]     # (tm, 1)       f32 per-query |x|^2
    lab_row = labr_ref[...]   # (1, n_pad)    labels as f32 (pad = sentinel)
    lab_col = labc_ref[...]   # (tm, 1)       this block's labels

    # ---- pairwise squared euclidean distances for this row block ----
    gram = jnp.dot(x_blk, x_t, preferred_element_type=jnp.float32)   # (tm, n_pad)
    dist2 = jnp.maximum(sq_col + sq_row - 2.0 * gram, 1e-12)
    # padded key columns have sq_row = +BIG -> dist2 ~ BIG -> never selected

    # ---- boolean masks ----
    col_ids = lax.broadcasted_iota(jnp.int32, (tm, n_pad), 1)
    row_ids = lax.broadcasted_iota(jnp.int32, (tm, 1), 0) + row0     # global row id
    pick = col_ids == row_ids                  # diagonal of the full matrix
    same = lab_row == lab_col                  # same-class (pad sentinel never matches)
    posm = same & jnp.logical_not(pick)        # same class, off-diagonal
    negm = jnp.logical_not(same)               # different class (+pad cols, dist=BIG)

    big = jnp.float32(1e30)
    one = jnp.float32(1.0)
    zero = jnp.float32(0.0)

    # ---- per-row threshold^2 = (k+1)-th smallest off-diagonal squared dist ----
    # sqrt is monotone on the clamped values, so ranking dist2 == ranking dist.
    working = jnp.where(pick, big, dist2)
    if exact_ties:
        # Exact order statistic under ties (debug path).
        removed = jnp.zeros((tm, 1), jnp.float32)
        thr2 = jnp.full((tm, 1), big, jnp.float32)
        kf = jnp.float32(k)
        for _ in range(k + 1):
            m = jnp.min(working, axis=1, keepdims=True)
            ties = working == m
            c = jnp.sum(jnp.where(ties, one, zero), axis=1, keepdims=True)
            hit = (removed <= kf) & (removed + c > kf)
            thr2 = jnp.where(hit, m, thr2)
            working = jnp.where(ties, big, working)
            removed = removed + c
    else:
        # Slim production path: remove the current min k times, then take the
        # min.  Exact when all pairwise distances are distinct (continuous
        # f32 data); exact ties would all be removed in one step.
        for _ in range(k):
            m = jnp.min(working, axis=1, keepdims=True)
            working = jnp.where(working == m, big, working)
        thr2 = jnp.min(working, axis=1, keepdims=True)

    # ---- neighbours strictly below the threshold (matches reference '<') ----
    below = dist2 < thr2
    pos_sel = posm & below
    neg_sel = negm & below
    npos = jnp.sum(jnp.where(pos_sel, one, zero), axis=1, keepdims=True)
    nneg = jnp.sum(jnp.where(neg_sel, one, zero), axis=1, keepdims=True)

    e = jnp.exp(-alpha * jnp.sqrt(dist2))      # single sqrt/exp slab pass
    pos_logit_main = jnp.sum(jnp.where(pos_sel, e, zero), axis=1, keepdims=True)
    neg_logit = jnp.sum(jnp.where(neg_sel, e, zero), axis=1, keepdims=True)

    # fallback pos_pair[0]: the reference indexes the *unsorted* positive list,
    # i.e. the lowest-column-index same-class sample (integer min, no f32 cast).
    fb_col = jnp.min(jnp.where(posm, col_ids, jnp.int32(n_pad)),
                     axis=1, keepdims=True)
    fb_logit = jnp.sum(jnp.where(col_ids == fb_col, e, zero),
                       axis=1, keepdims=True)

    has_pos = npos > zero
    pos_logit = jnp.where(has_pos, pos_logit_main, fb_logit)
    loss_i = -jnp.log(pos_logit / (pos_logit + neg_logit))

    # row skipped when it has no positive or no negative pair at all (or pad row)
    n_pos_all = jnp.sum(jnp.where(posm, one, zero), axis=1, keepdims=True)
    n_neg_all = (jnp.sum(jnp.where(negm, one, zero), axis=1, keepdims=True)
                 - jnp.float32(n_pad - n_real))      # negm counted the pad columns
    valid = (n_pos_all > zero) & (n_neg_all > zero) & (row_ids < n_real)

    # TODO(synk): when len(pos_neig)==0 the reference falls back to a 0-dim
    # tensor whose len() is ill-defined in old torch; we treat it as length 1.
    npos_eff = jnp.where(has_pos, npos, one)
    acc_i = jnp.where(npos_eff > nneg, one, zero)

    loss_row = jnp.where(valid, loss_i, zero)
    acc_row = jnp.where(valid, acc_i, zero)
    pos_row = jnp.where(valid, npos, zero)
    neg_row = jnp.where(valid, nneg, zero)

    # ---- per-block partial output: lane-dense (tm, 128) slab, lanes 0..3 ----
    lane = lax.broadcasted_iota(jnp.int32, (tm, 128), 1)
    slab = jnp.where(lane == 0, loss_row, zero)
    slab = jnp.where(lane == 1, acc_row, slab)
    slab = jnp.where(lane == 2, pos_row, slab)
    slab = jnp.where(lane == 3, neg_row, slab)
    out_ref[...] = slab


def _round_up(x, m):
    return (x + m - 1) // m * m


def knn_softmax(inputs, targets, *, k=16, alpha=1.0, tm=128, exact_ties=False):
    """KNNSoftmax forward. Returns (loss, accuracy, avg_positives, avg_negatives).

    tm: row-block size (multiple of 128). 128 is a good default on v7x;
    256 can be used on v5e/v6e (128 MiB VMEM) for fewer grid steps.
    """
    n, d = inputs.shape
    if n - 1 < k + 1:
        raise ValueError(f"KNNSoftmax needs n - 1 >= k + 1 (got n={n}, k={k}).")
    if tm % 128 != 0:
        raise ValueError("tm must be a multiple of 128.")

    n_pad = _round_up(max(_round_up(n, 128), tm), tm)   # lane-dense columns
    d_pad = _round_up(d, 128)                           # MXU-friendly feature dim
    n_blocks = n_pad // tm

    # f32 master copy (norms / distances stay f32); bf16 copies feed the MXU.
    xf = jnp.zeros((n_pad, d_pad), jnp.float32).at[:n, :d].set(
        inputs.astype(jnp.float32))
    x_bf = xf.astype(jnp.bfloat16)          # (n_pad, d_pad): query row blocks
    xt_bf = x_bf.T                          # (d_pad, n_pad): resident, pre-transposed keys

    big = jnp.float32(1e30)
    ids = jnp.arange(n_pad)
    sq = jnp.sum(xf * xf, axis=1)
    sq = jnp.where(ids < n, sq, big)        # fold padded-key exclusion into the norms
    sqn_row = sq.reshape(1, n_pad)
    sqn_col = sq.reshape(n_pad, 1)

    t = targets.astype(jnp.float32)
    pad_label = jnp.min(t) - 1.0            # never matches a real class
    lab = jnp.full((n_pad,), pad_label, jnp.float32).at[:n].set(t)
    lab_row = lab.reshape(1, n_pad)
    lab_col = lab.reshape(n_pad, 1)

    kernel = functools.partial(
        _knn_softmax_kernel,
        n_real=n, n_pad=n_pad, tm=tm, k=int(k), alpha=float(alpha),
        exact_ties=bool(exact_ties))

    # VMEM budget from actual sizes (double-buffered pipeline inputs/outputs,
    # resident bf16 keys, plus headroom for the live f32 (tm, n_pad) slabs).
    est = (2 * tm * d_pad * 2            # bf16 query block x2 buffers
           + 2 * d_pad * n_pad * 2       # bf16 resident keys (worst-case x2)
           + 2 * (2 * n_pad + 2 * tm) * 4
           + 2 * tm * 128 * 4            # output block x2 buffers
           + 12 * tm * n_pad * 4)        # live f32 intermediates / spill headroom
    vmem_limit = int(min(max(est, 32 << 20), 64 << 20))

    out = pl.pallas_call(
        kernel,
        out_shape=jax.ShapeDtypeStruct((n_pad, 128), jnp.float32),
        grid=(n_blocks,),
        in_specs=[
            pl.BlockSpec((tm, d_pad), lambda i: (i, 0)),     # queries (bf16, pipelined)
            pl.BlockSpec((d_pad, n_pad), lambda i: (0, 0)),  # keys^T (bf16, resident)
            pl.BlockSpec((1, n_pad), lambda i: (0, 0)),      # key |x|^2 row (resident)
            pl.BlockSpec((tm, 1), lambda i: (i, 0)),         # query |x|^2 column
            pl.BlockSpec((1, n_pad), lambda i: (0, 0)),      # labels row (resident)
            pl.BlockSpec((tm, 1), lambda i: (i, 0)),         # labels column
        ],
        out_specs=pl.BlockSpec((tm, 128), lambda i: (i, 0)),
        compiler_params=pltpu.CompilerParams(
            # per-block partials -> independent grid steps -> both v7x TCs usable
            dimension_semantics=("parallel",),
            vmem_limit_bytes=vmem_limit,
        ),
    )(x_bf, xt_bf, sqn_row, sqn_col, lab_row, lab_col)

    totals = jnp.sum(out[:, :4], axis=0)
    inv_n = 1.0 / n                        # reference divides all four by n
    return (totals[0] * inv_n, totals[1] * inv_n,
            totals[2] * inv_n, totals[3] * inv_n)


if __name__ == "__main__":
    key = jax.random.PRNGKey(0)
    kx, kt = jax.random.split(key)

    n, d = 32, 32          # n - 1 >= K + 1 as required by the reference (sorted[K])
    K = 16
    ALPHA = 1.0

    x = jax.random.normal(kx, (n, d), dtype=jnp.float32)
    labels = jnp.arange(n, dtype=jnp.int32) % 4          # 4 classes x 8 samples
    labels = jax.random.permutation(kt, labels)

    loss, acc, avg_pos, avg_neg = knn_softmax(x, labels, k=K, alpha=ALPHA)
    outs = jax.block_until_ready(jnp.stack([loss, acc, avg_pos, avg_neg]))
    assert bool(jnp.all(jnp.isfinite(outs)))
    print("KERNEL_OK")
</pallas_src>

<mosaic_0001>
module attributes {stable_mosaic.version = 11 : i64} {
  func.func @_knn_softmax_kernel(%arg0: i32, %arg1: memref<128x128xbf16, #tpu.memory_space<vmem>>, %arg2: memref<128x128xbf16, #tpu.memory_space<vmem>>, %arg3: memref<1x128xf32, #tpu.memory_space<vmem>>, %arg4: memref<128x1xf32, #tpu.memory_space<vmem>>, %arg5: memref<1x128xf32, #tpu.memory_space<vmem>>, %arg6: memref<128x1xf32, #tpu.memory_space<vmem>>, %arg7: memref<128x128xf32, #tpu.memory_space<vmem>>) attributes {dimension_semantics = [#tpu.dimension_semantics<parallel>], iteration_bounds = array<i64: 1>, scalar_prefetch = 0 : i64, scratch_operands = 0 : i64, tpu.core_type = #tpu.core_type<tc>, window_params = [{transform_indices = @transform_0, window_bounds = array<i64: 128, 128>}, {pipeline_mode = #tpu.pipeline_mode<synchronous>, transform_indices = @transform_1, window_bounds = array<i64: 128, 128>}, {pipeline_mode = #tpu.pipeline_mode<synchronous>, transform_indices = @transform_2, window_bounds = array<i64: 1, 128>}, {transform_indices = @transform_3, window_bounds = array<i64: 128, 1>}, {pipeline_mode = #tpu.pipeline_mode<synchronous>, transform_indices = @transform_4, window_bounds = array<i64: 1, 128>}, {transform_indices = @transform_5, window_bounds = array<i64: 128, 1>}, {transform_indices = @transform_6, window_bounds = array<i64: 128, 128>}]} {
    %c128_i32 = arith.constant 128 : i32
    %0 = arith.muli %arg0, %c128_i32 : i32
    %c0 = arith.constant 0 : index
    %c0_0 = arith.constant 0 : index
    %1 = vector.load %arg1[%c0, %c0_0] : memref<128x128xbf16, #tpu.memory_space<vmem>>, vector<128x128xbf16>
    %c0_1 = arith.constant 0 : index
    %c0_2 = arith.constant 0 : index
    %2 = vector.load %arg2[%c0_1, %c0_2] : memref<128x128xbf16, #tpu.memory_space<vmem>>, vector<128x128xbf16>
    %c0_3 = arith.constant 0 : index
    %c0_4 = arith.constant 0 : index
    %3 = vector.load %arg3[%c0_3, %c0_4] : memref<1x128xf32, #tpu.memory_space<vmem>>, vector<1x128xf32>
    %c0_5 = arith.constant 0 : index
    %c0_6 = arith.constant 0 : index
    %4 = vector.load %arg4[%c0_5, %c0_6] : memref<128x1xf32, #tpu.memory_space<vmem>>, vector<128x1xf32>
    %c0_7 = arith.constant 0 : index
    %c0_8 = arith.constant 0 : index
    %5 = vector.load %arg5[%c0_7, %c0_8] : memref<1x128xf32, #tpu.memory_space<vmem>>, vector<1x128xf32>
    %c0_9 = arith.constant 0 : index
    %c0_10 = arith.constant 0 : index
    %6 = vector.load %arg6[%c0_9, %c0_10] : memref<128x1xf32, #tpu.memory_space<vmem>>, vector<128x1xf32>
    %cst = arith.constant dense<0.000000e+00> : vector<128x128xf32>
    %7 = tpu.matmul %1, %2, %cst {dimension_numbers = #tpu.dot_dimension_numbers<[1], [0], [0], [1], [0, 0, 1, 1], [], []>} : vector<128x128xbf16>, vector<128x128xbf16>, vector<128x128xf32> -> vector<128x128xf32>
    %8 = vector.broadcast %4 : vector<128x1xf32> to vector<128x128xf32>
    %9 = vector.broadcast %3 : vector<1x128xf32> to vector<128x128xf32>
    %10 = arith.addf %8, %9 : vector<128x128xf32>
    %cst_11 = arith.constant 2.000000e+00 : f32
    %11 = vector.broadcast %cst_11 : f32 to vector<128x128xf32>
    %12 = arith.mulf %11, %7 : vector<128x128xf32>
    %13 = arith.subf %10, %12 : vector<128x128xf32>
    %cst_12 = arith.constant 9.99999996E-13 : f32
    %14 = vector.broadcast %cst_12 : f32 to vector<128x128xf32>
    %15 = arith.maximumf %13, %14 : vector<128x128xf32>
    %16 = tpu.iota {dimensions = array<i32: 1>} : vector<128x128xi32>
    %17 = tpu.iota {dimensions = array<i32: 0>} : vector<128x1xi32>
    %18 = vector.broadcast %0 : i32 to vector<128x1xi32>
    %19 = arith.addi %17, %18 : vector<128x1xi32>
    %20 = vector.broadcast %19 : vector<128x1xi32> to vector<128x128xi32>
    %21 = arith.cmpi eq, %16, %20 : vector<128x128xi32>
    %22 = vector.broadcast %5 : vector<1x128xf32> to vector<128x128xf32>
    %23 = vector.broadcast %6 : vector<128x1xf32> to vector<128x128xf32>
    %24 = arith.cmpf oeq, %22, %23 : vector<128x128xf32>
    %cst_13 = arith.constant dense<true> : vector<128x128xi1>
    %25 = arith.xori %21, %cst_13 : vector<128x128xi1>
    %26 = arith.andi %24, %25 : vector<128x128xi1>
    %cst_14 = arith.constant dense<true> : vector<128x128xi1>
    %27 = arith.xori %24, %cst_14 : vector<128x128xi1>
    %cst_15 = arith.constant 1.000000e+30 : f32
    %28 = vector.broadcast %cst_15 : f32 to vector<128x128xf32>
    %29 = arith.select %21, %28, %15 : vector<128x128xi1>, vector<128x128xf32>
    %cst_16 = arith.constant dense<0x7F800000> : vector<128xf32>
    %30 = vector.multi_reduction <minimumf>, %29, %cst_16 [1] : vector<128x128xf32> to vector<128xf32>
    %31 = vector.shape_cast %30 : vector<128xf32> to vector<128x1xf32>
    %32 = vector.broadcast %31 : vector<128x1xf32> to vector<128x128xf32>
    %33 = arith.cmpf oeq, %29, %32 : vector<128x128xf32>
    %cst_17 = arith.constant 1.000000e+30 : f32
    %34 = vector.broadcast %cst_17 : f32 to vector<128x128xf32>
    %35 = arith.select %33, %34, %29 : vector<128x128xi1>, vector<128x128xf32>
    %cst_18 = arith.constant dense<0x7F800000> : vector<128xf32>
    %36 = vector.multi_reduction <minimumf>, %35, %cst_18 [1] : vector<128x128xf32> to vector<128xf32>
    %37 = vector.shape_cast %36 : vector<128xf32> to vector<128x1xf32>
    %38 = vector.broadcast %37 : vector<128x1xf32> to vector<128x128xf32>
    %39 = arith.cmpf oeq, %35, %38 : vector<128x128xf32>
    %cst_19 = arith.constant 1.000000e+30 : f32
    %40 = vector.broadcast %cst_19 : f32 to vector<128x128xf32>
    %41 = arith.select %39, %40, %35 : vector<128x128xi1>, vector<128x128xf32>
    %cst_20 = arith.constant dense<0x7F800000> : vector<128xf32>
    %42 = vector.multi_reduction <minimumf>, %41, %cst_20 [1] : vector<128x128xf32> to vector<128xf32>
    %43 = vector.shape_cast %42 : vector<128xf32> to vector<128x1xf32>
    %44 = vector.broadcast %43 : vector<128x1xf32> to vector<128x128xf32>
    %45 = arith.cmpf oeq, %41, %44 : vector<128x128xf32>
    %cst_21 = arith.constant 1.000000e+30 : f32
    %46 = vector.broadcast %cst_21 : f32 to vector<128x128xf32>
    %47 = arith.select %45, %46, %41 : vector<128x128xi1>, vector<128x128xf32>
    %cst_22 = arith.constant dense<0x7F800000> : vector<128xf32>
    %48 = vector.multi_reduction <minimumf>, %47, %cst_22 [1] : vector<128x128xf32> to vector<128xf32>
    %49 = vector.shape_cast %48 : vector<128xf32> to vector<128x1xf32>
    %50 = vector.broadcast %49 : vector<128x1xf32> to vector<128x128xf32>
    %51 = arith.cmpf oeq, %47, %50 : vector<128x128xf32>
    %cst_23 = arith.constant 1.000000e+30 : f32
    %52 = vector.broadcast %cst_23 : f32 to vector<128x128xf32>
    %53 = arith.select %51, %52, %47 : vector<128x128xi1>, vector<128x128xf32>
    %cst_24 = arith.constant dense<0x7F800000> : vector<128xf32>
    %54 = vector.multi_reduction <minimumf>, %53, %cst_24 [1] : vector<128x128xf32> to vector<128xf32>
    %55 = vector.shape_cast %54 : vector<128xf32> to vector<128x1xf32>
    %56 = vector.broadcast %55 : vector<128x1xf32> to vector<128x128xf32>
    %57 = arith.cmpf oeq, %53, %56 : vector<128x128xf32>
    %cst_25 = arith.constant 1.000000e+30 : f32
    %58 = vector.broadcast %cst_25 : f32 to vector<128x128xf32>
    %59 = arith.select %57, %58, %53 : vector<128x128xi1>, vector<128x128xf32>
    %cst_26 = arith.constant dense<0x7F800000> : vector<128xf32>
    %60 = vector.multi_reduction <minimumf>, %59, %cst_26 [1] : vector<128x128xf32> to vector<128xf32>
    %61 = vector.shape_cast %60 : vector<128xf32> to vector<128x1xf32>
    %62 = vector.broadcast %61 : vector<128x1xf32> to vector<128x128xf32>
    %63 = arith.cmpf oeq, %59, %62 : vector<128x128xf32>
    %cst_27 = arith.constant 1.000000e+30 : f32
    %64 = vector.broadcast %cst_27 : f32 to vector<128x128xf32>
    %65 = arith.select %63, %64, %59 : vector<128x128xi1>, vector<128x128xf32>
    %cst_28 = arith.constant dense<0x7F800000> : vector<128xf32>
    %66 = vector.multi_reduction <minimumf>, %65, %cst_28 [1] : vector<128x128xf32> to vector<128xf32>
    %67 = vector.shape_cast %66 : vector<128xf32> to vector<128x1xf32>
    %68 = vector.broadcast %67 : vector<128x1xf32> to vector<128x128xf32>
    %69 = arith.cmpf oeq, %65, %68 : vector<128x128xf32>
    %cst_29 = arith.constant 1.000000e+30 : f32
    %70 = vector.broadcast %cst_29 : f32 to vector<128x128xf32>
    %71 = arith.select %69, %70, %65 : vector<128x128xi1>, vector<128x128xf32>
    %cst_30 = arith.constant dense<0x7F800000> : vector<128xf32>
    %72 = vector.multi_reduction <minimumf>, %71, %cst_30 [1] : vector<128x128xf32> to vector<128xf32>
    %73 = vector.shape_cast %72 : vector<128xf32> to vector<128x1xf32>
    %74 = vector.broadcast %73 : vector<128x1xf32> to vector<128x128xf32>
    %75 = arith.cmpf oeq, %71, %74 : vector<128x128xf32>
    %cst_31 = arith.constant 1.000000e+30 : f32
    %76 = vector.broadcast %cst_31 : f32 to vector<128x128xf32>
    %77 = arith.select %75, %76, %71 : vector<128x128xi1>, vector<128x128xf32>
    %cst_32 = arith.constant dense<0x7F800000> : vector<128xf32>
    %78 = vector.multi_reduction <minimumf>, %77, %cst_32 [1] : vector<128x128xf32> to vector<128xf32>
    %79 = vector.shape_cast %78 : vector<128xf32> to vector<128x1xf32>
    %80 = vector.broadcast %79 : vector<128x1xf32> to vector<128x128xf32>
    %81 = arith.cmpf oeq, %77, %80 : vector<128x128xf32>
    %cst_33 = arith.constant 1.000000e+30 : f32
    %82 = vector.broadcast %cst_33 : f32 to vector<128x128xf32>
    %83 = arith.select %81, %82, %77 : vector<128x128xi1>, vector<128x128xf32>
    %cst_34 = arith.constant dense<0x7F800000> : vector<128xf32>
    %84 = vector.multi_reduction <minimumf>, %83, %cst_34 [1] : vector<128x128xf32> to vector<128xf32>
    %85 = vector.shape_cast %84 : vector<128xf32> to vector<128x1xf32>
    %86 = vector.broadcast %85 : vector<128x1xf32> to vector<128x128xf32>
    %87 = arith.cmpf oeq, %83, %86 : vector<128x128xf32>
    %cst_35 = arith.constant 1.000000e+30 : f32
    %88 = vector.broadcast %cst_35 : f32 to vector<128x128xf32>
    %89 = arith.select %87, %88, %83 : vector<128x128xi1>, vector<128x128xf32>
    %cst_36 = arith.constant dense<0x7F800000> : vector<128xf32>
    %90 = vector.multi_reduction <minimumf>, %89, %cst_36 [1] : vector<128x128xf32> to vector<128xf32>
    %91 = vector.shape_cast %90 : vector<128xf32> to vector<128x1xf32>
    %92 = vector.broadcast %91 : vector<128x1xf32> to vector<128x128xf32>
    %93 = arith.cmpf oeq, %89, %92 : vector<128x128xf32>
    %cst_37 = arith.constant 1.000000e+30 : f32
    %94 = vector.broadcast %cst_37 : f32 to vector<128x128xf32>
    %95 = arith.select %93, %94, %89 : vector<128x128xi1>, vector<128x128xf32>
    %cst_38 = arith.constant dense<0x7F800000> : vector<128xf32>
    %96 = vector.multi_reduction <minimumf>, %95, %cst_38 [1] : vector<128x128xf32> to vector<128xf32>
    %97 = vector.shape_cast %96 : vector<128xf32> to vector<128x1xf32>
    %98 = vector.broadcast %97 : vector<128x1xf32> to vector<128x128xf32>
    %99 = arith.cmpf oeq, %95, %98 : vector<128x128xf32>
    %cst_39 = arith.constant 1.000000e+30 : f32
    %100 = vector.broadcast %cst_39 : f32 to vector<128x128xf32>
    %101 = arith.select %99, %100, %95 : vector<128x128xi1>, vector<128x128xf32>
    %cst_40 = arith.constant dense<0x7F800000> : vector<128xf32>
    %102 = vector.multi_reduction <minimumf>, %101, %cst_40 [1] : vector<128x128xf32> to vector<128xf32>
    %103 = vector.shape_cast %102 : vector<128xf32> to vector<128x1xf32>
    %104 = vector.broadcast %103 : vector<128x1xf32> to vector<128x128xf32>
    %105 = arith.cmpf oeq, %101, %104 : vector<128x128xf32>
    %cst_41 = arith.constant 1.000000e+30 : f32
    %106 = vector.broadcast %cst_41 : f32 to vector<128x128xf32>
    %107 = arith.select %105, %106, %101 : vector<128x128xi1>, vector<128x128xf32>
    %cst_42 = arith.constant dense<0x7F800000> : vector<128xf32>
    %108 = vector.multi_reduction <minimumf>, %107, %cst_42 [1] : vector<128x128xf32> to vector<128xf32>
    %109 = vector.shape_cast %108 : vector<128xf32> to vector<128x1xf32>
    %110 = vector.broadcast %109 : vector<128x1xf32> to vector<128x128xf32>
    %111 = arith.cmpf oeq, %107, %110 : vector<128x128xf32>
    %cst_43 = arith.constant 1.000000e+30 : f32
    %112 = vector.broadcast %cst_43 : f32 to vector<128x128xf32>
    %113 = arith.select %111, %112, %107 : vector<128x128xi1>, vector<128x128xf32>
    %cst_44 = arith.constant dense<0x7F800000> : vector<128xf32>
    %114 = vector.multi_reduction <minimumf>, %113, %cst_44 [1] : vector<128x128xf32> to vector<128xf32>
    %115 = vector.shape_cast %114 : vector<128xf32> to vector<128x1xf32>
    %116 = vector.broadcast %115 : vector<128x1xf32> to vector<128x128xf32>
    %117 = arith.cmpf oeq, %113, %116 : vector<128x128xf32>
    %cst_45 = arith.constant 1.000000e+30 : f32
    %118 = vector.broadcast %cst_45 : f32 to vector<128x128xf32>
    %119 = arith.select %117, %118, %113 : vector<128x128xi1>, vector<128x128xf32>
    %cst_46 = arith.constant dense<0x7F800000> : vector<128xf32>
    %120 = vector.multi_reduction <minimumf>, %119, %cst_46 [1] : vector<128x128xf32> to vector<128xf32>
    %121 = vector.shape_cast %120 : vector<128xf32> to vector<128x1xf32>
    %122 = vector.broadcast %121 : vector<128x1xf32> to vector<128x128xf32>
    %123 = arith.cmpf oeq, %119, %122 : vector<128x128xf32>
    %cst_47 = arith.constant 1.000000e+30 : f32
    %124 = vector.broadcast %cst_47 : f32 to vector<128x128xf32>
    %125 = arith.select %123, %124, %119 : vector<128x128xi1>, vector<128x128xf32>
    %cst_48 = arith.constant dense<0x7F800000> : vector<128xf32>
    %126 = vector.multi_reduction <minimumf>, %125, %cst_48 [1] : vector<128x128xf32> to vector<128xf32>
    %127 = vector.shape_cast %126 : vector<128xf32> to vector<128x1xf32>
    %128 = vector.broadcast %127 : vector<128x1xf32> to vector<128x128xf32>
    %129 = arith.cmpf olt, %15, %128 : vector<128x128xf32>
    %130 = arith.andi %26, %129 : vector<128x128xi1>
    %131 = arith.andi %27, %129 : vector<128x128xi1>
    %cst_49 = arith.constant 1.000000e+00 : f32
    %cst_50 = arith.constant 0.000000e+00 : f32
    %132 = vector.broadcast %cst_49 : f32 to vector<128x128xf32>
    %133 = vector.broadcast %cst_50 : f32 to vector<128x128xf32>
    %134 = arith.select %130, %132, %133 : vector<128x128xi1>, vector<128x128xf32>
    %cst_51 = arith.constant dense<0.000000e+00> : vector<128xf32>
    %135 = vector.multi_reduction <add>, %134, %cst_51 [1] : vector<128x128xf32> to vector<128xf32>
    %136 = vector.shape_cast %135 : vector<128xf32> to vector<128x1xf32>
    %cst_52 = arith.constant 1.000000e+00 : f32
    %cst_53 = arith.constant 0.000000e+00 : f32
    %137 = vector.broadcast %cst_52 : f32 to vector<128x128xf32>
    %138 = vector.broadcast %cst_53 : f32 to vector<128x128xf32>
    %139 = arith.select %131, %137, %138 : vector<128x128xi1>, vector<128x128xf32>
    %cst_54 = arith.constant dense<0.000000e+00> : vector<128xf32>
    %140 = vector.multi_reduction <add>, %139, %cst_54 [1] : vector<128x128xf32> to vector<128xf32>
    %141 = vector.shape_cast %140 : vector<128xf32> to vector<128x1xf32>
    %142 = math.sqrt %15 : vector<128x128xf32>
    %cst_55 = arith.constant -1.000000e+00 : f32
    %143 = vector.broadcast %cst_55 : f32 to vector<128x128xf32>
    %144 = arith.mulf %143, %142 : vector<128x128xf32>
    %145 = math.exp %144 : vector<128x128xf32>
    %cst_56 = arith.constant 0.000000e+00 : f32
    %146 = vector.broadcast %cst_56 : f32 to vector<128x128xf32>
    %147 = arith.select %130, %145, %146 : vector<128x128xi1>, vector<128x128xf32>
    %cst_57 = arith.constant dense<0.000000e+00> : vector<128xf32>
    %148 = vector.multi_reduction <add>, %147, %cst_57 [1] : vector<128x128xf32> to vector<128xf32>
    %149 = vector.shape_cast %148 : vector<128xf32> to vector<128x1xf32>
    %cst_58 = arith.constant 0.000000e+00 : f32
    %150 = vector.broadcast %cst_58 : f32 to vector<128x128xf32>
    %151 = arith.select %131, %145, %150 : vector<128x128xi1>, vector<128x128xf32>
    %cst_59 = arith.constant dense<0.000000e+00> : vector<128xf32>
    %152 = vector.multi_reduction <add>, %151, %cst_59 [1] : vector<128x128xf32> to vector<128xf32>
    %153 = vector.shape_cast %152 : vector<128xf32> to vector<128x1xf32>
    %c128_i32_60 = arith.constant 128 : i32
    %154 = vector.broadcast %c128_i32_60 : i32 to vector<128x128xi32>
    %155 = arith.select %26, %16, %154 : vector<128x128xi1>, vector<128x128xi32>
    %cst_61 = arith.constant dense<2147483647> : vector<128xi32>
    %156 = vector.multi_reduction <minsi>, %155, %cst_61 [1] : vector<128x128xi32> to vector<128xi32>
    %157 = vector.shape_cast %156 : vector<128xi32> to vector<128x1xi32>
    %158 = vector.broadcast %157 : vector<128x1xi32> to vector<128x128xi32>
    %159 = arith.cmpi eq, %16, %158 : vector<128x128xi32>
    %cst_62 = arith.constant 0.000000e+00 : f32
    %160 = vector.broadcast %cst_62 : f32 to vector<128x128xf32>
    %161 = arith.select %159, %145, %160 : vector<128x128xi1>, vector<128x128xf32>
    %cst_63 = arith.constant dense<0.000000e+00> : vector<128xf32>
    %162 = vector.multi_reduction <add>, %161, %cst_63 [1] : vector<128x128xf32> to vector<128xf32>
    %163 = vector.shape_cast %162 : vector<128xf32> to vector<128x1xf32>
    %cst_64 = arith.constant 0.000000e+00 : f32
    %164 = vector.broadcast %cst_64 : f32 to vector<128x1xf32>
    %165 = arith.cmpf ogt, %136, %164 : vector<128x1xf32>
    %166 = arith.select %165, %149, %163 : vector<128x1xi1>, vector<128x1xf32>
    %167 = arith.addf %166, %153 : vector<128x1xf32>
    %168 = arith.divf %166, %167 : vector<128x1xf32>
    %169 = math.log %168 : vector<128x1xf32>
    %cst_65 = arith.constant 0.000000e+00 : f32
    %170 = vector.broadcast %cst_65 : f32 to vector<128x1xf32>
    %171 = arith.subf %170, %169 : vector<128x1xf32>
    %cst_66 = arith.constant 1.000000e+00 : f32
    %cst_67 = arith.constant 0.000000e+00 : f32
    %172 = vector.broadcast %cst_66 : f32 to vector<128x128xf32>
    %173 = vector.broadcast %cst_67 : f32 to vector<128x128xf32>
    %174 = arith.select %26, %172, %173 : vector<128x128xi1>, vector<128x128xf32>
    %cst_68 = arith.constant dense<0.000000e+00> : vector<128xf32>
    %175 = vector.multi_reduction <add>, %174, %cst_68 [1] : vector<128x128xf32> to vector<128xf32>
    %176 = vector.shape_cast %175 : vector<128xf32> to vector<128x1xf32>
    %cst_69 = arith.constant 1.000000e+00 : f32
    %cst_70 = arith.constant 0.000000e+00 : f32
    %177 = vector.broadcast %cst_69 : f32 to vector<128x128xf32>
    %178 = vector.broadcast %cst_70 : f32 to vector<128x128xf32>
    %179 = arith.select %27, %177, %178 : vector<128x128xi1>, vector<128x128xf32>
    %cst_71 = arith.constant dense<0.000000e+00> : vector<128xf32>
    %180 = vector.multi_reduction <add>, %179, %cst_71 [1] : vector<128x128xf32> to vector<128xf32>
    %181 = vector.shape_cast %180 : vector<128xf32> to vector<128x1xf32>
    %cst_72 = arith.constant 9.600000e+01 : f32
    %182 = vector.broadcast %cst_72 : f32 to vector<128x1xf32>
    %183 = arith.subf %181, %182 : vector<128x1xf32>
    %cst_73 = arith.constant 0.000000e+00 : f32
    %184 = vector.broadcast %cst_73 : f32 to vector<128x1xf32>
    %185 = arith.cmpf ogt, %176, %184 : vector<128x1xf32>
    %cst_74 = arith.constant 0.000000e+00 : f32
    %186 = vector.broadcast %cst_74 : f32 to vector<128x1xf32>
    %187 = arith.cmpf ogt, %183, %186 : vector<128x1xf32>
    %188 = arith.andi %185, %187 : vector<128x1xi1>
    %c32_i32 = arith.constant 32 : i32
    %189 = vector.broadcast %c32_i32 : i32 to vector<128x1xi32>
    %190 = arith.cmpi slt, %19, %189 : vector<128x1xi32>
    %191 = arith.andi %188, %190 : vector<128x1xi1>
    %cst_75 = arith.constant 1.000000e+00 : f32
    %192 = vector.broadcast %cst_75 : f32 to vector<128x1xf32>
    %193 = arith.select %165, %136, %192 : vector<128x1xi1>, vector<128x1xf32>
    %194 = arith.cmpf ogt, %193, %141 : vector<128x1xf32>
    %cst_76 = arith.constant 1.000000e+00 : f32
    %cst_77 = arith.constant 0.000000e+00 : f32
    %195 = vector.broadcast %cst_76 : f32 to vector<128x1xf32>
    %196 = vector.broadcast %cst_77 : f32 to vector<128x1xf32>
    %197 = arith.select %194, %195, %196 : vector<128x1xi1>, vector<128x1xf32>
    %cst_78 = arith.constant 0.000000e+00 : f32
    %198 = vector.broadcast %cst_78 : f32 to vector<128x1xf32>
    %199 = arith.select %191, %171, %198 : vector<128x1xi1>, vector<128x1xf32>
    %cst_79 = arith.constant 0.000000e+00 : f32
    %200 = vector.broadcast %cst_79 : f32 to vector<128x1xf32>
    %201 = arith.select %191, %197, %200 : vector<128x1xi1>, vector<128x1xf32>
    %cst_80 = arith.constant 0.000000e+00 : f32
    %202 = vector.broadcast %cst_80 : f32 to vector<128x1xf32>
    %203 = arith.select %191, %136, %202 : vector<128x1xi1>, vector<128x1xf32>
    %cst_81 = arith.constant 0.000000e+00 : f32
    %204 = vector.broadcast %cst_81 : f32 to vector<128x1xf32>
    %205 = arith.select %191, %141, %204 : vector<128x1xi1>, vector<128x1xf32>
    %206 = tpu.iota {dimensions = array<i32: 1>} : vector<128x128xi32>
    %c0_i32 = arith.constant 0 : i32
    %207 = vector.broadcast %c0_i32 : i32 to vector<128x128xi32>
    %208 = arith.cmpi eq, %206, %207 : vector<128x128xi32>
    %cst_82 = arith.constant 0.000000e+00 : f32
    %209 = vector.shape_cast %199 : vector<128x1xf32> to vector<128x1xf32>
    %210 = vector.broadcast %209 : vector<128x1xf32> to vector<128x128xf32>
    %211 = vector.broadcast %cst_82 : f32 to vector<128x128xf32>
    %212 = arith.select %208, %210, %211 : vector<128x128xi1>, vector<128x128xf32>
    %c1_i32 = arith.constant 1 : i32
    %213 = vector.broadcast %c1_i32 : i32 to vector<128x128xi32>
    %214 = arith.cmpi eq, %206, %213 : vector<128x128xi32>
    %215 = vector.shape_cast %201 : vector<128x1xf32> to vector<128x1xf32>
    %216 = vector.broadcast %215 : vector<128x1xf32> to vector<128x128xf32>
    %217 = arith.select %214, %216, %212 : vector<128x128xi1>, vector<128x128xf32>
    %c2_i32 = arith.constant 2 : i32
    %218 = vector.broadcast %c2_i32 : i32 to vector<128x128xi32>
    %219 = arith.cmpi eq, %206, %218 : vector<128x128xi32>
    %220 = vector.shape_cast %203 : vector<128x1xf32> to vector<128x1xf32>
    %221 = vector.broadcast %220 : vector<128x1xf32> to vector<128x128xf32>
    %222 = arith.select %219, %221, %217 : vector<128x128xi1>, vector<128x128xf32>
    %c3_i32 = arith.constant 3 : i32
    %223 = vector.broadcast %c3_i32 : i32 to vector<128x128xi32>
    %224 = arith.cmpi eq, %206, %223 : vector<128x128xi32>
    %225 = vector.shape_cast %205 : vector<128x1xf32> to vector<128x1xf32>
    %226 = vector.broadcast %225 : vector<128x1xf32> to vector<128x128xf32>
    %227 = arith.select %224, %226, %222 : vector<128x128xi1>, vector<128x128xf32>
    %c0_83 = arith.constant 0 : index
    %c0_84 = arith.constant 0 : index
    %228 = vector.load %arg7[%c0_83, %c0_84] : memref<128x128xf32, #tpu.memory_space<vmem>>, vector<128x128xf32>
    tpu.vector_store %arg7[%c0_83, %c0_84], %227 {strides = array<i32>} : memref<128x128xf32, #tpu.memory_space<vmem>>, vector<128x128xf32>,
    return
  }
  func.func @transform_0(%arg0: i32) -> (i32, i32) {
    %c0_i32 = arith.constant 0 : i32
    %c0_i32_0 = arith.constant 0 : i32
    return %arg0, %c0_i32 : i32, i32
  }
  func.func @transform_1(%arg0: i32) -> (i32, i32) {
    %c0_i32 = arith.constant 0 : i32
    %c0_i32_0 = arith.constant 0 : i32
    %c0_i32_1 = arith.constant 0 : i32
    return %c0_i32, %c0_i32_0 : i32, i32
  }
  func.func @transform_2(%arg0: i32) -> (i32, i32) {
    %c0_i32 = arith.constant 0 : i32
    %c0_i32_0 = arith.constant 0 : i32
    %c0_i32_1 = arith.constant 0 : i32
    return %c0_i32, %c0_i32_0 : i32, i32
  }
  func.func @transform_3(%arg0: i32) -> (i32, i32) {
    %c0_i32 = arith.constant 0 : i32
    %c0_i32_0 = arith.constant 0 : i32
    return %arg0, %c0_i32 : i32, i32
  }
  func.func @transform_4(%arg0: i32) -> (i32, i32) {
    %c0_i32 = arith.constant 0 : i32
    %c0_i32_0 = arith.constant 0 : i32
    %c0_i32_1 = arith.constant 0 : i32
    return %c0_i32, %c0_i32_0 : i32, i32
  }
  func.func @transform_5(%arg0: i32) -> (i32, i32) {
    %c0_i32 = arith.constant 0 : i32
    %c0_i32_0 = arith.constant 0 : i32
    return %arg0, %c0_i32 : i32, i32
  }
  func.func @transform_6(%arg0: i32) -> (i32, i32) {
    %c0_i32 = arith.constant 0 : i32
    %c0_i32_0 = arith.constant 0 : i32
    return %arg0, %c0_i32 : i32, i32
  }
}

</mosaic_0001>

<llo_original>
// kernel: tpu_custom_call.1
$region0: #{tpu_custom_call.1}
  #allocation0 [shape = 'u32[]', space=smem, size = 0x4, offset = 0x4, fixed_abs, tag = 'smem constant byte address 0x4 - core index']
  #allocation1 [shape = 'u32[144,128]{1,0:T(1,128)}', space=vmem, size = 0x12000, scoped, tag = 'internal scratch']
  %s0 = inlined_call_operand.vmem [shape: bf16[128,128], index: 0, kind: input, shape index: {}]
  %s1 = inlined_call_operand.vmem [shape: bf16[128,128], index: 1, kind: input, shape index: {}]
  %s2 = inlined_call_operand.vmem [shape: f32[1,128], index: 2, kind: input, shape index: {}]
  %s3 = inlined_call_operand.vmem [shape: f32[128,1], index: 3, kind: input, shape index: {}]
  %s4 = inlined_call_operand.vmem [shape: f32[1,128], index: 4, kind: input, shape index: {}]
  %s5 = inlined_call_operand.vmem [shape: f32[128,1], index: 5, kind: input, shape index: {}]
  %s6 = inlined_call_operand.hbm [shape: f32[128,128], index: 6, kind: output, shape index: {}]
  %s7 = sld [smem:[#allocation0]]
  $region34: #{tpu_custom_call.1} parent=0
    _
  %s9 = ssub.s32 1, %s7
  %s10 = scalar_select 0, %s9, %s7
  $region1: #{tpu_custom_call.1} parent=0
    #allocation2 [shape = 'u8[65536]{0}', space=vmem, size = 0x10000, scoped, tag = 'output window, operand 0, single buffered']
    #allocation3 [shape = 's32[1]{0}', space=sflag, size = 0x4, scoped, tag = 'scoped memory for tpu_custom_call.1']
    %11 = vsyncpa [#allocation3], 0
    // Predicated region
    $region2: #{tpu_custom_call.1} parent=1 // pred_check
      _
    $region3: #{tpu_custom_call.1} parent=1 // pred_check_branch
      %13 = sbr.rel (0) target = $region5
    $region4: #{tpu_custom_call.1} parent=1 // pred_region
      _
    $region5: #{tpu_custom_call.1} parent=1 // pred_fallthru
      _
    // Predicated region
    $region6: #{tpu_custom_call.1} parent=1 // pred_check
      _
    $region7: #{tpu_custom_call.1} parent=1 // pred_check_branch
      %15 = sbr.rel (0) target = $region9
    $region8: #{tpu_custom_call.1} parent=1 // pred_region
      _
    $region9: #{tpu_custom_call.1} parent=1 // pred_fallthru
      _
    // Predicated region
    $region10: #{tpu_custom_call.1} parent=1 // pred_check
      _
    $region11: #{tpu_custom_call.1} parent=1 // pred_check_branch
      %17 = sbr.rel (0) target = $region13
    $region12: #{tpu_custom_call.1} parent=1 // pred_region
      _
    $region13: #{tpu_custom_call.1} parent=1 // pred_fallthru
      _
    // Predicated region
    $region14: #{tpu_custom_call.1} parent=1 // pred_check
      _
    $region15: #{tpu_custom_call.1} parent=1 // pred_check_branch
      %19 = sbr.rel (0) target = $region17
    $region16: #{tpu_custom_call.1} parent=1 // pred_region
      _
    $region17: #{tpu_custom_call.1} parent=1 // pred_fallthru
      _
    // Predicated region
    $region18: #{tpu_custom_call.1} parent=1 // pred_check
      _
    $region19: #{tpu_custom_call.1} parent=1 // pred_check_branch
      %21 = sbr.rel (0) target = $region21
    $region20: #{tpu_custom_call.1} parent=1 // pred_region
      _
    $region21: #{tpu_custom_call.1} parent=1 // pred_fallthru
      _
    // Predicated region
    $region22: #{tpu_custom_call.1} parent=1 // pred_check
      _
    $region23: #{tpu_custom_call.1} parent=1 // pred_check_branch
      %23 = sbr.rel (0) target = $region25
    $region24: #{tpu_custom_call.1} parent=1 // pred_region
      _
    $region25: #{tpu_custom_call.1} parent=1 // pred_fallthru
      _
    %s25 = smul.u32 0, 128
    %v26 = vld [vmem:[%s0] sm:$0xf]
    %v27 = vld [vmem:[%s0 + $0x4] sm:$0xf]
    %v28 = vld [vmem:[%s0 + $0x8] sm:$0xf]
    %v29 = vld [vmem:[%s0 + $0xc] sm:$0xf]
    %v30 = vld [vmem:[%s0 + $0x10] sm:$0xf]
    %v31 = vld [vmem:[%s0 + $0x14] sm:$0xf]
    %v32 = vld [vmem:[%s0 + $0x18] sm:$0xf]
    %v33 = vld [vmem:[%s0 + $0x1c] sm:$0xf]
    %v34 = vld [vmem:[%s0 + $0x20] sm:$0xf]
    %v35 = vld [vmem:[%s0 + $0x24] sm:$0xf]
    %v36 = vld [vmem:[%s0 + $0x28] sm:$0xf]
    %v37 = vld [vmem:[%s0 + $0x2c] sm:$0xf]
    %v38 = vld [vmem:[%s0 + $0x30] sm:$0xf]
    %v39 = vld [vmem:[%s0 + $0x34] sm:$0xf]
    %v40 = vld [vmem:[%s0 + $0x38] sm:$0xf]
    %v41 = vld [vmem:[%s0 + $0x3c] sm:$0xf]
    %v42 = vld [vmem:[%s1] sm:$0xf]
    %v43 = vld [vmem:[%s1 + $0x4] sm:$0xf]
    %v44 = vld [vmem:[%s1 + $0x8] sm:$0xf]
    %v45 = vld [vmem:[%s1 + $0xc] sm:$0xf]
    %v46 = vld [vmem:[%s1 + $0x10] sm:$0xf]
    %v47 = vld [vmem:[%s1 + $0x14] sm:$0xf]
    %v48 = vld [vmem:[%s1 + $0x18] sm:$0xf]
    %v49 = vld [vmem:[%s1 + $0x1c] sm:$0xf]
    %v50 = vld [vmem:[%s1 + $0x20] sm:$0xf]
    %v51 = vld [vmem:[%s1 + $0x24] sm:$0xf]
    %v52 = vld [vmem:[%s1 + $0x28] sm:$0xf]
    %v53 = vld [vmem:[%s1 + $0x2c] sm:$0xf]
    %v54 = vld [vmem:[%s1 + $0x30] sm:$0xf]
    %v55 = vld [vmem:[%s1 + $0x34] sm:$0xf]
    %v56 = vld [vmem:[%s1 + $0x38] sm:$0xf]
    %v57 = vld [vmem:[%s1 + $0x3c] sm:$0xf]
    %v58 = vld [vmem:[%s2] sm:$0x1]
    %v59 = vld [vmem:[%s3] sm:$0xff]
    %v60 = vld [vmem:[%s3 + $0x8] sm:$0xff]
    %v61 = vld [vmem:[%s3 + $0x10] sm:$0xff]
    %v62 = vld [vmem:[%s3 + $0x18] sm:$0xff]
    %v63 = vld [vmem:[%s3 + $0x20] sm:$0xff]
    %v64 = vld [vmem:[%s3 + $0x28] sm:$0xff]
    %v65 = vld [vmem:[%s3 + $0x30] sm:$0xff]
    %v66 = vld [vmem:[%s3 + $0x38] sm:$0xff]
    %v67 = vld [vmem:[%s3 + $0x40] sm:$0xff]
    %v68 = vld [vmem:[%s3 + $0x48] sm:$0xff]
    %v69 = vld [vmem:[%s3 + $0x50] sm:$0xff]
    %v70 = vld [vmem:[%s3 + $0x58] sm:$0xff]
    %v71 = vld [vmem:[%s3 + $0x60] sm:$0xff]
    %v72 = vld [vmem:[%s3 + $0x68] sm:$0xff]
    %v73 = vld [vmem:[%s3 + $0x70] sm:$0xff]
    %v74 = vld [vmem:[%s3 + $0x78] sm:$0xff]
    %v75 = vld [vmem:[%s4] sm:$0x1]
    %v76 = vld [vmem:[%s5] sm:$0xff]
    %v77 = vld [vmem:[%s5 + $0x8] sm:$0xff]
    %v78 = vld [vmem:[%s5 + $0x10] sm:$0xff]
    %v79 = vld [vmem:[%s5 + $0x18] sm:$0xff]
    %v80 = vld [vmem:[%s5 + $0x20] sm:$0xff]
    %v81 = vld [vmem:[%s5 + $0x28] sm:$0xff]
    %v82 = vld [vmem:[%s5 + $0x30] sm:$0xff]
    %v83 = vld [vmem:[%s5 + $0x38] sm:$0xff]
    %v84 = vld [vmem:[%s5 + $0x40] sm:$0xff]
    %v85 = vld [vmem:[%s5 + $0x48] sm:$0xff]
    %v86 = vld [vmem:[%s5 + $0x50] sm:$0xff]
    %v87 = vld [vmem:[%s5 + $0x58] sm:$0xff]
    %v88 = vld [vmem:[%s5 + $0x60] sm:$0xff]
    %v89 = vld [vmem:[%s5 + $0x68] sm:$0xff]
    %v90 = vld [vmem:[%s5 + $0x70] sm:$0xff]
    %v91 = vld [vmem:[%s5 + $0x78] sm:$0xff]
    %v108 = vunpack.c.l.b16 %v26
    %v109 = vunpack.c.l.b16 %v27
    %v110 = vunpack.c.l.b16 %v28
    %v111 = vunpack.c.l.b16 %v29
    %v112 = vunpack.c.l.b16 %v30
    %v113 = vunpack.c.l.b16 %v31
    %v114 = vunpack.c.l.b16 %v32
    %v115 = vunpack.c.l.b16 %v33
    %v116 = vunpack.c.l.b16 %v34
    %v117 = vunpack.c.l.b16 %v35
    %v118 = vunpack.c.l.b16 %v36
    %v119 = vunpack.c.l.b16 %v37
    %v120 = vunpack.c.l.b16 %v38
    %v121 = vunpack.c.l.b16 %v39
    %v122 = vunpack.c.l.b16 %v40
    %v123 = vunpack.c.l.b16 %v41
    %v124 = vpack.c.b16 %v109, %v108
    %v125 = vpack.c.b16 %v111, %v110
    %v126 = vpack.c.b16 %v113, %v112
    %v127 = vpack.c.b16 %v115, %v114
    %v128 = vpack.c.b16 %v117, %v116
    %v129 = vpack.c.b16 %v119, %v118
    %v130 = vpack.c.b16 %v121, %v120
    %v131 = vpack.c.b16 %v123, %v122
    %v156 = vunpack.c.l.b16 %v42
    %v157 = vunpack.c.l.b16 %v43
    %v158 = vunpack.c.l.b16 %v44
    %v159 = vunpack.c.l.b16 %v45
    %v160 = vunpack.c.l.b16 %v46
    %v161 = vunpack.c.l.b16 %v47
    %v162 = vunpack.c.l.b16 %v48
    %v163 = vunpack.c.l.b16 %v49
    %v164 = vunpack.c.l.b16 %v50
    %v165 = vunpack.c.l.b16 %v51
    %v166 = vunpack.c.l.b16 %v52
    %v167 = vunpack.c.l.b16 %v53
    %v168 = vunpack.c.l.b16 %v54
    %v169 = vunpack.c.l.b16 %v55
    %v170 = vunpack.c.l.b16 %v56
    %v171 = vunpack.c.l.b16 %v57
    %v172 = vpack.c.b16 %v157, %v156
    %v173 = vpack.c.b16 %v159, %v158
    %v174 = vpack.c.b16 %v161, %v160
    %v175 = vpack.c.b16 %v163, %v162
    %v176 = vpack.c.b16 %v165, %v164
    %v177 = vpack.c.b16 %v167, %v166
    %v178 = vpack.c.b16 %v169, %v168
    %v179 = vpack.c.b16 %v171, %v170
    %188 = vmatprep.subr.bf16.mxu0 0
    %189 = vmatpush1.bf16.msra.mxu0 %v179
    %190 = vmatprep.subr.bf16.mxu0 0
    %191 = vmatpush1.bf16.msra.mxu0 %v178
    %192 = vmatprep.subr.bf16.mxu0 0
    %193 = vmatpush1.bf16.msra.mxu0 %v177
    %194 = vmatprep.subr.bf16.mxu0 0
    %195 = vmatpush1.bf16.msra.mxu0 %v176
    %196 = vmatprep.subr.bf16.mxu0 0
    %197 = vmatpush1.bf16.msra.mxu0 %v175
    %198 = vmatprep.subr.bf16.mxu0 0
    %199 = vmatpush1.bf16.msra.mxu0 %v174
    %200 = vmatprep.subr.bf16.mxu0 0
    %201 = vmatpush1.bf16.msra.mxu0 %v173
    %202 = vmatprep.subr.bf16.mxu0 0
    %203 = vmatpush1.bf16.msra.mxu0 %v172
    %204 = vmatprep.subr.bf16.mxu0 0
    %205 = vmatpush2.bf16.msra.mxu0 0
    %206 = vmatprep.subr.bf16.mxu0 0
    %207 = vmatpush2.bf16.msra.mxu0 0
    %208 = vmatprep.subr.bf16.mxu0 0
    %209 = vmatpush2.bf16.msra.mxu0 0
    %210 = vmatprep.subr.bf16.mxu0 0
    %211 = vmatpush2.bf16.msra.mxu0 0
    %212 = vmatprep.subr.bf16.mxu0 0
    %213 = vmatpush2.bf16.msra.mxu0 0
    %214 = vmatprep.subr.bf16.mxu0 0
    %215 = vmatpush2.bf16.msra.mxu0 0
    %216 = vmatprep.subr.bf16.mxu0 0
    %217 = vmatpush2.bf16.msra.mxu0 0
    %218 = vmatprep.subr.bf16.mxu0 0
    %219 = vmatpush2.bf16.msra.mxu0 0
    %220 = vmatprep.mubr.bf16.mxu0 0
    %221 = vmatmul.mubr.bf16.gmra.mxu0 %v124
    %v222 = vpop.f32.mrf.mxu0
    %v223 = vadd.f32 0.0, %v222
    %v224 = vpop.f32.mrf.mxu0
    %v225 = vpop.f32.mrf.mxu0
    %v226 = vadd.f32 0.0, %v225
    %v227 = vpop.f32.mrf.mxu0
    %228 = vmatprep.mubr.bf16.mxu0 0
    %229 = vmatmul.mubr.bf16.gmra.mxu0 %v125
    %v230 = vpop.f32.mrf.mxu0
    %v231 = vadd.f32 0.0, %v230
    %v232 = vpop.f32.mrf.mxu0
    %v233 = vpop.f32.mrf.mxu0
    %v234 = vadd.f32 0.0, %v233
    %v235 = vpop.f32.mrf.mxu0
    %236 = vmatprep.mubr.bf16.mxu0 0
    %237 = vmatmul.mubr.bf16.gmra.mxu0 %v126
    %v238 = vpop.f32.mrf.mxu0
    %v239 = vadd.f32 0.0, %v238
    %v240 = vpop.f32.mrf.mxu0
    %v241 = vpop.f32.mrf.mxu0
    %v242 = vadd.f32 0.0, %v241
    %v243 = vpop.f32.mrf.mxu0
    %244 = vmatprep.mubr.bf16.mxu0 0
    %245 = vmatmul.mubr.bf16.gmra.mxu0 %v127
    %v246 = vpop.f32.mrf.mxu0
    %v247 = vadd.f32 0.0, %v246
    %v248 = vpop.f32.mrf.mxu0
    %v249 = vpop.f32.mrf.mxu0
    %v250 = vadd.f32 0.0, %v249
    %v251 = vpop.f32.mrf.mxu0
    %252 = vmatprep.mubr.bf16.mxu0 0
    %253 = vmatmul.mubr.bf16.gmra.mxu0 %v128
    %v254 = vpop.f32.mrf.mxu0
    %v255 = vadd.f32 0.0, %v254
    %v256 = vpop.f32.mrf.mxu0
    %v257 = vpop.f32.mrf.mxu0
    %v258 = vadd.f32 0.0, %v257
    %v259 = vpop.f32.mrf.mxu0
    %260 = vmatprep.mubr.bf16.mxu0 0
    %261 = vmatmul.mubr.bf16.gmra.mxu0 %v129
    %v262 = vpop.f32.mrf.mxu0
    %v263 = vadd.f32 0.0, %v262
    %v264 = vpop.f32.mrf.mxu0
    %v265 = vpop.f32.mrf.mxu0
    %v266 = vadd.f32 0.0, %v265
    %v267 = vpop.f32.mrf.mxu0
    %268 = vmatprep.mubr.bf16.mxu0 0
    %269 = vmatmul.mubr.bf16.gmra.mxu0 %v130
    %v270 = vpop.f32.mrf.mxu0
    %v271 = vadd.f32 0.0, %v270
    %v272 = vpop.f32.mrf.mxu0
    %v273 = vpop.f32.mrf.mxu0
    %v274 = vadd.f32 0.0, %v273
    %v275 = vpop.f32.mrf.mxu0
    %276 = vmatprep.mubr.bf16.mxu0 0
    %277 = vmatmul.mubr.bf16.gmra.mxu0 %v131
    %v278 = vpop.f32.mrf.mxu0
    %v279 = vadd.f32 0.0, %v278
    %v280 = vpop.f32.mrf.mxu0
    %v281 = vpop.f32.mrf.mxu0
    %v282 = vadd.f32 0.0, %v281
    %v283 = vpop.f32.mrf.mxu0
    %284 = vdwg.mxu0
    %286 = vset.pattern.permute.xlu0 0
    %287 = vperm.xlu0 %286, %v59
    %v288 = vpop.permute.xlu0 %287
    %291 = vset.pattern.permute.xlu0 0
    %292 = vperm.xlu0 %291, %v60
    %v293 = vpop.permute.xlu0 %292
    %296 = vset.pattern.permute.xlu0 0
    %297 = vperm.xlu0 %296, %v61
    %v298 = vpop.permute.xlu0 %297
    %301 = vset.pattern.permute.xlu0 0
    %302 = vperm.xlu0 %301, %v62
    %v303 = vpop.permute.xlu0 %302
    %306 = vset.pattern.permute.xlu0 0
    %307 = vperm.xlu0 %306, %v63
    %v308 = vpop.permute.xlu0 %307
    %311 = vset.pattern.permute.xlu0 0
    %312 = vperm.xlu0 %311, %v64
    %v313 = vpop.permute.xlu0 %312
    %316 = vset.pattern.permute.xlu0 0
    %317 = vperm.xlu0 %316, %v65
    %v318 = vpop.permute.xlu0 %317
    %321 = vset.pattern.permute.xlu0 0
    %322 = vperm.xlu0 %321, %v66
    %v323 = vpop.permute.xlu0 %322
    %326 = vset.pattern.permute.xlu0 0
    %327 = vperm.xlu0 %326, %v67
    %v328 = vpop.permute.xlu0 %327
    %331 = vset.pattern.permute.xlu0 0
    %332 = vperm.xlu0 %331, %v68
    %v333 = vpop.permute.xlu0 %332
    %336 = vset.pattern.permute.xlu0 0
    %337 = vperm.xlu0 %336, %v69
    %v338 = vpop.permute.xlu0 %337
    %341 = vset.pattern.permute.xlu0 0
    %342 = vperm.xlu0 %341, %v70
    %v343 = vpop.permute.xlu0 %342
    %346 = vset.pattern.permute.xlu0 0
    %347 = vperm.xlu0 %346, %v71
    %v348 = vpop.permute.xlu0 %347
    %351 = vset.pattern.permute.xlu0 0
    %352 = vperm.xlu0 %351, %v72
    %v353 = vpop.permute.xlu0 %352
    %356 = vset.pattern.permute.xlu0 0
    %357 = vperm.xlu0 %356, %v73
    %v358 = vpop.permute.xlu0 %357
    %361 = vset.pattern.permute.xlu0 0
    %362 = vperm.xlu0 %361, %v74
    %v363 = vpop.permute.xlu0 %362
    %v366 = vlaneseq
    %v367 = vshrl.u32 %v366, 7
    %v368 = vsub.s32 0, %v367
    %v369 = vrot.slane %v58, %v368
    %v371 = vadd.f32 %v288, %v369
    %v372 = vadd.f32 %v293, %v369
    %v373 = vadd.f32 %v298, %v369
    %v374 = vadd.f32 %v303, %v369
    %v375 = vadd.f32 %v308, %v369
    %v376 = vadd.f32 %v313, %v369
    %v377 = vadd.f32 %v318, %v369
    %v378 = vadd.f32 %v323, %v369
    %v379 = vadd.f32 %v328, %v369
    %v380 = vadd.f32 %v333, %v369
    %v381 = vadd.f32 %v338, %v369
    %v382 = vadd.f32 %v343, %v369
    %v383 = vadd.f32 %v348, %v369
    %v384 = vadd.f32 %v353, %v369
    %v385 = vadd.f32 %v358, %v369
    %v386 = vadd.f32 %v363, %v369
    %v387 = vmul.f32 %v223, 2.0
    %v388 = vmul.f32 %v226, 2.0
    %v389 = vmul.f32 %v231, 2.0
    %v390 = vmul.f32 %v234, 2.0
    %v391 = vmul.f32 %v239, 2.0
    %v392 = vmul.f32 %v242, 2.0
    %v393 = vmul.f32 %v247, 2.0
    %v394 = vmul.f32 %v250, 2.0
    %v395 = vmul.f32 %v255, 2.0
    %v396 = vmul.f32 %v258, 2.0
    %v397 = vmul.f32 %v263, 2.0
    %v398 = vmul.f32 %v266, 2.0
    %v399 = vmul.f32 %v271, 2.0
    %v400 = vmul.f32 %v274, 2.0
    %v401 = vmul.f32 %v279, 2.0
    %v402 = vmul.f32 %v282, 2.0
    %v403 = vsub.f32 %v371, %v387
    %v404 = vsub.f32 %v372, %v388
    %v405 = vsub.f32 %v373, %v389
    %v406 = vsub.f32 %v374, %v390
    %v407 = vsub.f32 %v375, %v391
    %v408 = vsub.f32 %v376, %v392
    %v409 = vsub.f32 %v377, %v393
    %v410 = vsub.f32 %v378, %v394
    %v411 = vsub.f32 %v379, %v395
    %v412 = vsub.f32 %v380, %v396
    %v413 = vsub.f32 %v381, %v397
    %v414 = vsub.f32 %v382, %v398
    %v415 = vsub.f32 %v383, %v399
    %v416 = vsub.f32 %v384, %v400
    %v417 = vsub.f32 %v385, %v401
    %v418 = vsub.f32 %v386, %v402
    %v419 = vmax.f32 %v403, 1e-12
    %v420 = vmax.f32 %v404, 1e-12
    %v421 = vmax.f32 %v405, 1e-12
    %v422 = vmax.f32 %v406, 1e-12
    %v423 = vmax.f32 %v407, 1e-12
    %v424 = vmax.f32 %v408, 1e-12
    %v425 = vmax.f32 %v409, 1e-12
    %v426 = vmax.f32 %v410, 1e-12
    %v427 = vmax.f32 %v411, 1e-12
    %v428 = vmax.f32 %v412, 1e-12
    %v429 = vmax.f32 %v413, 1e-12
    %v430 = vmax.f32 %v414, 1e-12
    %v431 = vmax.f32 %v415, 1e-12
    %v432 = vmax.f32 %v416, 1e-12
    %v433 = vmax.f32 %v417, 1e-12
    %v434 = vmax.f32 %v418, 1e-12
    %v435 = vlaneseq
    %v436 = vand.u32 %v435, 127
    %v437 = vlaneseq
    %v438 = vshrl.u32 %v437, 7
    %v439 = vadd.s32 %v438, 8
    %v440 = vadd.s32 %v438, 16
    %v441 = vadd.s32 %v438, 24
    %v442 = vadd.s32 %v438, 32
    %v443 = vadd.s32 %v438, 40
    %v444 = vadd.s32 %v438, 48
    %v445 = vadd.s32 %v438, 56
    %v446 = vadd.s32 %v438, 64
    %v447 = vadd.s32 %v438, 72
    %v448 = vadd.s32 %v438, 80
    %v449 = vadd.s32 %v438, 88
    %v450 = vadd.s32 %v438, 96
    %v451 = vadd.s32 %v438, 104
    %v452 = vadd.s32 %v438, 112
    %v453 = vadd.s32 %v438, 120
    %v454 = vstv %s25
    %v455 = vadd.s32 %v438, %v454
    %v456 = vadd.s32 %v439, %v454
    %v457 = vadd.s32 %v440, %v454
    %v458 = vadd.s32 %v441, %v454
    %v459 = vadd.s32 %v442, %v454
    %v460 = vadd.s32 %v443, %v454
    %v461 = vadd.s32 %v444, %v454
    %v462 = vadd.s32 %v445, %v454
    %v463 = vadd.s32 %v446, %v454
    %v464 = vadd.s32 %v447, %v454
    %v465 = vadd.s32 %v448, %v454
    %v466 = vadd.s32 %v449, %v454
    %v467 = vadd.s32 %v450, %v454
    %v468 = vadd.s32 %v451, %v454
    %v469 = vadd.s32 %v452, %v454
    %v470 = vadd.s32 %v453, %v454
    %vm471 = vcmp.eq.s32.totalorder %v436, %v455
    %vm472 = vcmp.eq.s32.totalorder %v436, %v456
    %vm473 = vcmp.eq.s32.totalorder %v436, %v457
    %vm474 = vcmp.eq.s32.totalorder %v436, %v458
    %vm475 = vcmp.eq.s32.totalorder %v436, %v459
    %vm476 = vcmp.eq.s32.totalorder %v436, %v460
    %vm477 = vcmp.eq.s32.totalorder %v436, %v461
    %vm478 = vcmp.eq.s32.totalorder %v436, %v462
    %vm479 = vcmp.eq.s32.totalorder %v436, %v463
    %vm480 = vcmp.eq.s32.totalorder %v436, %v464
    %vm481 = vcmp.eq.s32.totalorder %v436, %v465
    %vm482 = vcmp.eq.s32.totalorder %v436, %v466
    %vm483 = vcmp.eq.s32.totalorder %v436, %v467
    %vm484 = vcmp.eq.s32.totalorder %v436, %v468
    %vm485 = vcmp.eq.s32.totalorder %v436, %v469
    %vm486 = vcmp.eq.s32.totalorder %v436, %v470
    %v488 = vlaneseq
    %v489 = vshrl.u32 %v488, 7
    %v490 = vsub.s32 0, %v489
    %v491 = vrot.slane %v75, %v490
    %494 = vset.pattern.permute.xlu0 0
    %495 = vperm.xlu0 %494, %v76
    %v496 = vpop.permute.xlu0 %495
    %499 = vset.pattern.permute.xlu0 0
    %500 = vperm.xlu0 %499, %v77
    %v501 = vpop.permute.xlu0 %500
    %504 = vset.pattern.permute.xlu0 0
    %505 = vperm.xlu0 %504, %v78
    %v506 = vpop.permute.xlu0 %505
    %509 = vset.pattern.permute.xlu0 0
    %510 = vperm.xlu0 %509, %v79
    %v511 = vpop.permute.xlu0 %510
    %514 = vset.pattern.permute.xlu0 0
    %515 = vperm.xlu0 %514, %v80
    %v516 = vpop.permute.xlu0 %515
    %519 = vset.pattern.permute.xlu0 0
    %520 = vperm.xlu0 %519, %v81
    %v521 = vpop.permute.xlu0 %520
    %524 = vset.pattern.permute.xlu0 0
    %525 = vperm.xlu0 %524, %v82
    %v526 = vpop.permute.xlu0 %525
    %529 = vset.pattern.permute.xlu0 0
    %530 = vperm.xlu0 %529, %v83
    %v531 = vpop.permute.xlu0 %530
    %534 = vset.pattern.permute.xlu0 0
    %535 = vperm.xlu0 %534, %v84
    %v536 = vpop.permute.xlu0 %535
    %539 = vset.pattern.permute.xlu0 0
    %540 = vperm.xlu0 %539, %v85
    %v541 = vpop.permute.xlu0 %540
    %544 = vset.pattern.permute.xlu0 0
    %545 = vperm.xlu0 %544, %v86
    %v546 = vpop.permute.xlu0 %545
    %549 = vset.pattern.permute.xlu0 0
    %550 = vperm.xlu0 %549, %v87
    %v551 = vpop.permute.xlu0 %550
    %554 = vset.pattern.permute.xlu0 0
    %555 = vperm.xlu0 %554, %v88
    %v556 = vpop.permute.xlu0 %555
    %559 = vset.pattern.permute.xlu0 0
    %560 = vperm.xlu0 %559, %v89
    %v561 = vpop.permute.xlu0 %560
    %564 = vset.pattern.permute.xlu0 0
    %565 = vperm.xlu0 %564, %v90
    %v566 = vpop.permute.xlu0 %565
    %569 = vset.pattern.permute.xlu0 0
    %570 = vperm.xlu0 %569, %v91
    %v571 = vpop.permute.xlu0 %570
    %vm573 = vcmp.eq.f32.partialorder %v491, %v496
    %vm574 = vcmp.eq.f32.partialorder %v491, %v501
    %vm575 = vcmp.eq.f32.partialorder %v491, %v506
    %vm576 = vcmp.eq.f32.partialorder %v491, %v511
    %vm577 = vcmp.eq.f32.partialorder %v491, %v516
    %vm578 = vcmp.eq.f32.partialorder %v491, %v521
    %vm579 = vcmp.eq.f32.partialorder %v491, %v526
    %vm580 = vcmp.eq.f32.partialorder %v491, %v531
    %vm581 = vcmp.eq.f32.partialorder %v491, %v536
    %vm582 = vcmp.eq.f32.partialorder %v491, %v541
    %vm583 = vcmp.eq.f32.partialorder %v491, %v546
    %vm584 = vcmp.eq.f32.partialorder %v491, %v551
    %vm585 = vcmp.eq.f32.partialorder %v491, %v556
    %vm586 = vcmp.eq.f32.partialorder %v491, %v561
    %vm587 = vcmp.eq.f32.partialorder %v491, %v566
    %vm588 = vcmp.eq.f32.partialorder %v491, %v571
    %vm589 = vmxor %vm471, 1
    %vm590 = vmxor %vm472, 1
    %vm591 = vmxor %vm473, 1
    %vm592 = vmxor %vm474, 1
    %vm593 = vmxor %vm475, 1
    %vm594 = vmxor %vm476, 1
    %vm595 = vmxor %vm477, 1
    %vm596 = vmxor %vm478, 1
    %vm597 = vmxor %vm479, 1
    %vm598 = vmxor %vm480, 1
    %vm599 = vmxor %vm481, 1
    %vm600 = vmxor %vm482, 1
    %vm601 = vmxor %vm483, 1
    %vm602 = vmxor %vm484, 1
    %vm603 = vmxor %vm485, 1
    %vm604 = vmxor %vm486, 1
    %vm605 = vmand %vm573, %vm589
    %vm606 = vmand %vm574, %vm590
    %vm607 = vmand %vm575, %vm591
    %vm608 = vmand %vm576, %vm592
    %vm609 = vmand %vm577, %vm593
    %vm610 = vmand %vm578, %vm594
    %vm611 = vmand %vm579, %vm595
    %vm612 = vmand %vm580, %vm596
    %vm613 = vmand %vm581, %vm597
    %vm614 = vmand %vm582, %vm598
    %vm615 = vmand %vm583, %vm599
    %vm616 = vmand %vm584, %vm600
    %vm617 = vmand %vm585, %vm601
    %vm618 = vmand %vm586, %vm602
    %vm619 = vmand %vm587, %vm603
    %vm620 = vmand %vm588, %vm604
    %vm621 = vmxor %vm573, 1
    %vm622 = vmxor %vm574, 1
    %vm623 = vmxor %vm575, 1
    %vm624 = vmxor %vm576, 1
    %vm625 = vmxor %vm577, 1
    %vm626 = vmxor %vm578, 1
    %vm627 = vmxor %vm579, 1
    %vm628 = vmxor %vm580, 1
    %vm629 = vmxor %vm581, 1
    %vm630 = vmxor %vm582, 1
    %vm631 = vmxor %vm583, 1
    %vm632 = vmxor %vm584, 1
    %vm633 = vmxor %vm585, 1
    %vm634 = vmxor %vm586, 1
    %vm635 = vmxor %vm587, 1
    %vm636 = vmxor %vm588, 1
    %v637 = vsel %vm471, 1e+30, %v419
    %v638 = vsel %vm472, 1e+30, %v420
    %v639 = vsel %vm473, 1e+30, %v421
    %v640 = vsel %vm474, 1e+30, %v422
    %v641 = vsel %vm475, 1e+30, %v423
    %v642 = vsel %vm476, 1e+30, %v424
    %v643 = vsel %vm477, 1e+30, %v425
    %v644 = vsel %vm478, 1e+30, %v426
    %v645 = vsel %vm479, 1e+30, %v427
    %v646 = vsel %vm480, 1e+30, %v428
    %v647 = vsel %vm481, 1e+30, %v429
    %v648 = vsel %vm482, 1e+30, %v430
    %v649 = vsel %vm483, 1e+30, %v431
    %v650 = vsel %vm484, 1e+30, %v432
    %v651 = vsel %vm485, 1e+30, %v433
    %v652 = vsel %vm486, 1e+30, %v434
    %653 = vmin.xlane.f32.xlu0 %v637
    %v654 = vpop.xlane.xlu0 %653
    %655 = vmin.xlane.f32.xlu0 %v638
    %v656 = vpop.xlane.xlu0 %655
    %657 = vmin.xlane.f32.xlu0 %v639
    %v658 = vpop.xlane.xlu0 %657
    %659 = vmin.xlane.f32.xlu0 %v640
    %v660 = vpop.xlane.xlu0 %659
    %661 = vmin.xlane.f32.xlu0 %v641
    %v662 = vpop.xlane.xlu0 %661
    %663 = vmin.xlane.f32.xlu0 %v642
    %v664 = vpop.xlane.xlu0 %663
    %665 = vmin.xlane.f32.xlu0 %v643
    %v666 = vpop.xlane.xlu0 %665
    %667 = vmin.xlane.f32.xlu0 %v644
    %v668 = vpop.xlane.xlu0 %667
    %669 = vmin.xlane.f32.xlu0 %v645
    %v670 = vpop.xlane.xlu0 %669
    %671 = vmin.xlane.f32.xlu0 %v646
    %v672 = vpop.xlane.xlu0 %671
    %673 = vmin.xlane.f32.xlu0 %v647
    %v674 = vpop.xlane.xlu0 %673
    %675 = vmin.xlane.f32.xlu0 %v648
    %v676 = vpop.xlane.xlu0 %675
    %677 = vmin.xlane.f32.xlu0 %v649
    %v678 = vpop.xlane.xlu0 %677
    %679 = vmin.xlane.f32.xlu0 %v650
    %v680 = vpop.xlane.xlu0 %679
    %681 = vmin.xlane.f32.xlu0 %v651
    %v682 = vpop.xlane.xlu0 %681
    %683 = vmin.xlane.f32.xlu0 %v652
    %v684 = vpop.xlane.xlu0 %683
    %vm685 = vcmp.eq.f32.partialorder %v637, %v654
    %vm686 = vcmp.eq.f32.partialorder %v638, %v656
    %vm687 = vcmp.eq.f32.partialorder %v639, %v658
    %vm688 = vcmp.eq.f32.partialorder %v640, %v660
    %vm689 = vcmp.eq.f32.partialorder %v641, %v662
    %vm690 = vcmp.eq.f32.partialorder %v642, %v664
    %vm691 = vcmp.eq.f32.partialorder %v643, %v666
    %vm692 = vcmp.eq.f32.partialorder %v644, %v668
    %vm693 = vcmp.eq.f32.partialorder %v645, %v670
    %vm694 = vcmp.eq.f32.partialorder %v646, %v672
    %vm695 = vcmp.eq.f32.partialorder %v647, %v674
    %vm696 = vcmp.eq.f32.partialorder %v648, %v676
    %vm697 = vcmp.eq.f32.partialorder %v649, %v678
    %vm698 = vcmp.eq.f32.partialorder %v650, %v680
    %vm699 = vcmp.eq.f32.partialorder %v651, %v682
    %vm700 = vcmp.eq.f32.partialorder %v652, %v684
    %v701 = vsel %vm685, 1e+30, %v637
    %v702 = vsel %vm686, 1e+30, %v638
    %v703 = vsel %vm687, 1e+30, %v639
    %v704 = vsel %vm688, 1e+30, %v640
    %v705 = vsel %vm689, 1e+30, %v641
    %v706 = vsel %vm690, 1e+30, %v642
    %v707 = vsel %vm691, 1e+30, %v643
    %v708 = vsel %vm692, 1e+30, %v644
    %v709 = vsel %vm693, 1e+30, %v645
    %v710 = vsel %vm694, 1e+30, %v646
    %v711 = vsel %vm695, 1e+30, %v647
    %v712 = vsel %vm696, 1e+30, %v648
    %v713 = vsel %vm697, 1e+30, %v649
    %v714 = vsel %vm698, 1e+30, %v650
    %v715 = vsel %vm699, 1e+30, %v651
    %v716 = vsel %vm700, 1e+30, %v652
    %717 = vmin.xlane.f32.xlu0 %v701
    %v718 = vpop.xlane.xlu0 %717
    %719 = vmin.xlane.f32.xlu0 %v702
    %v720 = vpop.xlane.xlu0 %719
    %721 = vmin.xlane.f32.xlu0 %v703
    %v722 = vpop.xlane.xlu0 %721
    %723 = vmin.xlane.f32.xlu0 %v704
    %v724 = vpop.xlane.xlu0 %723
    %725 = vmin.xlane.f32.xlu0 %v705
    %v726 = vpop.xlane.xlu0 %725
    %727 = vmin.xlane.f32.xlu0 %v706
    %v728 = vpop.xlane.xlu0 %727
    %729 = vmin.xlane.f32.xlu0 %v707
    %v730 = vpop.xlane.xlu0 %729
    %731 = vmin.xlane.f32.xlu0 %v708
    %v732 = vpop.xlane.xlu0 %731
    %733 = vmin.xlane.f32.xlu0 %v709
    %v734 = vpop.xlane.xlu0 %733
    %735 = vmin.xlane.f32.xlu0 %v710
    %v736 = vpop.xlane.xlu0 %735
    %737 = vmin.xlane.f32.xlu0 %v711
    %v738 = vpop.xlane.xlu0 %737
    %739 = vmin.xlane.f32.xlu0 %v712
    %v740 = vpop.xlane.xlu0 %739
    %741 = vmin.xlane.f32.xlu0 %v713
    %v742 = vpop.xlane.xlu0 %741
    %743 = vmin.xlane.f32.xlu0 %v714
    %v744 = vpop.xlane.xlu0 %743
    %745 = vmin.xlane.f32.xlu0 %v715
    %v746 = vpop.xlane.xlu0 %745
    %747 = vmin.xlane.f32.xlu0 %v716
    %v748 = vpop.xlane.xlu0 %747
    %vm749 = vcmp.eq.f32.partialorder %v701, %v718
    %vm750 = vcmp.eq.f32.partialorder %v702, %v720
    %vm751 = vcmp.eq.f32.partialorder %v703, %v722
    %vm752 = vcmp.eq.f32.partialorder %v704, %v724
    %vm753 = vcmp.eq.f32.partialorder %v705, %v726
    %vm754 = vcmp.eq.f32.partialorder %v706, %v728
    %vm755 = vcmp.eq.f32.partialorder %v707, %v730
    %vm756 = vcmp.eq.f32.partialorder %v708, %v732
    %vm757 = vcmp.eq.f32.partialorder %v709, %v734
    %vm758 = vcmp.eq.f32.partialorder %v710, %v736
    %vm759 = vcmp.eq.f32.partialorder %v711, %v738
    %vm760 = vcmp.eq.f32.partialorder %v712, %v740
    %vm761 = vcmp.eq.f32.partialorder %v713, %v742
    %vm762 = vcmp.eq.f32.partialorder %v714, %v744
    %vm763 = vcmp.eq.f32.partialorder %v715, %v746
    %vm764 = vcmp.eq.f32.partialorder %v716, %v748
    %v765 = vsel %vm749, 1e+30, %v701
    %v766 = vsel %vm750, 1e+30, %v702
    %v767 = vsel %vm751, 1e+30, %v703
    %v768 = vsel %vm752, 1e+30, %v704
    %v769 = vsel %vm753, 1e+30, %v705
    %v770 = vsel %vm754, 1e+30, %v706
    %v771 = vsel %vm755, 1e+30, %v707
    %v772 = vsel %vm756, 1e+30, %v708
    %v773 = vsel %vm757, 1e+30, %v709
    %v774 = vsel %vm758, 1e+30, %v710
    %v775 = vsel %vm759, 1e+30, %v711
    %v776 = vsel %vm760, 1e+30, %v712
    %v777 = vsel %vm761, 1e+30, %v713
    %v778 = vsel %vm762, 1e+30, %v714
    %v779 = vsel %vm763, 1e+30, %v715
    %v780 = vsel %vm764, 1e+30, %v716
    %781 = vmin.xlane.f32.xlu0 %v765
    %v782 = vpop.xlane.xlu0 %781
    %783 = vmin.xlane.f32.xlu0 %v766
    %v784 = vpop.xlane.xlu0 %783
    %785 = vmin.xlane.f32.xlu0 %v767
    %v786 = vpop.xlane.xlu0 %785
    %787 = vmin.xlane.f32.xlu0 %v768
    %v788 = vpop.xlane.xlu0 %787
    %789 = vmin.xlane.f32.xlu0 %v769
    %v790 = vpop.xlane.xlu0 %789
    %791 = vmin.xlane.f32.xlu0 %v770
    %v792 = vpop.xlane.xlu0 %791
    %793 = vmin.xlane.f32.xlu0 %v771
    %v794 = vpop.xlane.xlu0 %793
    %795 = vmin.xlane.f32.xlu0 %v772
    %v796 = vpop.xlane.xlu0 %795
    %797 = vmin.xlane.f32.xlu0 %v773
    %v798 = vpop.xlane.xlu0 %797
    %799 = vmin.xlane.f32.xlu0 %v774
    %v800 = vpop.xlane.xlu0 %799
    %801 = vmin.xlane.f32.xlu0 %v775
    %v802 = vpop.xlane.xlu0 %801
    %803 = vmin.xlane.f32.xlu0 %v776
    %v804 = vpop.xlane.xlu0 %803
    %805 = vmin.xlane.f32.xlu0 %v777
    %v806 = vpop.xlane.xlu0 %805
    %807 = vmin.xlane.f32.xlu0 %v778
    %v808 = vpop.xlane.xlu0 %807
    %809 = vmin.xlane.f32.xlu0 %v779
    %v810 = vpop.xlane.xlu0 %809
    %811 = vmin.xlane.f32.xlu0 %v780
    %v812 = vpop.xlane.xlu0 %811
    %vm813 = vcmp.eq.f32.partialorder %v765, %v782
    %vm814 = vcmp.eq.f32.partialorder %v766, %v784
    %vm815 = vcmp.eq.f32.partialorder %v767, %v786
    %vm816 = vcmp.eq.f32.partialorder %v768, %v788
    %vm817 = vcmp.eq.f32.partialorder %v769, %v790
    %vm818 = vcmp.eq.f32.partialorder %v770, %v792
    %vm819 = vcmp.eq.f32.partialorder %v771, %v794
    %vm820 = vcmp.eq.f32.partialorder %v772, %v796
    %vm821 = vcmp.eq.f32.partialorder %v773, %v798
    %vm822 = vcmp.eq.f32.partialorder %v774, %v800
    %vm823 = vcmp.eq.f32.partialorder %v775, %v802
    %vm824 = vcmp.eq.f32.partialorder %v776, %v804
    %vm825 = vcmp.eq.f32.partialorder %v777, %v806
    %vm826 = vcmp.eq.f32.partialorder %v778, %v808
    %vm827 = vcmp.eq.f32.partialorder %v779, %v810
    %vm828 = vcmp.eq.f32.partialorder %v780, %v812
    %v829 = vsel %vm813, 1e+30, %v765
    %v830 = vsel %vm814, 1e+30, %v766
    %v831 = vsel %vm815, 1e+30, %v767
    %v832 = vsel %vm816, 1e+30, %v768
    %v833 = vsel %vm817, 1e+30, %v769
    %v834 = vsel %vm818, 1e+30, %v770
    %v835 = vsel %vm819, 1e+30, %v771
    %v836 = vsel %vm820, 1e+30, %v772
    %v837 = vsel %vm821, 1e+30, %v773
    %v838 = vsel %vm822, 1e+30, %v774
    %v839 = vsel %vm823, 1e+30, %v775
    %v840 = vsel %vm824, 1e+30, %v776
    %v841 = vsel %vm825, 1e+30, %v777
    %v842 = vsel %vm826, 1e+30, %v778
    %v843 = vsel %vm827, 1e+30, %v779
    %v844 = vsel %vm828, 1e+30, %v780
    %845 = vmin.xlane.f32.xlu0 %v829
    %v846 = vpop.xlane.xlu0 %845
    %847 = vmin.xlane.f32.xlu0 %v830
    %v848 = vpop.xlane.xlu0 %847
    %849 = vmin.xlane.f32.xlu0 %v831
    %v850 = vpop.xlane.xlu0 %849
    %851 = vmin.xlane.f32.xlu0 %v832
    %v852 = vpop.xlane.xlu0 %851
    %853 = vmin.xlane.f32.xlu0 %v833
    %v854 = vpop.xlane.xlu0 %853
    %855 = vmin.xlane.f32.xlu0 %v834
    %v856 = vpop.xlane.xlu0 %855
    %857 = vmin.xlane.f32.xlu0 %v835
    %v858 = vpop.xlane.xlu0 %857
    %859 = vmin.xlane.f32.xlu0 %v836
    %v860 = vpop.xlane.xlu0 %859
    %861 = vmin.xlane.f32.xlu0 %v837
    %v862 = vpop.xlane.xlu0 %861
    %863 = vmin.xlane.f32.xlu0 %v838
    %v864 = vpop.xlane.xlu0 %863
    %865 = vmin.xlane.f32.xlu0 %v839
    %v866 = vpop.xlane.xlu0 %865
    %867 = vmin.xlane.f32.xlu0 %v840
    %v868 = vpop.xlane.xlu0 %867
    %869 = vmin.xlane.f32.xlu0 %v841
    %v870 = vpop.xlane.xlu0 %869
    %871 = vmin.xlane.f32.xlu0 %v842
    %v872 = vpop.xlane.xlu0 %871
    %873 = vmin.xlane.f32.xlu0 %v843
    %v874 = vpop.xlane.xlu0 %873
    %875 = vmin.xlane.f32.xlu0 %v844
    %v876 = vpop.xlane.xlu0 %875
    %vm877 = vcmp.eq.f32.partialorder %v829, %v846
    %vm878 = vcmp.eq.f32.partialorder %v830, %v848
    %vm879 = vcmp.eq.f32.partialorder %v831, %v850
    %vm880 = vcmp.eq.f32.partialorder %v832, %v852
    %vm881 = vcmp.eq.f32.partialorder %v833, %v854
    %vm882 = vcmp.eq.f32.partialorder %v834, %v856
    %vm883 = vcmp.eq.f32.partialorder %v835, %v858
    %vm884 = vcmp.eq.f32.partialorder %v836, %v860
    %vm885 = vcmp.eq.f32.partialorder %v837, %v862
    %vm886 = vcmp.eq.f32.partialorder %v838, %v864
    %vm887 = vcmp.eq.f32.partialorder %v839, %v866
    %vm888 = vcmp.eq.f32.partialorder %v840, %v868
    %vm889 = vcmp.eq.f32.partialorder %v841, %v870
    %vm890 = vcmp.eq.f32.partialorder %v842, %v872
    %vm891 = vcmp.eq.f32.partialorder %v843, %v874
    %vm892 = vcmp.eq.f32.partialorder %v844, %v876
    %v893 = vsel %vm877, 1e+30, %v829
    %v894 = vsel %vm878, 1e+30, %v830
    %v895 = vsel %vm879, 1e+30, %v831
    %v896 = vsel %vm880, 1e+30, %v832
    %v897 = vsel %vm881, 1e+30, %v833
    %v898 = vsel %vm882, 1e+30, %v834
    %v899 = vsel %vm883, 1e+30, %v835
    %v900 = vsel %vm884, 1e+30, %v836
    %v901 = vsel %vm885, 1e+30, %v837
    %v902 = vsel %vm886, 1e+30, %v838
    %v903 = vsel %vm887, 1e+30, %v839
    %v904 = vsel %vm888, 1e+30, %v840
    %v905 = vsel %vm889, 1e+30, %v841
    %v906 = vsel %vm890, 1e+30, %v842
    %v907 = vsel %vm891, 1e+30, %v843
    %v908 = vsel %vm892, 1e+30, %v844
    %909 = vmin.xlane.f32.xlu0 %v893
    %v910 = vpop.xlane.xlu0 %909
    %911 = vmin.xlane.f32.xlu0 %v894
    %v912 = vpop.xlane.xlu0 %911
    %913 = vmin.xlane.f32.xlu0 %v895
    %v914 = vpop.xlane.xlu0 %913
    %915 = vmin.xlane.f32.xlu0 %v896
    %v916 = vpop.xlane.xlu0 %915
    %917 = vmin.xlane.f32.xlu0 %v897
    %v918 = vpop.xlane.xlu0 %917
    %919 = vmin.xlane.f32.xlu0 %v898
    %v920 = vpop.xlane.xlu0 %919
    %921 = vmin.xlane.f32.xlu0 %v899
    %v922 = vpop.xlane.xlu0 %921
    %923 = vmin.xlane.f32.xlu0 %v900
    %v924 = vpop.xlane.xlu0 %923
    %925 = vmin.xlane.f32.xlu0 %v901
    %v926 = vpop.xlane.xlu0 %925
    %927 = vmin.xlane.f32.xlu0 %v902
    %v928 = vpop.xlane.xlu0 %927
    %929 = vmin.xlane.f32.xlu0 %v903
    %v930 = vpop.xlane.xlu0 %929
    %931 = vmin.xlane.f32.xlu0 %v904
    %v932 = vpop.xlane.xlu0 %931
    %933 = vmin.xlane.f32.xlu0 %v905
    %v934 = vpop.xlane.xlu0 %933
    %935 = vmin.xlane.f32.xlu0 %v906
    %v936 = vpop.xlane.xlu0 %935
    %937 = vmin.xlane.f32.xlu0 %v907
    %v938 = vpop.xlane.xlu0 %937
    %939 = vmin.xlane.f32.xlu0 %v908
    %v940 = vpop.xlane.xlu0 %939
    %vm941 = vcmp.eq.f32.partialorder %v893, %v910
    %vm942 = vcmp.eq.f32.partialorder %v894, %v912
    %vm943 = vcmp.eq.f32.partialorder %v895, %v914
    %vm944 = vcmp.eq.f32.partialorder %v896, %v916
    %vm945 = vcmp.eq.f32.partialorder %v897, %v918
    %vm946 = vcmp.eq.f32.partialorder %v898, %v920
    %vm947 = vcmp.eq.f32.partialorder %v899, %v922
    %vm948 = vcmp.eq.f32.partialorder %v900, %v924
    %vm949 = vcmp.eq.f32.partialorder %v901, %v926
    %vm950 = vcmp.eq.f32.partialorder %v902, %v928
    %vm951 = vcmp.eq.f32.partialorder %v903, %v930
    %vm952 = vcmp.eq.f32.partialorder %v904, %v932
    %vm953 = vcmp.eq.f32.partialorder %v905, %v934
    %vm954 = vcmp.eq.f32.partialorder %v906, %v936
    %vm955 = vcmp.eq.f32.partialorder %v907, %v938
    %vm956 = vcmp.eq.f32.partialorder %v908, %v940
    %v957 = vsel %vm941, 1e+30, %v893
    %v958 = vsel %vm942, 1e+30, %v894
    %v959 = vsel %vm943, 1e+30, %v895
    %v960 = vsel %vm944, 1e+30, %v896
    %v961 = vsel %vm945, 1e+30, %v897
    %v962 = vsel %vm946, 1e+30, %v898
    %v963 = vsel %vm947, 1e+30, %v899
    %v964 = vsel %vm948, 1e+30, %v900
    %v965 = vsel %vm949, 1e+30, %v901
    %v966 = vsel %vm950, 1e+30, %v902
    %v967 = vsel %vm951, 1e+30, %v903
    %v968 = vsel %vm952, 1e+30, %v904
    %v969 = vsel %vm953, 1e+30, %v905
    %v970 = vsel %vm954, 1e+30, %v906
    %v971 = vsel %vm955, 1e+30, %v907
    %v972 = vsel %vm956, 1e+30, %v908
    %973 = vmin.xlane.f32.xlu0 %v957
    %v974 = vpop.xlane.xlu0 %973
    %975 = vmin.xlane.f32.xlu0 %v958
    %v976 = vpop.xlane.xlu0 %975
    %977 = vmin.xlane.f32.xlu0 %v959
    %v978 = vpop.xlane.xlu0 %977
    %979 = vmin.xlane.f32.xlu0 %v960
    %v980 = vpop.xlane.xlu0 %979
    %981 = vmin.xlane.f32.xlu0 %v961
    %v982 = vpop.xlane.xlu0 %981
    %983 = vmin.xlane.f32.xlu0 %v962
    %v984 = vpop.xlane.xlu0 %983
    %985 = vmin.xlane.f32.xlu0 %v963
    %v986 = vpop.xlane.xlu0 %985
    %987 = vmin.xlane.f32.xlu0 %v964
    %v988 = vpop.xlane.xlu0 %987
    %989 = vmin.xlane.f32.xlu0 %v965
    %v990 = vpop.xlane.xlu0 %989
    %991 = vmin.xlane.f32.xlu0 %v966
    %v992 = vpop.xlane.xlu0 %991
    %993 = vmin.xlane.f32.xlu0 %v967
    %v994 = vpop.xlane.xlu0 %993
    %995 = vmin.xlane.f32.xlu0 %v968
    %v996 = vpop.xlane.xlu0 %995
    %997 = vmin.xlane.f32.xlu0 %v969
    %v998 = vpop.xlane.xlu0 %997
    %999 = vmin.xlane.f32.xlu0 %v970
    %v1000 = vpop.xlane.xlu0 %999
    %1001 = vmin.xlane.f32.xlu0 %v971
    %v1002 = vpop.xlane.xlu0 %1001
    %1003 = vmin.xlane.f32.xlu0 %v972
    %v1004 = vpop.xlane.xlu0 %1003
    %vm1005 = vcmp.eq.f32.partialorder %v957, %v974
    %vm1006 = vcmp.eq.f32.partialorder %v958, %v976
    %vm1007 = vcmp.eq.f32.partialorder %v959, %v978
    %vm1008 = vcmp.eq.f32.partialorder %v960, %v980
    %vm1009 = vcmp.eq.f32.partialorder %v961, %v982
    %vm1010 = vcmp.eq.f32.partialorder %v962, %v984
    %vm1011 = vcmp.eq.f32.partialorder %v963, %v986
    %vm1012 = vcmp.eq.f32.partialorder %v964, %v988
    %vm1013 = vcmp.eq.f32.partialorder %v965, %v990
    %vm1014 = vcmp.eq.f32.partialorder %v966, %v992
    %vm1015 = vcmp.eq.f32.partialorder %v967, %v994
    %vm1016 = vcmp.eq.f32.partialorder %v968, %v996
    %vm1017 = vcmp.eq.f32.partialorder %v969, %v998
    %vm1018 = vcmp.eq.f32.partialorder %v970, %v1000
    %vm1019 = vcmp.eq.f32.partialorder %v971, %v1002
    %vm1020 = vcmp.eq.f32.partialorder %v972, %v1004
    %v1021 = vsel %vm1005, 1e+30, %v957
    %v1022 = vsel %vm1006, 1e+30, %v958
    %v1023 = vsel %vm1007, 1e+30, %v959
    %v1024 = vsel %vm1008, 1e+30, %v960
    %v1025 = vsel %vm1009, 1e+30, %v961
    %v1026 = vsel %vm1010, 1e+30, %v962
    %v1027 = vsel %vm1011, 1e+30, %v963
    %v1028 = vsel %vm1012, 1e+30, %v964
    %v1029 = vsel %vm1013, 1e+30, %v965
    %v1030 = vsel %vm1014, 1e+30, %v966
    %v1031 = vsel %vm1015, 1e+30, %v967
    %v1032 = vsel %vm1016, 1e+30, %v968
    %v1033 = vsel %vm1017, 1e+30, %v969
    %v1034 = vsel %vm1018, 1e+30, %v970
    %v1035 = vsel %vm1019, 1e+30, %v971
    %v1036 = vsel %vm1020, 1e+30, %v972
    %1037 = vmin.xlane.f32.xlu0 %v1021
    %v1038 = vpop.xlane.xlu0 %1037
    %1039 = vmin.xlane.f32.xlu0 %v1022
    %v1040 = vpop.xlane.xlu0 %1039
    %1041 = vmin.xlane.f32.xlu0 %v1023
    %v1042 = vpop.xlane.xlu0 %1041
    %1043 = vmin.xlane.f32.xlu0 %v1024
    %v1044 = vpop.xlane.xlu0 %1043
    %1045 = vmin.xlane.f32.xlu0 %v1025
    %v1046 = vpop.xlane.xlu0 %1045
    %1047 = vmin.xlane.f32.xlu0 %v1026
    %v1048 = vpop.xlane.xlu0 %1047
    %1049 = vmin.xlane.f32.xlu0 %v1027
    %v1050 = vpop.xlane.xlu0 %1049
    %1051 = vmin.xlane.f32.xlu0 %v1028
    %v1052 = vpop.xlane.xlu0 %1051
    %1053 = vmin.xlane.f32.xlu0 %v1029
    %v1054 = vpop.xlane.xlu0 %1053
    %1055 = vmin.xlane.f32.xlu0 %v1030
    %v1056 = vpop.xlane.xlu0 %1055
    %1057 = vmin.xlane.f32.xlu0 %v1031
    %v1058 = vpop.xlane.xlu0 %1057
    %1059 = vmin.xlane.f32.xlu0 %v1032
    %v1060 = vpop.xlane.xlu0 %1059
    %1061 = vmin.xlane.f32.xlu0 %v1033
    %v1062 = vpop.xlane.xlu0 %1061
    %1063 = vmin.xlane.f32.xlu0 %v1034
    %v1064 = vpop.xlane.xlu0 %1063
    %1065 = vmin.xlane.f32.xlu0 %v1035
    %v1066 = vpop.xlane.xlu0 %1065
    %1067 = vmin.xlane.f32.xlu0 %v1036
    %v1068 = vpop.xlane.xlu0 %1067
    %vm1069 = vcmp.eq.f32.partialorder %v1021, %v1038
    %vm1070 = vcmp.eq.f32.partialorder %v1022, %v1040
    %vm1071 = vcmp.eq.f32.partialorder %v1023, %v1042
    %vm1072 = vcmp.eq.f32.partialorder %v1024, %v1044
    %vm1073 = vcmp.eq.f32.partialorder %v1025, %v1046
    %vm1074 = vcmp.eq.f32.partialorder %v1026, %v1048
    %vm1075 = vcmp.eq.f32.partialorder %v1027, %v1050
    %vm1076 = vcmp.eq.f32.partialorder %v1028, %v1052
    %vm1077 = vcmp.eq.f32.partialorder %v1029, %v1054
    %vm1078 = vcmp.eq.f32.partialorder %v1030, %v1056
    %vm1079 = vcmp.eq.f32.partialorder %v1031, %v1058
    %vm1080 = vcmp.eq.f32.partialorder %v1032, %v1060
    %vm1081 = vcmp.eq.f32.partialorder %v1033, %v1062
    %vm1082 = vcmp.eq.f32.partialorder %v1034, %v1064
    %vm1083 = vcmp.eq.f32.partialorder %v1035, %v1066
    %vm1084 = vcmp.eq.f32.partialorder %v1036, %v1068
    %v1085 = vsel %vm1069, 1e+30, %v1021
    %v1086 = vsel %vm1070, 1e+30, %v1022
    %v1087 = vsel %vm1071, 1e+30, %v1023
    %v1088 = vsel %vm1072, 1e+30, %v1024
    %v1089 = vsel %vm1073, 1e+30, %v1025
    %v1090 = vsel %vm1074, 1e+30, %v1026
    %v1091 = vsel %vm1075, 1e+30, %v1027
    %v1092 = vsel %vm1076, 1e+30, %v1028
    %v1093 = vsel %vm1077, 1e+30, %v1029
    %v1094 = vsel %vm1078, 1e+30, %v1030
    %v1095 = vsel %vm1079, 1e+30, %v1031
    %v1096 = vsel %vm1080, 1e+30, %v1032
    %v1097 = vsel %vm1081, 1e+30, %v1033
    %v1098 = vsel %vm1082, 1e+30, %v1034
    %v1099 = vsel %vm1083, 1e+30, %v1035
    %v1100 = vsel %vm1084, 1e+30, %v1036
    %1101 = vmin.xlane.f32.xlu0 %v1085
    %v1102 = vpop.xlane.xlu0 %1101
    %1103 = vmin.xlane.f32.xlu0 %v1086
    %v1104 = vpop.xlane.xlu0 %1103
    %1105 = vmin.xlane.f32.xlu0 %v1087
    %v1106 = vpop.xlane.xlu0 %1105
    %1107 = vmin.xlane.f32.xlu0 %v1088
    %v1108 = vpop.xlane.xlu0 %1107
    %1109 = vmin.xlane.f32.xlu0 %v1089
    %v1110 = vpop.xlane.xlu0 %1109
    %1111 = vmin.xlane.f32.xlu0 %v1090
    %v1112 = vpop.xlane.xlu0 %1111
    %1113 = vmin.xlane.f32.xlu0 %v1091
    %v1114 = vpop.xlane.xlu0 %1113
    %1115 = vmin.xlane.f32.xlu0 %v1092
    %v1116 = vpop.xlane.xlu0 %1115
    %1117 = vmin.xlane.f32.xlu0 %v1093
    %v1118 = vpop.xlane.xlu0 %1117
    %1119 = vmin.xlane.f32.xlu0 %v1094
    %v1120 = vpop.xlane.xlu0 %1119
    %1121 = vmin.xlane.f32.xlu0 %v1095
    %v1122 = vpop.xlane.xlu0 %1121
    %1123 = vmin.xlane.f32.xlu0 %v1096
    %v1124 = vpop.xlane.xlu0 %1123
    %1125 = vmin.xlane.f32.xlu0 %v1097
    %v1126 = vpop.xlane.xlu0 %1125
    %1127 = vmin.xlane.f32.xlu0 %v1098
    %v1128 = vpop.xlane.xlu0 %1127
    %1129 = vmin.xlane.f32.xlu0 %v1099
    %v1130 = vpop.xlane.xlu0 %1129
    %1131 = vmin.xlane.f32.xlu0 %v1100
    %v1132 = vpop.xlane.xlu0 %1131
    %vm1133 = vcmp.eq.f32.partialorder %v1085, %v1102
    %vm1134 = vcmp.eq.f32.partialorder %v1086, %v1104
    %vm1135 = vcmp.eq.f32.partialorder %v1087, %v1106
    %vm1136 = vcmp.eq.f32.partialorder %v1088, %v1108
    %vm1137 = vcmp.eq.f32.partialorder %v1089, %v1110
    %vm1138 = vcmp.eq.f32.partialorder %v1090, %v1112
    %vm1139 = vcmp.eq.f32.partialorder %v1091, %v1114
    %vm1140 = vcmp.eq.f32.partialorder %v1092, %v1116
    %vm1141 = vcmp.eq.f32.partialorder %v1093, %v1118
    %vm1142 = vcmp.eq.f32.partialorder %v1094, %v1120
    %vm1143 = vcmp.eq.f32.partialorder %v1095, %v1122
    %vm1144 = vcmp.eq.f32.partialorder %v1096, %v1124
    %vm1145 = vcmp.eq.f32.partialorder %v1097, %v1126
    %vm1146 = vcmp.eq.f32.partialorder %v1098, %v1128
    %vm1147 = vcmp.eq.f32.partialorder %v1099, %v1130
    %vm1148 = vcmp.eq.f32.partialorder %v1100, %v1132
    %v1149 = vsel %vm1133, 1e+30, %v1085
    %v1150 = vsel %vm1134, 1e+30, %v1086
    %v1151 = vsel %vm1135, 1e+30, %v1087
    %v1152 = vsel %vm1136, 1e+30, %v1088
    %v1153 = vsel %vm1137, 1e+30, %v1089
    %v1154 = vsel %vm1138, 1e+30, %v1090
    %v1155 = vsel %vm1139, 1e+30, %v1091
    %v1156 = vsel %vm1140, 1e+30, %v1092
    %v1157 = vsel %vm1141, 1e+30, %v1093
    %v1158 = vsel %vm1142, 1e+30, %v1094
    %v1159 = vsel %vm1143, 1e+30, %v1095
    %v1160 = vsel %vm1144, 1e+30, %v1096
    %v1161 = vsel %vm1145, 1e+30, %v1097
    %v1162 = vsel %vm1146, 1e+30, %v1098
    %v1163 = vsel %vm1147, 1e+30, %v1099
    %v1164 = vsel %vm1148, 1e+30, %v1100
    %1165 = vmin.xlane.f32.xlu0 %v1149
    %v1166 = vpop.xlane.xlu0 %1165
    %1167 = vmin.xlane.f32.xlu0 %v1150
    %v1168 = vpop.xlane.xlu0 %1167
    %1169 = vmin.xlane.f32.xlu0 %v1151
    %v1170 = vpop.xlane.xlu0 %1169
    %1171 = vmin.xlane.f32.xlu0 %v1152
    %v1172 = vpop.xlane.xlu0 %1171
    %1173 = vmin.xlane.f32.xlu0 %v1153
    %v1174 = vpop.xlane.xlu0 %1173
    %1175 = vmin.xlane.f32.xlu0 %v1154
    %v1176 = vpop.xlane.xlu0 %1175
    %1177 = vmin.xlane.f32.xlu0 %v1155
    %v1178 = vpop.xlane.xlu0 %1177
    %1179 = vmin.xlane.f32.xlu0 %v1156
    %v1180 = vpop.xlane.xlu0 %1179
    %1181 = vmin.xlane.f32.xlu0 %v1157
    %v1182 = vpop.xlane.xlu0 %1181
    %1183 = vmin.xlane.f32.xlu0 %v1158
    %v1184 = vpop.xlane.xlu0 %1183
    %1185 = vmin.xlane.f32.xlu0 %v1159
    %v1186 = vpop.xlane.xlu0 %1185
    %1187 = vmin.xlane.f32.xlu0 %v1160
    %v1188 = vpop.xlane.xlu0 %1187
    %1189 = vmin.xlane.f32.xlu0 %v1161
    %v1190 = vpop.xlane.xlu0 %1189
    %1191 = vmin.xlane.f32.xlu0 %v1162
    %v1192 = vpop.xlane.xlu0 %1191
    %1193 = vmin.xlane.f32.xlu0 %v1163
    %v1194 = vpop.xlane.xlu0 %1193
    %1195 = vmin.xlane.f32.xlu0 %v1164
    %v1196 = vpop.xlane.xlu0 %1195
    %vm1197 = vcmp.eq.f32.partialorder %v1149, %v1166
    %vm1198 = vcmp.eq.f32.partialorder %v1150, %v1168
    %vm1199 = vcmp.eq.f32.partialorder %v1151, %v1170
    %vm1200 = vcmp.eq.f32.partialorder %v1152, %v1172
    %vm1201 = vcmp.eq.f32.partialorder %v1153, %v1174
    %vm1202 = vcmp.eq.f32.partialorder %v1154, %v1176
    %vm1203 = vcmp.eq.f32.partialorder %v1155, %v1178
    %vm1204 = vcmp.eq.f32.partialorder %v1156, %v1180
    %vm1205 = vcmp.eq.f32.partialorder %v1157, %v1182
    %vm1206 = vcmp.eq.f32.partialorder %v1158, %v1184
    %vm1207 = vcmp.eq.f32.partialorder %v1159, %v1186
    %vm1208 = vcmp.eq.f32.partialorder %v1160, %v1188
    %vm1209 = vcmp.eq.f32.partialorder %v1161, %v1190
    %vm1210 = vcmp.eq.f32.partialorder %v1162, %v1192
    %vm1211 = vcmp.eq.f32.partialorder %v1163, %v1194
    %vm1212 = vcmp.eq.f32.partialorder %v1164, %v1196
    %v1213 = vsel %vm1197, 1e+30, %v1149
    %v1214 = vsel %vm1198, 1e+30, %v1150
    %v1215 = vsel %vm1199, 1e+30, %v1151
    %v1216 = vsel %vm1200, 1e+30, %v1152
    %v1217 = vsel %vm1201, 1e+30, %v1153
    %v1218 = vsel %vm1202, 1e+30, %v1154
    %v1219 = vsel %vm1203, 1e+30, %v1155
    %v1220 = vsel %vm1204, 1e+30, %v1156
    %v1221 = vsel %vm1205, 1e+30, %v1157
    %v1222 = vsel %vm1206, 1e+30, %v1158
    %v1223 = vsel %vm1207, 1e+30, %v1159
    %v1224 = vsel %vm1208, 1e+30, %v1160
    %v1225 = vsel %vm1209, 1e+30, %v1161
    %v1226 = vsel %vm1210, 1e+30, %v1162
    %v1227 = vsel %vm1211, 1e+30, %v1163
    %v1228 = vsel %vm1212, 1e+30, %v1164
    %1229 = vmin.xlane.f32.xlu0 %v1213
    %v1230 = vpop.xlane.xlu0 %1229
    %1231 = vmin.xlane.f32.xlu0 %v1214
    %v1232 = vpop.xlane.xlu0 %1231
    %1233 = vmin.xlane.f32.xlu0 %v1215
    %v1234 = vpop.xlane.xlu0 %1233
    %1235 = vmin.xlane.f32.xlu0 %v1216
    %v1236 = vpop.xlane.xlu0 %1235
    %1237 = vmin.xlane.f32.xlu0 %v1217
    %v1238 = vpop.xlane.xlu0 %1237
    %1239 = vmin.xlane.f32.xlu0 %v1218
    %v1240 = vpop.xlane.xlu0 %1239
    %1241 = vmin.xlane.f32.xlu0 %v1219
    %v1242 = vpop.xlane.xlu0 %1241
    %1243 = vmin.xlane.f32.xlu0 %v1220
    %v1244 = vpop.xlane.xlu0 %1243
    %1245 = vmin.xlane.f32.xlu0 %v1221
    %v1246 = vpop.xlane.xlu0 %1245
    %1247 = vmin.xlane.f32.xlu0 %v1222
    %v1248 = vpop.xlane.xlu0 %1247
    %1249 = vmin.xlane.f32.xlu0 %v1223
    %v1250 = vpop.xlane.xlu0 %1249
    %1251 = vmin.xlane.f32.xlu0 %v1224
    %v1252 = vpop.xlane.xlu0 %1251
    %1253 = vmin.xlane.f32.xlu0 %v1225
    %v1254 = vpop.xlane.xlu0 %1253
    %1255 = vmin.xlane.f32.xlu0 %v1226
    %v1256 = vpop.xlane.xlu0 %1255
    %1257 = vmin.xlane.f32.xlu0 %v1227
    %v1258 = vpop.xlane.xlu0 %1257
    %1259 = vmin.xlane.f32.xlu0 %v1228
    %v1260 = vpop.xlane.xlu0 %1259
    %vm1261 = vcmp.eq.f32.partialorder %v1213, %v1230
    %vm1262 = vcmp.eq.f32.partialorder %v1214, %v1232
    %vm1263 = vcmp.eq.f32.partialorder %v1215, %v1234
    %vm1264 = vcmp.eq.f32.partialorder %v1216, %v1236
    %vm1265 = vcmp.eq.f32.partialorder %v1217, %v1238
    %vm1266 = vcmp.eq.f32.partialorder %v1218, %v1240
    %vm1267 = vcmp.eq.f32.partialorder %v1219, %v1242
    %vm1268 = vcmp.eq.f32.partialorder %v1220, %v1244
    %vm1269 = vcmp.eq.f32.partialorder %v1221, %v1246
    %vm1270 = vcmp.eq.f32.partialorder %v1222, %v1248
    %vm1271 = vcmp.eq.f32.partialorder %v1223, %v1250
    %vm1272 = vcmp.eq.f32.partialorder %v1224, %v1252
    %vm1273 = vcmp.eq.f32.partialorder %v1225, %v1254
    %vm1274 = vcmp.eq.f32.partialorder %v1226, %v1256
    %vm1275 = vcmp.eq.f32.partialorder %v1227, %v1258
    %vm1276 = vcmp.eq.f32.partialorder %v1228, %v1260
    %v1277 = vsel %vm1261, 1e+30, %v1213
    %v1278 = vsel %vm1262, 1e+30, %v1214
    %v1279 = vsel %vm1263, 1e+30, %v1215
    %v1280 = vsel %vm1264, 1e+30, %v1216
    %v1281 = vsel %vm1265, 1e+30, %v1217
    %v1282 = vsel %vm1266, 1e+30, %v1218
    %v1283 = vsel %vm1267, 1e+30, %v1219
    %v1284 = vsel %vm1268, 1e+30, %v1220
    %v1285 = vsel %vm1269, 1e+30, %v1221
    %v1286 = vsel %vm1270, 1e+30, %v1222
    %v1287 = vsel %vm1271, 1e+30, %v1223
    %v1288 = vsel %vm1272, 1e+30, %v1224
    %v1289 = vsel %vm1273, 1e+30, %v1225
    %v1290 = vsel %vm1274, 1e+30, %v1226
    %v1291 = vsel %vm1275, 1e+30, %v1227
    %v1292 = vsel %vm1276, 1e+30, %v1228
    %1293 = vmin.xlane.f32.xlu0 %v1277
    %v1294 = vpop.xlane.xlu0 %1293
    %1295 = vmin.xlane.f32.xlu0 %v1278
    %v1296 = vpop.xlane.xlu0 %1295
    %1297 = vmin.xlane.f32.xlu0 %v1279
    %v1298 = vpop.xlane.xlu0 %1297
    %1299 = vmin.xlane.f32.xlu0 %v1280
    %v1300 = vpop.xlane.xlu0 %1299
    %1301 = vmin.xlane.f32.xlu0 %v1281
    %v1302 = vpop.xlane.xlu0 %1301
    %1303 = vmin.xlane.f32.xlu0 %v1282
    %v1304 = vpop.xlane.xlu0 %1303
    %1305 = vmin.xlane.f32.xlu0 %v1283
    %v1306 = vpop.xlane.xlu0 %1305
    %1307 = vmin.xlane.f32.xlu0 %v1284
    %v1308 = vpop.xlane.xlu0 %1307
    %1309 = vmin.xlane.f32.xlu0 %v1285
    %v1310 = vpop.xlane.xlu0 %1309
    %1311 = vmin.xlane.f32.xlu0 %v1286
    %v1312 = vpop.xlane.xlu0 %1311
    %1313 = vmin.xlane.f32.xlu0 %v1287
    %v1314 = vpop.xlane.xlu0 %1313
    %1315 = vmin.xlane.f32.xlu0 %v1288
    %v1316 = vpop.xlane.xlu0 %1315
    %1317 = vmin.xlane.f32.xlu0 %v1289
    %v1318 = vpop.xlane.xlu0 %1317
    %1319 = vmin.xlane.f32.xlu0 %v1290
    %v1320 = vpop.xlane.xlu0 %1319
    %1321 = vmin.xlane.f32.xlu0 %v1291
    %v1322 = vpop.xlane.xlu0 %1321
    %1323 = vmin.xlane.f32.xlu0 %v1292
    %v1324 = vpop.xlane.xlu0 %1323
    %vm1325 = vcmp.eq.f32.partialorder %v1277, %v1294
    %vm1326 = vcmp.eq.f32.partialorder %v1278, %v1296
    %vm1327 = vcmp.eq.f32.partialorder %v1279, %v1298
    %vm1328 = vcmp.eq.f32.partialorder %v1280, %v1300
    %vm1329 = vcmp.eq.f32.partialorder %v1281, %v1302
    %vm1330 = vcmp.eq.f32.partialorder %v1282, %v1304
    %vm1331 = vcmp.eq.f32.partialorder %v1283, %v1306
    %vm1332 = vcmp.eq.f32.partialorder %v1284, %v1308
    %vm1333 = vcmp.eq.f32.partialorder %v1285, %v1310
    %vm1334 = vcmp.eq.f32.partialorder %v1286, %v1312
    %vm1335 = vcmp.eq.f32.partialorder %v1287, %v1314
    %vm1336 = vcmp.eq.f32.partialorder %v1288, %v1316
    %vm1337 = vcmp.eq.f32.partialorder %v1289, %v1318
    %vm1338 = vcmp.eq.f32.partialorder %v1290, %v1320
    %vm1339 = vcmp.eq.f32.partialorder %v1291, %v1322
    %vm1340 = vcmp.eq.f32.partialorder %v1292, %v1324
    %v1341 = vsel %vm1325, 1e+30, %v1277
    %v1342 = vsel %vm1326, 1e+30, %v1278
    %v1343 = vsel %vm1327, 1e+30, %v1279
    %v1344 = vsel %vm1328, 1e+30, %v1280
    %v1345 = vsel %vm1329, 1e+30, %v1281
    %v1346 = vsel %vm1330, 1e+30, %v1282
    %v1347 = vsel %vm1331, 1e+30, %v1283
    %v1348 = vsel %vm1332, 1e+30, %v1284
    %v1349 = vsel %vm1333, 1e+30, %v1285
    %v1350 = vsel %vm1334, 1e+30, %v1286
    %v1351 = vsel %vm1335, 1e+30, %v1287
    %v1352 = vsel %vm1336, 1e+30, %v1288
    %v1353 = vsel %vm1337, 1e+30, %v1289
    %v1354 = vsel %vm1338, 1e+30, %v1290
    %v1355 = vsel %vm1339, 1e+30, %v1291
    %v1356 = vsel %vm1340, 1e+30, %v1292
    %1357 = vmin.xlane.f32.xlu0 %v1341
    %v1358 = vpop.xlane.xlu0 %1357
    %1359 = vmin.xlane.f32.xlu0 %v1342
    %v1360 = vpop.xlane.xlu0 %1359
    %1361 = vmin.xlane.f32.xlu0 %v1343
    %v1362 = vpop.xlane.xlu0 %1361
    %1363 = vmin.xlane.f32.xlu0 %v1344
    %v1364 = vpop.xlane.xlu0 %1363
    %1365 = vmin.xlane.f32.xlu0 %v1345
    %v1366 = vpop.xlane.xlu0 %1365
    %1367 = vmin.xlane.f32.xlu0 %v1346
    %v1368 = vpop.xlane.xlu0 %1367
    %1369 = vmin.xlane.f32.xlu0 %v1347
    %v1370 = vpop.xlane.xlu0 %1369
    %1371 = vmin.xlane.f32.xlu0 %v1348
    %v1372 = vpop.xlane.xlu0 %1371
    %1373 = vmin.xlane.f32.xlu0 %v1349
    %v1374 = vpop.xlane.xlu0 %1373
    %1375 = vmin.xlane.f32.xlu0 %v1350
    %v1376 = vpop.xlane.xlu0 %1375
    %1377 = vmin.xlane.f32.xlu0 %v1351
    %v1378 = vpop.xlane.xlu0 %1377
    %1379 = vmin.xlane.f32.xlu0 %v1352
    %v1380 = vpop.xlane.xlu0 %1379
    %1381 = vmin.xlane.f32.xlu0 %v1353
    %v1382 = vpop.xlane.xlu0 %1381
    %1383 = vmin.xlane.f32.xlu0 %v1354
    %v1384 = vpop.xlane.xlu0 %1383
    %1385 = vmin.xlane.f32.xlu0 %v1355
    %v1386 = vpop.xlane.xlu0 %1385
    %1387 = vmin.xlane.f32.xlu0 %v1356
    %v1388 = vpop.xlane.xlu0 %1387
    %vm1389 = vcmp.eq.f32.partialorder %v1341, %v1358
    %vm1390 = vcmp.eq.f32.partialorder %v1342, %v1360
    %vm1391 = vcmp.eq.f32.partialorder %v1343, %v1362
    %vm1392 = vcmp.eq.f32.partialorder %v1344, %v1364
    %vm1393 = vcmp.eq.f32.partialorder %v1345, %v1366
    %vm1394 = vcmp.eq.f32.partialorder %v1346, %v1368
    %vm1395 = vcmp.eq.f32.partialorder %v1347, %v1370
    %vm1396 = vcmp.eq.f32.partialorder %v1348, %v1372
    %vm1397 = vcmp.eq.f32.partialorder %v1349, %v1374
    %vm1398 = vcmp.eq.f32.partialorder %v1350, %v1376
    %vm1399 = vcmp.eq.f32.partialorder %v1351, %v1378
    %vm1400 = vcmp.eq.f32.partialorder %v1352, %v1380
    %vm1401 = vcmp.eq.f32.partialorder %v1353, %v1382
    %vm1402 = vcmp.eq.f32.partialorder %v1354, %v1384
    %vm1403 = vcmp.eq.f32.partialorder %v1355, %v1386
    %vm1404 = vcmp.eq.f32.partialorder %v1356, %v1388
    %v1405 = vsel %vm1389, 1e+30, %v1341
    %v1406 = vsel %vm1390, 1e+30, %v1342
    %v1407 = vsel %vm1391, 1e+30, %v1343
    %v1408 = vsel %vm1392, 1e+30, %v1344
    %v1409 = vsel %vm1393, 1e+30, %v1345
    %v1410 = vsel %vm1394, 1e+30, %v1346
    %v1411 = vsel %vm1395, 1e+30, %v1347
    %v1412 = vsel %vm1396, 1e+30, %v1348
    %v1413 = vsel %vm1397, 1e+30, %v1349
    %v1414 = vsel %vm1398, 1e+30, %v1350
    %v1415 = vsel %vm1399, 1e+30, %v1351
    %v1416 = vsel %vm1400, 1e+30, %v1352
    %v1417 = vsel %vm1401, 1e+30, %v1353
    %v1418 = vsel %vm1402, 1e+30, %v1354
    %v1419 = vsel %vm1403, 1e+30, %v1355
    %v1420 = vsel %vm1404, 1e+30, %v1356
    %1421 = vmin.xlane.f32.xlu0 %v1405
    %v1422 = vpop.xlane.xlu0 %1421
    %1423 = vmin.xlane.f32.xlu0 %v1406
    %v1424 = vpop.xlane.xlu0 %1423
    %1425 = vmin.xlane.f32.xlu0 %v1407
    %v1426 = vpop.xlane.xlu0 %1425
    %1427 = vmin.xlane.f32.xlu0 %v1408
    %v1428 = vpop.xlane.xlu0 %1427
    %1429 = vmin.xlane.f32.xlu0 %v1409
    %v1430 = vpop.xlane.xlu0 %1429
    %1431 = vmin.xlane.f32.xlu0 %v1410
    %v1432 = vpop.xlane.xlu0 %1431
    %1433 = vmin.xlane.f32.xlu0 %v1411
    %v1434 = vpop.xlane.xlu0 %1433
    %1435 = vmin.xlane.f32.xlu0 %v1412
    %v1436 = vpop.xlane.xlu0 %1435
    %1437 = vmin.xlane.f32.xlu0 %v1413
    %v1438 = vpop.xlane.xlu0 %1437
    %1439 = vmin.xlane.f32.xlu0 %v1414
    %v1440 = vpop.xlane.xlu0 %1439
    %1441 = vmin.xlane.f32.xlu0 %v1415
    %v1442 = vpop.xlane.xlu0 %1441
    %1443 = vmin.xlane.f32.xlu0 %v1416
    %v1444 = vpop.xlane.xlu0 %1443
    %1445 = vmin.xlane.f32.xlu0 %v1417
    %v1446 = vpop.xlane.xlu0 %1445
    %1447 = vmin.xlane.f32.xlu0 %v1418
    %v1448 = vpop.xlane.xlu0 %1447
    %1449 = vmin.xlane.f32.xlu0 %v1419
    %v1450 = vpop.xlane.xlu0 %1449
    %1451 = vmin.xlane.f32.xlu0 %v1420
    %v1452 = vpop.xlane.xlu0 %1451
    %vm1453 = vcmp.eq.f32.partialorder %v1405, %v1422
    %vm1454 = vcmp.eq.f32.partialorder %v1406, %v1424
    %vm1455 = vcmp.eq.f32.partialorder %v1407, %v1426
    %vm1456 = vcmp.eq.f32.partialorder %v1408, %v1428
    %vm1457 = vcmp.eq.f32.partialorder %v1409, %v1430
    %vm1458 = vcmp.eq.f32.partialorder %v1410, %v1432
    %vm1459 = vcmp.eq.f32.partialorder %v1411, %v1434
    %vm1460 = vcmp.eq.f32.partialorder %v1412, %v1436
    %vm1461 = vcmp.eq.f32.partialorder %v1413, %v1438
    %vm1462 = vcmp.eq.f32.partialorder %v1414, %v1440
    %vm1463 = vcmp.eq.f32.partialorder %v1415, %v1442
    %vm1464 = vcmp.eq.f32.partialorder %v1416, %v1444
    %vm1465 = vcmp.eq.f32.partialorder %v1417, %v1446
    %vm1466 = vcmp.eq.f32.partialorder %v1418, %v1448
    %vm1467 = vcmp.eq.f32.partialorder %v1419, %v1450
    %vm1468 = vcmp.eq.f32.partialorder %v1420, %v1452
    %v1469 = vsel %vm1453, 1e+30, %v1405
    %v1470 = vsel %vm1454, 1e+30, %v1406
    %v1471 = vsel %vm1455, 1e+30, %v1407
    %v1472 = vsel %vm1456, 1e+30, %v1408
    %v1473 = vsel %vm1457, 1e+30, %v1409
    %v1474 = vsel %vm1458, 1e+30, %v1410
    %v1475 = vsel %vm1459, 1e+30, %v1411
    %v1476 = vsel %vm1460, 1e+30, %v1412
    %v1477 = vsel %vm1461, 1e+30, %v1413
    %v1478 = vsel %vm1462, 1e+30, %v1414
    %v1479 = vsel %vm1463, 1e+30, %v1415
    %v1480 = vsel %vm1464, 1e+30, %v1416
    %v1481 = vsel %vm1465, 1e+30, %v1417
    %v1482 = vsel %vm1466, 1e+30, %v1418
    %v1483 = vsel %vm1467, 1e+30, %v1419
    %v1484 = vsel %vm1468, 1e+30, %v1420
    %1485 = vmin.xlane.f32.xlu0 %v1469
    %v1486 = vpop.xlane.xlu0 %1485
    %1487 = vmin.xlane.f32.xlu0 %v1470
    %v1488 = vpop.xlane.xlu0 %1487
    %1489 = vmin.xlane.f32.xlu0 %v1471
    %v1490 = vpop.xlane.xlu0 %1489
    %1491 = vmin.xlane.f32.xlu0 %v1472
    %v1492 = vpop.xlane.xlu0 %1491
    %1493 = vmin.xlane.f32.xlu0 %v1473
    %v1494 = vpop.xlane.xlu0 %1493
    %1495 = vmin.xlane.f32.xlu0 %v1474
    %v1496 = vpop.xlane.xlu0 %1495
    %1497 = vmin.xlane.f32.xlu0 %v1475
    %v1498 = vpop.xlane.xlu0 %1497
    %1499 = vmin.xlane.f32.xlu0 %v1476
    %v1500 = vpop.xlane.xlu0 %1499
    %1501 = vmin.xlane.f32.xlu0 %v1477
    %v1502 = vpop.xlane.xlu0 %1501
    %1503 = vmin.xlane.f32.xlu0 %v1478
    %v1504 = vpop.xlane.xlu0 %1503
    %1505 = vmin.xlane.f32.xlu0 %v1479
    %v1506 = vpop.xlane.xlu0 %1505
    %1507 = vmin.xlane.f32.xlu0 %v1480
    %v1508 = vpop.xlane.xlu0 %1507
    %1509 = vmin.xlane.f32.xlu0 %v1481
    %v1510 = vpop.xlane.xlu0 %1509
    %1511 = vmin.xlane.f32.xlu0 %v1482
    %v1512 = vpop.xlane.xlu0 %1511
    %1513 = vmin.xlane.f32.xlu0 %v1483
    %v1514 = vpop.xlane.xlu0 %1513
    %1515 = vmin.xlane.f32.xlu0 %v1484
    %v1516 = vpop.xlane.xlu0 %1515
    %vm1517 = vcmp.eq.f32.partialorder %v1469, %v1486
    %vm1518 = vcmp.eq.f32.partialorder %v1470, %v1488
    %vm1519 = vcmp.eq.f32.partialorder %v1471, %v1490
    %vm1520 = vcmp.eq.f32.partialorder %v1472, %v1492
    %vm1521 = vcmp.eq.f32.partialorder %v1473, %v1494
    %vm1522 = vcmp.eq.f32.partialorder %v1474, %v1496
    %vm1523 = vcmp.eq.f32.partialorder %v1475, %v1498
    %vm1524 = vcmp.eq.f32.partialorder %v1476, %v1500
    %vm1525 = vcmp.eq.f32.partialorder %v1477, %v1502
    %vm1526 = vcmp.eq.f32.partialorder %v1478, %v1504
    %vm1527 = vcmp.eq.f32.partialorder %v1479, %v1506
    %vm1528 = vcmp.eq.f32.partialorder %v1480, %v1508
    %vm1529 = vcmp.eq.f32.partialorder %v1481, %v1510
    %vm1530 = vcmp.eq.f32.partialorder %v1482, %v1512
    %vm1531 = vcmp.eq.f32.partialorder %v1483, %v1514
    %vm1532 = vcmp.eq.f32.partialorder %v1484, %v1516
    %v1533 = vsel %vm1517, 1e+30, %v1469
    %v1534 = vsel %vm1518, 1e+30, %v1470
    %v1535 = vsel %vm1519, 1e+30, %v1471
    %v1536 = vsel %vm1520, 1e+30, %v1472
    %v1537 = vsel %vm1521, 1e+30, %v1473
    %v1538 = vsel %vm1522, 1e+30, %v1474
    %v1539 = vsel %vm1523, 1e+30, %v1475
    %v1540 = vsel %vm1524, 1e+30, %v1476
    %v1541 = vsel %vm1525, 1e+30, %v1477
    %v1542 = vsel %vm1526, 1e+30, %v1478
    %v1543 = vsel %vm1527, 1e+30, %v1479
    %v1544 = vsel %vm1528, 1e+30, %v1480
    %v1545 = vsel %vm1529, 1e+30, %v1481
    %v1546 = vsel %vm1530, 1e+30, %v1482
    %v1547 = vsel %vm1531, 1e+30, %v1483
    %v1548 = vsel %vm1532, 1e+30, %v1484
    %1549 = vmin.xlane.f32.xlu0 %v1533
    %v1550 = vpop.xlane.xlu0 %1549
    %1551 = vmin.xlane.f32.xlu0 %v1534
    %v1552 = vpop.xlane.xlu0 %1551
    %1553 = vmin.xlane.f32.xlu0 %v1535
    %v1554 = vpop.xlane.xlu0 %1553
    %1555 = vmin.xlane.f32.xlu0 %v1536
    %v1556 = vpop.xlane.xlu0 %1555
    %1557 = vmin.xlane.f32.xlu0 %v1537
    %v1558 = vpop.xlane.xlu0 %1557
    %1559 = vmin.xlane.f32.xlu0 %v1538
    %v1560 = vpop.xlane.xlu0 %1559
    %1561 = vmin.xlane.f32.xlu0 %v1539
    %v1562 = vpop.xlane.xlu0 %1561
    %1563 = vmin.xlane.f32.xlu0 %v1540
    %v1564 = vpop.xlane.xlu0 %1563
    %1565 = vmin.xlane.f32.xlu0 %v1541
    %v1566 = vpop.xlane.xlu0 %1565
    %1567 = vmin.xlane.f32.xlu0 %v1542
    %v1568 = vpop.xlane.xlu0 %1567
    %1569 = vmin.xlane.f32.xlu0 %v1543
    %v1570 = vpop.xlane.xlu0 %1569
    %1571 = vmin.xlane.f32.xlu0 %v1544
    %v1572 = vpop.xlane.xlu0 %1571
    %1573 = vmin.xlane.f32.xlu0 %v1545
    %v1574 = vpop.xlane.xlu0 %1573
    %1575 = vmin.xlane.f32.xlu0 %v1546
    %v1576 = vpop.xlane.xlu0 %1575
    %1577 = vmin.xlane.f32.xlu0 %v1547
    %v1578 = vpop.xlane.xlu0 %1577
    %1579 = vmin.xlane.f32.xlu0 %v1548
    %v1580 = vpop.xlane.xlu0 %1579
    %vm1581 = vcmp.eq.f32.partialorder %v1533, %v1550
    %vm1582 = vcmp.eq.f32.partialorder %v1534, %v1552
    %vm1583 = vcmp.eq.f32.partialorder %v1535, %v1554
    %vm1584 = vcmp.eq.f32.partialorder %v1536, %v1556
    %vm1585 = vcmp.eq.f32.partialorder %v1537, %v1558
    %vm1586 = vcmp.eq.f32.partialorder %v1538, %v1560
    %vm1587 = vcmp.eq.f32.partialorder %v1539, %v1562
    %vm1588 = vcmp.eq.f32.partialorder %v1540, %v1564
    %vm1589 = vcmp.eq.f32.partialorder %v1541, %v1566
    %vm1590 = vcmp.eq.f32.partialorder %v1542, %v1568
    %vm1591 = vcmp.eq.f32.partialorder %v1543, %v1570
    %vm1592 = vcmp.eq.f32.partialorder %v1544, %v1572
    %vm1593 = vcmp.eq.f32.partialorder %v1545, %v1574
    %vm1594 = vcmp.eq.f32.partialorder %v1546, %v1576
    %vm1595 = vcmp.eq.f32.partialorder %v1547, %v1578
    %vm1596 = vcmp.eq.f32.partialorder %v1548, %v1580
    %v1597 = vsel %vm1581, 1e+30, %v1533
    %v1598 = vsel %vm1582, 1e+30, %v1534
    %v1599 = vsel %vm1583, 1e+30, %v1535
    %v1600 = vsel %vm1584, 1e+30, %v1536
    %v1601 = vsel %vm1585, 1e+30, %v1537
    %v1602 = vsel %vm1586, 1e+30, %v1538
    %v1603 = vsel %vm1587, 1e+30, %v1539
    %v1604 = vsel %vm1588, 1e+30, %v1540
    %v1605 = vsel %vm1589, 1e+30, %v1541
    %v1606 = vsel %vm1590, 1e+30, %v1542
    %v1607 = vsel %vm1591, 1e+30, %v1543
    %v1608 = vsel %vm1592, 1e+30, %v1544
    %v1609 = vsel %vm1593, 1e+30, %v1545
    %v1610 = vsel %vm1594, 1e+30, %v1546
    %v1611 = vsel %vm1595, 1e+30, %v1547
    %v1612 = vsel %vm1596, 1e+30, %v1548
    %1613 = vmin.xlane.f32.xlu0 %v1597
    %v1614 = vpop.xlane.xlu0 %1613
    %1615 = vmin.xlane.f32.xlu0 %v1598
    %v1616 = vpop.xlane.xlu0 %1615
    %1617 = vmin.xlane.f32.xlu0 %v1599
    %v1618 = vpop.xlane.xlu0 %1617
    %1619 = vmin.xlane.f32.xlu0 %v1600
    %v1620 = vpop.xlane.xlu0 %1619
    %1621 = vmin.xlane.f32.xlu0 %v1601
    %v1622 = vpop.xlane.xlu0 %1621
    %1623 = vmin.xlane.f32.xlu0 %v1602
    %v1624 = vpop.xlane.xlu0 %1623
    %1625 = vmin.xlane.f32.xlu0 %v1603
    %v1626 = vpop.xlane.xlu0 %1625
    %1627 = vmin.xlane.f32.xlu0 %v1604
    %v1628 = vpop.xlane.xlu0 %1627
    %1629 = vmin.xlane.f32.xlu0 %v1605
    %v1630 = vpop.xlane.xlu0 %1629
    %1631 = vmin.xlane.f32.xlu0 %v1606
    %v1632 = vpop.xlane.xlu0 %1631
    %1633 = vmin.xlane.f32.xlu0 %v1607
    %v1634 = vpop.xlane.xlu0 %1633
    %1635 = vmin.xlane.f32.xlu0 %v1608
    %v1636 = vpop.xlane.xlu0 %1635
    %1637 = vmin.xlane.f32.xlu0 %v1609
    %v1638 = vpop.xlane.xlu0 %1637
    %1639 = vmin.xlane.f32.xlu0 %v1610
    %v1640 = vpop.xlane.xlu0 %1639
    %1641 = vmin.xlane.f32.xlu0 %v1611
    %v1642 = vpop.xlane.xlu0 %1641
    %1643 = vmin.xlane.f32.xlu0 %v1612
    %v1644 = vpop.xlane.xlu0 %1643
    %vm1645 = vcmp.eq.f32.partialorder %v1597, %v1614
    %vm1646 = vcmp.eq.f32.partialorder %v1598, %v1616
    %vm1647 = vcmp.eq.f32.partialorder %v1599, %v1618
    %vm1648 = vcmp.eq.f32.partialorder %v1600, %v1620
    %vm1649 = vcmp.eq.f32.partialorder %v1601, %v1622
    %vm1650 = vcmp.eq.f32.partialorder %v1602, %v1624
    %vm1651 = vcmp.eq.f32.partialorder %v1603, %v1626
    %vm1652 = vcmp.eq.f32.partialorder %v1604, %v1628
    %vm1653 = vcmp.eq.f32.partialorder %v1605, %v1630
    %vm1654 = vcmp.eq.f32.partialorder %v1606, %v1632
    %vm1655 = vcmp.eq.f32.partialorder %v1607, %v1634
    %vm1656 = vcmp.eq.f32.partialorder %v1608, %v1636
    %vm1657 = vcmp.eq.f32.partialorder %v1609, %v1638
    %vm1658 = vcmp.eq.f32.partialorder %v1610, %v1640
    %vm1659 = vcmp.eq.f32.partialorder %v1611, %v1642
    %vm1660 = vcmp.eq.f32.partialorder %v1612, %v1644
    %v1661 = vsel %vm1645, 1e+30, %v1597
    %v1662 = vsel %vm1646, 1e+30, %v1598
    %v1663 = vsel %vm1647, 1e+30, %v1599
    %v1664 = vsel %vm1648, 1e+30, %v1600
    %v1665 = vsel %vm1649, 1e+30, %v1601
    %v1666 = vsel %vm1650, 1e+30, %v1602
    %v1667 = vsel %vm1651, 1e+30, %v1603
    %v1668 = vsel %vm1652, 1e+30, %v1604
    %v1669 = vsel %vm1653, 1e+30, %v1605
    %v1670 = vsel %vm1654, 1e+30, %v1606
    %v1671 = vsel %vm1655, 1e+30, %v1607
    %v1672 = vsel %vm1656, 1e+30, %v1608
    %v1673 = vsel %vm1657, 1e+30, %v1609
    %v1674 = vsel %vm1658, 1e+30, %v1610
    %v1675 = vsel %vm1659, 1e+30, %v1611
    %v1676 = vsel %vm1660, 1e+30, %v1612
    %1677 = vmin.xlane.f32.xlu0 %v1661
    %v1678 = vpop.xlane.xlu0 %1677
    %1679 = vmin.xlane.f32.xlu0 %v1662
    %v1680 = vpop.xlane.xlu0 %1679
    %1681 = vmin.xlane.f32.xlu0 %v1663
    %v1682 = vpop.xlane.xlu0 %1681
    %1683 = vmin.xlane.f32.xlu0 %v1664
    %v1684 = vpop.xlane.xlu0 %1683
    %1685 = vmin.xlane.f32.xlu0 %v1665
    %v1686 = vpop.xlane.xlu0 %1685
    %1687 = vmin.xlane.f32.xlu0 %v1666
    %v1688 = vpop.xlane.xlu0 %1687
    %1689 = vmin.xlane.f32.xlu0 %v1667
    %v1690 = vpop.xlane.xlu0 %1689
    %1691 = vmin.xlane.f32.xlu0 %v1668
    %v1692 = vpop.xlane.xlu0 %1691
    %1693 = vmin.xlane.f32.xlu0 %v1669
    %v1694 = vpop.xlane.xlu0 %1693
    %1695 = vmin.xlane.f32.xlu0 %v1670
    %v1696 = vpop.xlane.xlu0 %1695
    %1697 = vmin.xlane.f32.xlu0 %v1671
    %v1698 = vpop.xlane.xlu0 %1697
    %1699 = vmin.xlane.f32.xlu0 %v1672
    %v1700 = vpop.xlane.xlu0 %1699
    %1701 = vmin.xlane.f32.xlu0 %v1673
    %v1702 = vpop.xlane.xlu0 %1701
    %1703 = vmin.xlane.f32.xlu0 %v1674
    %v1704 = vpop.xlane.xlu0 %1703
    %1705 = vmin.xlane.f32.xlu0 %v1675
    %v1706 = vpop.xlane.xlu0 %1705
    %1707 = vmin.xlane.f32.xlu0 %v1676
    %v1708 = vpop.xlane.xlu0 %1707
    %vm1709 = vcmp.lt.f32.partialorder %v419, %v1678
    %vm1710 = vcmp.lt.f32.partialorder %v420, %v1680
    %vm1711 = vcmp.lt.f32.partialorder %v421, %v1682
    %vm1712 = vcmp.lt.f32.partialorder %v422, %v1684
    %vm1713 = vcmp.lt.f32.partialorder %v423, %v1686
    %vm1714 = vcmp.lt.f32.partialorder %v424, %v1688
    %vm1715 = vcmp.lt.f32.partialorder %v425, %v1690
    %vm1716 = vcmp.lt.f32.partialorder %v426, %v1692
    %vm1717 = vcmp.lt.f32.partialorder %v427, %v1694
    %vm1718 = vcmp.lt.f32.partialorder %v428, %v1696
    %vm1719 = vcmp.lt.f32.partialorder %v429, %v1698
    %vm1720 = vcmp.lt.f32.partialorder %v430, %v1700
    %vm1721 = vcmp.lt.f32.partialorder %v431, %v1702
    %vm1722 = vcmp.lt.f32.partialorder %v432, %v1704
    %vm1723 = vcmp.lt.f32.partialorder %v433, %v1706
    %vm1724 = vcmp.lt.f32.partialorder %v434, %v1708
    %vm1725 = vmand %vm605, %vm1709
    %vm1726 = vmand %vm606, %vm1710
    %vm1727 = vmand %vm607, %vm1711
    %vm1728 = vmand %vm608, %vm1712
    %vm1729 = vmand %vm609, %vm1713
    %vm1730 = vmand %vm610, %vm1714
    %vm1731 = vmand %vm611, %vm1715
    %vm1732 = vmand %vm612, %vm1716
    %vm1733 = vmand %vm613, %vm1717
    %vm1734 = vmand %vm614, %vm1718
    %vm1735 = vmand %vm615, %vm1719
    %vm1736 = vmand %vm616, %vm1720
    %vm1737 = vmand %vm617, %vm1721
    %vm1738 = vmand %vm618, %vm1722
    %vm1739 = vmand %vm619, %vm1723
    %vm1740 = vmand %vm620, %vm1724
    %vm1741 = vmand %vm621, %vm1709
    %vm1742 = vmand %vm622, %vm1710
    %vm1743 = vmand %vm623, %vm1711
    %vm1744 = vmand %vm624, %vm1712
    %vm1745 = vmand %vm625, %vm1713
    %vm1746 = vmand %vm626, %vm1714
    %vm1747 = vmand %vm627, %vm1715
    %vm1748 = vmand %vm628, %vm1716
    %vm1749 = vmand %vm629, %vm1717
    %vm1750 = vmand %vm630, %vm1718
    %vm1751 = vmand %vm631, %vm1719
    %vm1752 = vmand %vm632, %vm1720
    %vm1753 = vmand %vm633, %vm1721
    %vm1754 = vmand %vm634, %vm1722
    %vm1755 = vmand %vm635, %vm1723
    %vm1756 = vmand %vm636, %vm1724
    %v1757 = vsel %vm1725, 1.0, 0.0
    %v1758 = vsel %vm1726, 1.0, 0.0
    %v1759 = vsel %vm1727, 1.0, 0.0
    %v1760 = vsel %vm1728, 1.0, 0.0
    %v1761 = vsel %vm1729, 1.0, 0.0
    %v1762 = vsel %vm1730, 1.0, 0.0
    %v1763 = vsel %vm1731, 1.0, 0.0
    %v1764 = vsel %vm1732, 1.0, 0.0
    %v1765 = vsel %vm1733, 1.0, 0.0
    %v1766 = vsel %vm1734, 1.0, 0.0
    %v1767 = vsel %vm1735, 1.0, 0.0
    %v1768 = vsel %vm1736, 1.0, 0.0
    %v1769 = vsel %vm1737, 1.0, 0.0
    %v1770 = vsel %vm1738, 1.0, 0.0
    %v1771 = vsel %vm1739, 1.0, 0.0
    %v1772 = vsel %vm1740, 1.0, 0.0
    %1773 = vadd.xlane.f32.xlu0 %v1757
    %v1774 = vpop.xlane.xlu0 %1773
    %1775 = vadd.xlane.f32.xlu0 %v1758
    %v1776 = vpop.xlane.xlu0 %1775
    %1777 = vadd.xlane.f32.xlu0 %v1759
    %v1778 = vpop.xlane.xlu0 %1777
    %1779 = vadd.xlane.f32.xlu0 %v1760
    %v1780 = vpop.xlane.xlu0 %1779
    %1781 = vadd.xlane.f32.xlu0 %v1761
    %v1782 = vpop.xlane.xlu0 %1781
    %1783 = vadd.xlane.f32.xlu0 %v1762
    %v1784 = vpop.xlane.xlu0 %1783
    %1785 = vadd.xlane.f32.xlu0 %v1763
    %v1786 = vpop.xlane.xlu0 %1785
    %1787 = vadd.xlane.f32.xlu0 %v1764
    %v1788 = vpop.xlane.xlu0 %1787
    %1789 = vadd.xlane.f32.xlu0 %v1765
    %v1790 = vpop.xlane.xlu0 %1789
    %1791 = vadd.xlane.f32.xlu0 %v1766
    %v1792 = vpop.xlane.xlu0 %1791
    %1793 = vadd.xlane.f32.xlu0 %v1767
    %v1794 = vpop.xlane.xlu0 %1793
    %1795 = vadd.xlane.f32.xlu0 %v1768
    %v1796 = vpop.xlane.xlu0 %1795
    %1797 = vadd.xlane.f32.xlu0 %v1769
    %v1798 = vpop.xlane.xlu0 %1797
    %1799 = vadd.xlane.f32.xlu0 %v1770
    %v1800 = vpop.xlane.xlu0 %1799
    %1801 = vadd.xlane.f32.xlu0 %v1771
    %v1802 = vpop.xlane.xlu0 %1801
    %1803 = vadd.xlane.f32.xlu0 %v1772
    %v1804 = vpop.xlane.xlu0 %1803
    %v1805 = vsel %vm1741, 1.0, 0.0
    %v1806 = vsel %vm1742, 1.0, 0.0
    %v1807 = vsel %vm1743, 1.0, 0.0
    %v1808 = vsel %vm1744, 1.0, 0.0
    %v1809 = vsel %vm1745, 1.0, 0.0
    %v1810 = vsel %vm1746, 1.0, 0.0
    %v1811 = vsel %vm1747, 1.0, 0.0
    %v1812 = vsel %vm1748, 1.0, 0.0
    %v1813 = vsel %vm1749, 1.0, 0.0
    %v1814 = vsel %vm1750, 1.0, 0.0
    %v1815 = vsel %vm1751, 1.0, 0.0
    %v1816 = vsel %vm1752, 1.0, 0.0
    %v1817 = vsel %vm1753, 1.0, 0.0
    %v1818 = vsel %vm1754, 1.0, 0.0
    %v1819 = vsel %vm1755, 1.0, 0.0
    %v1820 = vsel %vm1756, 1.0, 0.0
    %1821 = vadd.xlane.f32.xlu0 %v1805
    %v1822 = vpop.xlane.xlu0 %1821
    %1823 = vadd.xlane.f32.xlu0 %v1806
    %v1824 = vpop.xlane.xlu0 %1823
    %1825 = vadd.xlane.f32.xlu0 %v1807
    %v1826 = vpop.xlane.xlu0 %1825
    %1827 = vadd.xlane.f32.xlu0 %v1808
    %v1828 = vpop.xlane.xlu0 %1827
    %1829 = vadd.xlane.f32.xlu0 %v1809
    %v1830 = vpop.xlane.xlu0 %1829
    %1831 = vadd.xlane.f32.xlu0 %v1810
    %v1832 = vpop.xlane.xlu0 %1831
    %1833 = vadd.xlane.f32.xlu0 %v1811
    %v1834 = vpop.xlane.xlu0 %1833
    %1835 = vadd.xlane.f32.xlu0 %v1812
    %v1836 = vpop.xlane.xlu0 %1835
    %1837 = vadd.xlane.f32.xlu0 %v1813
    %v1838 = vpop.xlane.xlu0 %1837
    %1839 = vadd.xlane.f32.xlu0 %v1814
    %v1840 = vpop.xlane.xlu0 %1839
    %1841 = vadd.xlane.f32.xlu0 %v1815
    %v1842 = vpop.xlane.xlu0 %1841
    %1843 = vadd.xlane.f32.xlu0 %v1816
    %v1844 = vpop.xlane.xlu0 %1843
    %1845 = vadd.xlane.f32.xlu0 %v1817
    %v1846 = vpop.xlane.xlu0 %1845
    %1847 = vadd.xlane.f32.xlu0 %v1818
    %v1848 = vpop.xlane.xlu0 %1847
    %1849 = vadd.xlane.f32.xlu0 %v1819
    %v1850 = vpop.xlane.xlu0 %1849
    %1851 = vadd.xlane.f32.xlu0 %v1820
    %v1852 = vpop.xlane.xlu0 %1851
    %v1853 = vrsqrt.pop %v419
    %v1854 = vmul.f32 %v419, %v1853
    %vm1855 = vcmp.eq.f32.partialorder %v419, inf
    %v1856 = vsel %vm1855, %v419, %v1854
    %vm1857 = vcmp.eq.f32.partialorder %v419, 0.0
    %v1858 = vand.u32 %v419, 2147483648
    %v1859 = vsel %vm1857, %v1858, %v1856
    %v1860 = vrsqrt.pop %v420
    %v1861 = vmul.f32 %v420, %v1860
    %vm1862 = vcmp.eq.f32.partialorder %v420, inf
    %v1863 = vsel %vm1862, %v420, %v1861
    %vm1864 = vcmp.eq.f32.partialorder %v420, 0.0
    %v1865 = vand.u32 %v420, 2147483648
    %v1866 = vsel %vm1864, %v1865, %v1863
    %v1867 = vrsqrt.pop %v421
    %v1868 = vmul.f32 %v421, %v1867
    %vm1869 = vcmp.eq.f32.partialorder %v421, inf
    %v1870 = vsel %vm1869, %v421, %v1868
    %vm1871 = vcmp.eq.f32.partialorder %v421, 0.0
    %v1872 = vand.u32 %v421, 2147483648
    %v1873 = vsel %vm1871, %v1872, %v1870
    %v1874 = vrsqrt.pop %v422
    %v1875 = vmul.f32 %v422, %v1874
    %vm1876 = vcmp.eq.f32.partialorder %v422, inf
    %v1877 = vsel %vm1876, %v422, %v1875
    %vm1878 = vcmp.eq.f32.partialorder %v422, 0.0
    %v1879 = vand.u32 %v422, 2147483648
    %v1880 = vsel %vm1878, %v1879, %v1877
    %v1881 = vrsqrt.pop %v423
    %v1882 = vmul.f32 %v423, %v1881
    %vm1883 = vcmp.eq.f32.partialorder %v423, inf
    %v1884 = vsel %vm1883, %v423, %v1882
    %vm1885 = vcmp.eq.f32.partialorder %v423, 0.0
    %v1886 = vand.u32 %v423, 2147483648
    %v1887 = vsel %vm1885, %v1886, %v1884
    %v1888 = vrsqrt.pop %v424
    %v1889 = vmul.f32 %v424, %v1888
    %vm1890 = vcmp.eq.f32.partialorder %v424, inf
    %v1891 = vsel %vm1890, %v424, %v1889
    %vm1892 = vcmp.eq.f32.partialorder %v424, 0.0
    %v1893 = vand.u32 %v424, 2147483648
    %v1894 = vsel %vm1892, %v1893, %v1891
    %v1895 = vrsqrt.pop %v425
    %v1896 = vmul.f32 %v425, %v1895
    %vm1897 = vcmp.eq.f32.partialorder %v425, inf
    %v1898 = vsel %vm1897, %v425, %v1896
    %vm1899 = vcmp.eq.f32.partialorder %v425, 0.0
    %v1900 = vand.u32 %v425, 2147483648
    %v1901 = vsel %vm1899, %v1900, %v1898
    %v1902 = vrsqrt.pop %v426
    %v1903 = vmul.f32 %v426, %v1902
    %vm1904 = vcmp.eq.f32.partialorder %v426, inf
    %v1905 = vsel %vm1904, %v426, %v1903
    %vm1906 = vcmp.eq.f32.partialorder %v426, 0.0
    %v1907 = vand.u32 %v426, 2147483648
    %v1908 = vsel %vm1906, %v1907, %v1905
    %v1909 = vrsqrt.pop %v427
    %v1910 = vmul.f32 %v427, %v1909
    %vm1911 = vcmp.eq.f32.partialorder %v427, inf
    %v1912 = vsel %vm1911, %v427, %v1910
    %vm1913 = vcmp.eq.f32.partialorder %v427, 0.0
    %v1914 = vand.u32 %v427, 2147483648
    %v1915 = vsel %vm1913, %v1914, %v1912
    %v1916 = vrsqrt.pop %v428
    %v1917 = vmul.f32 %v428, %v1916
    %vm1918 = vcmp.eq.f32.partialorder %v428, inf
    %v1919 = vsel %vm1918, %v428, %v1917
    %vm1920 = vcmp.eq.f32.partialorder %v428, 0.0
    %v1921 = vand.u32 %v428, 2147483648
    %v1922 = vsel %vm1920, %v1921, %v1919
    %v1923 = vrsqrt.pop %v429
    %v1924 = vmul.f32 %v429, %v1923
    %vm1925 = vcmp.eq.f32.partialorder %v429, inf
    %v1926 = vsel %vm1925, %v429, %v1924
    %vm1927 = vcmp.eq.f32.partialorder %v429, 0.0
    %v1928 = vand.u32 %v429, 2147483648
    %v1929 = vsel %vm1927, %v1928, %v1926
    %v1930 = vrsqrt.pop %v430
    %v1931 = vmul.f32 %v430, %v1930
    %vm1932 = vcmp.eq.f32.partialorder %v430, inf
    %v1933 = vsel %vm1932, %v430, %v1931
    %vm1934 = vcmp.eq.f32.partialorder %v430, 0.0
    %v1935 = vand.u32 %v430, 2147483648
    %v1936 = vsel %vm1934, %v1935, %v1933
    %v1937 = vrsqrt.pop %v431
    %v1938 = vmul.f32 %v431, %v1937
    %vm1939 = vcmp.eq.f32.partialorder %v431, inf
    %v1940 = vsel %vm1939, %v431, %v1938
    %vm1941 = vcmp.eq.f32.partialorder %v431, 0.0
    %v1942 = vand.u32 %v431, 2147483648
    %v1943 = vsel %vm1941, %v1942, %v1940
    %v1944 = vrsqrt.pop %v432
    %v1945 = vmul.f32 %v432, %v1944
    %vm1946 = vcmp.eq.f32.partialorder %v432, inf
    %v1947 = vsel %vm1946, %v432, %v1945
    %vm1948 = vcmp.eq.f32.partialorder %v432, 0.0
    %v1949 = vand.u32 %v432, 2147483648
    %v1950 = vsel %vm1948, %v1949, %v1947
    %v1951 = vrsqrt.pop %v433
    %v1952 = vmul.f32 %v433, %v1951
    %vm1953 = vcmp.eq.f32.partialorder %v433, inf
    %v1954 = vsel %vm1953, %v433, %v1952
    %vm1955 = vcmp.eq.f32.partialorder %v433, 0.0
    %v1956 = vand.u32 %v433, 2147483648
    %v1957 = vsel %vm1955, %v1956, %v1954
    %v1958 = vrsqrt.pop %v434
    %v1959 = vmul.f32 %v434, %v1958
    %vm1960 = vcmp.eq.f32.partialorder %v434, inf
    %v1961 = vsel %vm1960, %v434, %v1959
    %vm1962 = vcmp.eq.f32.partialorder %v434, 0.0
    %v1963 = vand.u32 %v434, 2147483648
    %v1964 = vsel %vm1962, %v1963, %v1961
    %v1965 = vmul.f32 %v1859, -1.0
    %v1966 = vmul.f32 %v1866, -1.0
    %v1967 = vmul.f32 %v1873, -1.0
    %v1968 = vmul.f32 %v1880, -1.0
    %v1969 = vmul.f32 %v1887, -1.0
    %v1970 = vmul.f32 %v1894, -1.0
    %v1971 = vmul.f32 %v1901, -1.0
    %v1972 = vmul.f32 %v1908, -1.0
    %v1973 = vmul.f32 %v1915, -1.0
    %v1974 = vmul.f32 %v1922, -1.0
    %v1975 = vmul.f32 %v1929, -1.0
    %v1976 = vmul.f32 %v1936, -1.0
    %v1977 = vmul.f32 %v1943, -1.0
    %v1978 = vmul.f32 %v1950, -1.0
    %v1979 = vmul.f32 %v1957, -1.0
    %v1980 = vmul.f32 %v1964, -1.0
    %v1981 = vmul.f32 %v1965, 1.442695
    %v1982 = vpow.pop %v1981
    %v1983 = vmul.f32 %v1966, 1.442695
    %v1984 = vpow.pop %v1983
    %v1985 = vmul.f32 %v1967, 1.442695
    %v1986 = vpow.pop %v1985
    %v1987 = vmul.f32 %v1968, 1.442695
    %v1988 = vpow.pop %v1987
    %v1989 = vmul.f32 %v1969, 1.442695
    %v1990 = vpow.pop %v1989
    %v1991 = vmul.f32 %v1970, 1.442695
    %v1992 = vpow.pop %v1991
    %v1993 = vmul.f32 %v1971, 1.442695
    %v1994 = vpow.pop %v1993
    %v1995 = vmul.f32 %v1972, 1.442695
    %v1996 = vpow.pop %v1995
    %v1997 = vmul.f32 %v1973, 1.442695
    %v1998 = vpow.pop %v1997
    %v1999 = vmul.f32 %v1974, 1.442695
    %v2000 = vpow.pop %v1999
    %v2001 = vmul.f32 %v1975, 1.442695
    %v2002 = vpow.pop %v2001
    %v2003 = vmul.f32 %v1976, 1.442695
    %v2004 = vpow.pop %v2003
    %v2005 = vmul.f32 %v1977, 1.442695
    %v2006 = vpow.pop %v2005
    %v2007 = vmul.f32 %v1978, 1.442695
    %v2008 = vpow.pop %v2007
    %v2009 = vmul.f32 %v1979, 1.442695
    %v2010 = vpow.pop %v2009
    %v2011 = vmul.f32 %v1980, 1.442695
    %v2012 = vpow.pop %v2011
    %v2013 = vsel %vm1725, %v1982, 0.0
    %v2014 = vsel %vm1726, %v1984, 0.0
    %v2015 = vsel %vm1727, %v1986, 0.0
    %v2016 = vsel %vm1728, %v1988, 0.0
    %v2017 = vsel %vm1729, %v1990, 0.0
    %v2018 = vsel %vm1730, %v1992, 0.0
    %v2019 = vsel %vm1731, %v1994, 0.0
    %v2020 = vsel %vm1732, %v1996, 0.0
    %v2021 = vsel %vm1733, %v1998, 0.0
    %v2022 = vsel %vm1734, %v2000, 0.0
    %v2023 = vsel %vm1735, %v2002, 0.0
    %v2024 = vsel %vm1736, %v2004, 0.0
    %v2025 = vsel %vm1737, %v2006, 0.0
    %v2026 = vsel %vm1738, %v2008, 0.0
    %v2027 = vsel %vm1739, %v2010, 0.0
    %v2028 = vsel %vm1740, %v2012, 0.0
    %2029 = vadd.xlane.f32.xlu0 %v2013
    %v2030 = vpop.xlane.xlu0 %2029
    %2031 = vadd.xlane.f32.xlu0 %v2014
    %v2032 = vpop.xlane.xlu0 %2031
    %2033 = vadd.xlane.f32.xlu0 %v2015
    %v2034 = vpop.xlane.xlu0 %2033
    %2035 = vadd.xlane.f32.xlu0 %v2016
    %v2036 = vpop.xlane.xlu0 %2035
    %2037 = vadd.xlane.f32.xlu0 %v2017
    %v2038 = vpop.xlane.xlu0 %2037
    %2039 = vadd.xlane.f32.xlu0 %v2018
    %v2040 = vpop.xlane.xlu0 %2039
    %2041 = vadd.xlane.f32.xlu0 %v2019
    %v2042 = vpop.xlane.xlu0 %2041
    %2043 = vadd.xlane.f32.xlu0 %v2020
    %v2044 = vpop.xlane.xlu0 %2043
    %2045 = vadd.xlane.f32.xlu0 %v2021
    %v2046 = vpop.xlane.xlu0 %2045
    %2047 = vadd.xlane.f32.xlu0 %v2022
    %v2048 = vpop.xlane.xlu0 %2047
    %2049 = vadd.xlane.f32.xlu0 %v2023
    %v2050 = vpop.xlane.xlu0 %2049
    %2051 = vadd.xlane.f32.xlu0 %v2024
    %v2052 = vpop.xlane.xlu0 %2051
    %2053 = vadd.xlane.f32.xlu0 %v2025
    %v2054 = vpop.xlane.xlu0 %2053
    %2055 = vadd.xlane.f32.xlu0 %v2026
    %v2056 = vpop.xlane.xlu0 %2055
    %2057 = vadd.xlane.f32.xlu0 %v2027
    %v2058 = vpop.xlane.xlu0 %2057
    %2059 = vadd.xlane.f32.xlu0 %v2028
    %v2060 = vpop.xlane.xlu0 %2059
    %v2061 = vsel %vm1741, %v1982, 0.0
    %v2062 = vsel %vm1742, %v1984, 0.0
    %v2063 = vsel %vm1743, %v1986, 0.0
    %v2064 = vsel %vm1744, %v1988, 0.0
    %v2065 = vsel %vm1745, %v1990, 0.0
    %v2066 = vsel %vm1746, %v1992, 0.0
    %v2067 = vsel %vm1747, %v1994, 0.0
    %v2068 = vsel %vm1748, %v1996, 0.0
    %v2069 = vsel %vm1749, %v1998, 0.0
    %v2070 = vsel %vm1750, %v2000, 0.0
    %v2071 = vsel %vm1751, %v2002, 0.0
    %v2072 = vsel %vm1752, %v2004, 0.0
    %v2073 = vsel %vm1753, %v2006, 0.0
    %v2074 = vsel %vm1754, %v2008, 0.0
    %v2075 = vsel %vm1755, %v2010, 0.0
    %v2076 = vsel %vm1756, %v2012, 0.0
    %2077 = vadd.xlane.f32.xlu0 %v2061
    %v2078 = vpop.xlane.xlu0 %2077
    %2079 = vadd.xlane.f32.xlu0 %v2062
    %v2080 = vpop.xlane.xlu0 %2079
    %2081 = vadd.xlane.f32.xlu0 %v2063
    %v2082 = vpop.xlane.xlu0 %2081
    %2083 = vadd.xlane.f32.xlu0 %v2064
    %v2084 = vpop.xlane.xlu0 %2083
    %2085 = vadd.xlane.f32.xlu0 %v2065
    %v2086 = vpop.xlane.xlu0 %2085
    %2087 = vadd.xlane.f32.xlu0 %v2066
    %v2088 = vpop.xlane.xlu0 %2087
    %2089 = vadd.xlane.f32.xlu0 %v2067
    %v2090 = vpop.xlane.xlu0 %2089
    %2091 = vadd.xlane.f32.xlu0 %v2068
    %v2092 = vpop.xlane.xlu0 %2091
    %2093 = vadd.xlane.f32.xlu0 %v2069
    %v2094 = vpop.xlane.xlu0 %2093
    %2095 = vadd.xlane.f32.xlu0 %v2070
    %v2096 = vpop.xlane.xlu0 %2095
    %2097 = vadd.xlane.f32.xlu0 %v2071
    %v2098 = vpop.xlane.xlu0 %2097
    %2099 = vadd.xlane.f32.xlu0 %v2072
    %v2100 = vpop.xlane.xlu0 %2099
    %2101 = vadd.xlane.f32.xlu0 %v2073
    %v2102 = vpop.xlane.xlu0 %2101
    %2103 = vadd.xlane.f32.xlu0 %v2074
    %v2104 = vpop.xlane.xlu0 %2103
    %2105 = vadd.xlane.f32.xlu0 %v2075
    %v2106 = vpop.xlane.xlu0 %2105
    %2107 = vadd.xlane.f32.xlu0 %v2076
    %v2108 = vpop.xlane.xlu0 %2107
    %v2109 = vsel %vm605, %v436, 128
    %v2110 = vsel %vm606, %v436, 128
    %v2111 = vsel %vm607, %v436, 128
    %v2112 = vsel %vm608, %v436, 128
    %v2113 = vsel %vm609, %v436, 128
    %v2114 = vsel %vm610, %v436, 128
    %v2115 = vsel %vm611, %v436, 128
    %v2116 = vsel %vm612, %v436, 128
    %v2117 = vsel %vm613, %v436, 128
    %v2118 = vsel %vm614, %v436, 128
    %v2119 = vsel %vm615, %v436, 128
    %v2120 = vsel %vm616, %v436, 128
    %v2121 = vsel %vm617, %v436, 128
    %v2122 = vsel %vm618, %v436, 128
    %v2123 = vsel %vm619, %v436, 128
    %v2124 = vsel %vm620, %v436, 128
    %v2125 = vand.u32 %v2109, 65535
    %v2126 = vshra.s32 %v2109, 16
    %v2127 = vcvt.s32.f32 %v2125
    %v2128 = vcvt.s32.f32 %v2126
    %2129 = vmin.xlane.f32.xlu0 %v2128
    %v2130 = vpop.xlane.xlu0 %2129
    %vm2131 = vcmp.eq.f32.partialorder %v2128, %v2130
    %v2132 = vsel %vm2131, %v2127, inf
    %2133 = vmin.xlane.f32.xlu0 %v2132
    %v2134 = vpop.xlane.xlu0 %2133
    %v2135 = vcvt.f32.s32 %v2134
    %v2136 = vcvt.f32.s32 %v2130
    %v2137 = vshll.u32 %v2136, 16
    %v2138 = vadd.s32 %v2137, %v2135
    %v2139 = vand.u32 %v2110, 65535
    %v2140 = vshra.s32 %v2110, 16
    %v2141 = vcvt.s32.f32 %v2139
    %v2142 = vcvt.s32.f32 %v2140
    %2143 = vmin.xlane.f32.xlu0 %v2142
    %v2144 = vpop.xlane.xlu0 %2143
    %vm2145 = vcmp.eq.f32.partialorder %v2142, %v2144
    %v2146 = vsel %vm2145, %v2141, inf
    %2147 = vmin.xlane.f32.xlu0 %v2146
    %v2148 = vpop.xlane.xlu0 %2147
    %v2149 = vcvt.f32.s32 %v2148
    %v2150 = vcvt.f32.s32 %v2144
    %v2151 = vshll.u32 %v2150, 16
    %v2152 = vadd.s32 %v2151, %v2149
    %v2153 = vand.u32 %v2111, 65535
    %v2154 = vshra.s32 %v2111, 16
    %v2155 = vcvt.s32.f32 %v2153
    %v2156 = vcvt.s32.f32 %v2154
    %2157 = vmin.xlane.f32.xlu0 %v2156
    %v2158 = vpop.xlane.xlu0 %2157
    %vm2159 = vcmp.eq.f32.partialorder %v2156, %v2158
    %v2160 = vsel %vm2159, %v2155, inf
    %2161 = vmin.xlane.f32.xlu0 %v2160
    %v2162 = vpop.xlane.xlu0 %2161
    %v2163 = vcvt.f32.s32 %v2162
    %v2164 = vcvt.f32.s32 %v2158
    %v2165 = vshll.u32 %v2164, 16
    %v2166 = vadd.s32 %v2165, %v2163
    %v2167 = vand.u32 %v2112, 65535
    %v2168 = vshra.s32 %v2112, 16
    %v2169 = vcvt.s32.f32 %v2167
    %v2170 = vcvt.s32.f32 %v2168
    %2171 = vmin.xlane.f32.xlu0 %v2170
    %v2172 = vpop.xlane.xlu0 %2171
    %vm2173 = vcmp.eq.f32.partialorder %v2170, %v2172
    %v2174 = vsel %vm2173, %v2169, inf
    %2175 = vmin.xlane.f32.xlu0 %v2174
    %v2176 = vpop.xlane.xlu0 %2175
    %v2177 = vcvt.f32.s32 %v2176
    %v2178 = vcvt.f32.s32 %v2172
    %v2179 = vshll.u32 %v2178, 16
    %v2180 = vadd.s32 %v2179, %v2177
    %v2181 = vand.u32 %v2113, 65535
    %v2182 = vshra.s32 %v2113, 16
    %v2183 = vcvt.s32.f32 %v2181
    %v2184 = vcvt.s32.f32 %v2182
    %2185 = vmin.xlane.f32.xlu0 %v2184
    %v2186 = vpop.xlane.xlu0 %2185
    %vm2187 = vcmp.eq.f32.partialorder %v2184, %v2186
    %v2188 = vsel %vm2187, %v2183, inf
    %2189 = vmin.xlane.f32.xlu0 %v2188
    %v2190 = vpop.xlane.xlu0 %2189
    %v2191 = vcvt.f32.s32 %v2190
    %v2192 = vcvt.f32.s32 %v2186
    %v2193 = vshll.u32 %v2192, 16
    %v2194 = vadd.s32 %v2193, %v2191
    %v2195 = vand.u32 %v2114, 65535
    %v2196 = vshra.s32 %v2114, 16
    %v2197 = vcvt.s32.f32 %v2195
    %v2198 = vcvt.s32.f32 %v2196
    %2199 = vmin.xlane.f32.xlu0 %v2198
    %v2200 = vpop.xlane.xlu0 %2199
    %vm2201 = vcmp.eq.f32.partialorder %v2198, %v2200
    %v2202 = vsel %vm2201, %v2197, inf
    %2203 = vmin.xlane.f32.xlu0 %v2202
    %v2204 = vpop.xlane.xlu0 %2203
    %v2205 = vcvt.f32.s32 %v2204
    %v2206 = vcvt.f32.s32 %v2200
    %v2207 = vshll.u32 %v2206, 16
    %v2208 = vadd.s32 %v2207, %v2205
    %v2209 = vand.u32 %v2115, 65535
    %v2210 = vshra.s32 %v2115, 16
    %v2211 = vcvt.s32.f32 %v2209
    %v2212 = vcvt.s32.f32 %v2210
    %2213 = vmin.xlane.f32.xlu0 %v2212
    %v2214 = vpop.xlane.xlu0 %2213
    %vm2215 = vcmp.eq.f32.partialorder %v2212, %v2214
    %v2216 = vsel %vm2215, %v2211, inf
    %2217 = vmin.xlane.f32.xlu0 %v2216
    %v2218 = vpop.xlane.xlu0 %2217
    %v2219 = vcvt.f32.s32 %v2218
    %v2220 = vcvt.f32.s32 %v2214
    %v2221 = vshll.u32 %v2220, 16
    %v2222 = vadd.s32 %v2221, %v2219
    %v2223 = vand.u32 %v2116, 65535
    %v2224 = vshra.s32 %v2116, 16
    %v2225 = vcvt.s32.f32 %v2223
    %v2226 = vcvt.s32.f32 %v2224
    %2227 = vmin.xlane.f32.xlu0 %v2226
    %v2228 = vpop.xlane.xlu0 %2227
    %vm2229 = vcmp.eq.f32.partialorder %v2226, %v2228
    %v2230 = vsel %vm2229, %v2225, inf
    %2231 = vmin.xlane.f32.xlu0 %v2230
    %v2232 = vpop.xlane.xlu0 %2231
    %v2233 = vcvt.f32.s32 %v2232
    %v2234 = vcvt.f32.s32 %v2228
    %v2235 = vshll.u32 %v2234, 16
    %v2236 = vadd.s32 %v2235, %v2233
    %v2237 = vand.u32 %v2117, 65535
    %v2238 = vshra.s32 %v2117, 16
    %v2239 = vcvt.s32.f32 %v2237
    %v2240 = vcvt.s32.f32 %v2238
    %2241 = vmin.xlane.f32.xlu0 %v2240
    %v2242 = vpop.xlane.xlu0 %2241
    %vm2243 = vcmp.eq.f32.partialorder %v2240, %v2242
    %v2244 = vsel %vm2243, %v2239, inf
    %2245 = vmin.xlane.f32.xlu0 %v2244
    %v2246 = vpop.xlane.xlu0 %2245
    %v2247 = vcvt.f32.s32 %v2246
    %v2248 = vcvt.f32.s32 %v2242
    %v2249 = vshll.u32 %v2248, 16
    %v2250 = vadd.s32 %v2249, %v2247
    %v2251 = vand.u32 %v2118, 65535
    %v2252 = vshra.s32 %v2118, 16
    %v2253 = vcvt.s32.f32 %v2251
    %v2254 = vcvt.s32.f32 %v2252
    %2255 = vmin.xlane.f32.xlu0 %v2254
    %v2256 = vpop.xlane.xlu0 %2255
    %vm2257 = vcmp.eq.f32.partialorder %v2254, %v2256
    %v2258 = vsel %vm2257, %v2253, inf
    %2259 = vmin.xlane.f32.xlu0 %v2258
    %v2260 = vpop.xlane.xlu0 %2259
    %v2261 = vcvt.f32.s32 %v2260
    %v2262 = vcvt.f32.s32 %v2256
    %v2263 = vshll.u32 %v2262, 16
    %v2264 = vadd.s32 %v2263, %v2261
    %v2265 = vand.u32 %v2119, 65535
    %v2266 = vshra.s32 %v2119, 16
    %v2267 = vcvt.s32.f32 %v2265
    %v2268 = vcvt.s32.f32 %v2266
    %2269 = vmin.xlane.f32.xlu0 %v2268
    %v2270 = vpop.xlane.xlu0 %2269
    %vm2271 = vcmp.eq.f32.partialorder %v2268, %v2270
    %v2272 = vsel %vm2271, %v2267, inf
    %2273 = vmin.xlane.f32.xlu0 %v2272
    %v2274 = vpop.xlane.xlu0 %2273
    %v2275 = vcvt.f32.s32 %v2274
    %v2276 = vcvt.f32.s32 %v2270
    %v2277 = vshll.u32 %v2276, 16
    %v2278 = vadd.s32 %v2277, %v2275
    %v2279 = vand.u32 %v2120, 65535
    %v2280 = vshra.s32 %v2120, 16
    %v2281 = vcvt.s32.f32 %v2279
    %v2282 = vcvt.s32.f32 %v2280
    %2283 = vmin.xlane.f32.xlu0 %v2282
    %v2284 = vpop.xlane.xlu0 %2283
    %vm2285 = vcmp.eq.f32.partialorder %v2282, %v2284
    %v2286 = vsel %vm2285, %v2281, inf
    %2287 = vmin.xlane.f32.xlu0 %v2286
    %v2288 = vpop.xlane.xlu0 %2287
    %v2289 = vcvt.f32.s32 %v2288
    %v2290 = vcvt.f32.s32 %v2284
    %v2291 = vshll.u32 %v2290, 16
    %v2292 = vadd.s32 %v2291, %v2289
    %v2293 = vand.u32 %v2121, 65535
    %v2294 = vshra.s32 %v2121, 16
    %v2295 = vcvt.s32.f32 %v2293
    %v2296 = vcvt.s32.f32 %v2294
    %2297 = vmin.xlane.f32.xlu0 %v2296
    %v2298 = vpop.xlane.xlu0 %2297
    %vm2299 = vcmp.eq.f32.partialorder %v2296, %v2298
    %v2300 = vsel %vm2299, %v2295, inf
    %2301 = vmin.xlane.f32.xlu0 %v2300
    %v2302 = vpop.xlane.xlu0 %2301
    %v2303 = vcvt.f32.s32 %v2302
    %v2304 = vcvt.f32.s32 %v2298
    %v2305 = vshll.u32 %v2304, 16
    %v2306 = vadd.s32 %v2305, %v2303
    %v2307 = vand.u32 %v2122, 65535
    %v2308 = vshra.s32 %v2122, 16
    %v2309 = vcvt.s32.f32 %v2307
    %v2310 = vcvt.s32.f32 %v2308
    %2311 = vmin.xlane.f32.xlu0 %v2310
    %v2312 = vpop.xlane.xlu0 %2311
    %vm2313 = vcmp.eq.f32.partialorder %v2310, %v2312
    %v2314 = vsel %vm2313, %v2309, inf
    %2315 = vmin.xlane.f32.xlu0 %v2314
    %v2316 = vpop.xlane.xlu0 %2315
    %v2317 = vcvt.f32.s32 %v2316
    %v2318 = vcvt.f32.s32 %v2312
    %v2319 = vshll.u32 %v2318, 16
    %v2320 = vadd.s32 %v2319, %v2317
    %v2321 = vand.u32 %v2123, 65535
    %v2322 = vshra.s32 %v2123, 16
    %v2323 = vcvt.s32.f32 %v2321
    %v2324 = vcvt.s32.f32 %v2322
    %2325 = vmin.xlane.f32.xlu0 %v2324
    %v2326 = vpop.xlane.xlu0 %2325
    %vm2327 = vcmp.eq.f32.partialorder %v2324, %v2326
    %v2328 = vsel %vm2327, %v2323, inf
    %2329 = vmin.xlane.f32.xlu0 %v2328
    %v2330 = vpop.xlane.xlu0 %2329
    %v2331 = vcvt.f32.s32 %v2330
    %v2332 = vcvt.f32.s32 %v2326
    %v2333 = vshll.u32 %v2332, 16
    %v2334 = vadd.s32 %v2333, %v2331
    %v2335 = vand.u32 %v2124, 65535
    %v2336 = vshra.s32 %v2124, 16
    %v2337 = vcvt.s32.f32 %v2335
    %v2338 = vcvt.s32.f32 %v2336
    %2339 = vmin.xlane.f32.xlu0 %v2338
    %v2340 = vpop.xlane.xlu0 %2339
    %vm2341 = vcmp.eq.f32.partialorder %v2338, %v2340
    %v2342 = vsel %vm2341, %v2337, inf
    %2343 = vmin.xlane.f32.xlu0 %v2342
    %v2344 = vpop.xlane.xlu0 %2343
    %v2345 = vcvt.f32.s32 %v2344
    %v2346 = vcvt.f32.s32 %v2340
    %v2347 = vshll.u32 %v2346, 16
    %v2348 = vadd.s32 %v2347, %v2345
    %vm2349 = vcmp.eq.s32.totalorder %v436, %v2138
    %vm2350 = vcmp.eq.s32.totalorder %v436, %v2152
    %vm2351 = vcmp.eq.s32.totalorder %v436, %v2166
    %vm2352 = vcmp.eq.s32.totalorder %v436, %v2180
    %vm2353 = vcmp.eq.s32.totalorder %v436, %v2194
    %vm2354 = vcmp.eq.s32.totalorder %v436, %v2208
    %vm2355 = vcmp.eq.s32.totalorder %v436, %v2222
    %vm2356 = vcmp.eq.s32.totalorder %v436, %v2236
    %vm2357 = vcmp.eq.s32.totalorder %v436, %v2250
    %vm2358 = vcmp.eq.s32.totalorder %v436, %v2264
    %vm2359 = vcmp.eq.s32.totalorder %v436, %v2278
    %vm2360 = vcmp.eq.s32.totalorder %v436, %v2292
    %vm2361 = vcmp.eq.s32.totalorder %v436, %v2306
    %vm2362 = vcmp.eq.s32.totalorder %v436, %v2320
    %vm2363 = vcmp.eq.s32.totalorder %v436, %v2334
    %vm2364 = vcmp.eq.s32.totalorder %v436, %v2348
    %v2365 = vsel %vm2349, %v1982, 0.0
    %v2366 = vsel %vm2350, %v1984, 0.0
    %v2367 = vsel %vm2351, %v1986, 0.0
    %v2368 = vsel %vm2352, %v1988, 0.0
    %v2369 = vsel %vm2353, %v1990, 0.0
    %v2370 = vsel %vm2354, %v1992, 0.0
    %v2371 = vsel %vm2355, %v1994, 0.0
    %v2372 = vsel %vm2356, %v1996, 0.0
    %v2373 = vsel %vm2357, %v1998, 0.0
    %v2374 = vsel %vm2358, %v2000, 0.0
    %v2375 = vsel %vm2359, %v2002, 0.0
    %v2376 = vsel %vm2360, %v2004, 0.0
    %v2377 = vsel %vm2361, %v2006, 0.0
    %v2378 = vsel %vm2362, %v2008, 0.0
    %v2379 = vsel %vm2363, %v2010, 0.0
    %v2380 = vsel %vm2364, %v2012, 0.0
    %2381 = vadd.xlane.f32.xlu0 %v2365
    %v2382 = vpop.xlane.xlu0 %2381
    %2383 = vadd.xlane.f32.xlu0 %v2366
    %v2384 = vpop.xlane.xlu0 %2383
    %2385 = vadd.xlane.f32.xlu0 %v2367
    %v2386 = vpop.xlane.xlu0 %2385
    %2387 = vadd.xlane.f32.xlu0 %v2368
    %v2388 = vpop.xlane.xlu0 %2387
    %2389 = vadd.xlane.f32.xlu0 %v2369
    %v2390 = vpop.xlane.xlu0 %2389
    %2391 = vadd.xlane.f32.xlu0 %v2370
    %v2392 = vpop.xlane.xlu0 %2391
    %2393 = vadd.xlane.f32.xlu0 %v2371
    %v2394 = vpop.xlane.xlu0 %2393
    %2395 = vadd.xlane.f32.xlu0 %v2372
    %v2396 = vpop.xlane.xlu0 %2395
    %2397 = vadd.xlane.f32.xlu0 %v2373
    %v2398 = vpop.xlane.xlu0 %2397
    %2399 = vadd.xlane.f32.xlu0 %v2374
    %v2400 = vpop.xlane.xlu0 %2399
    %2401 = vadd.xlane.f32.xlu0 %v2375
    %v2402 = vpop.xlane.xlu0 %2401
    %2403 = vadd.xlane.f32.xlu0 %v2376
    %v2404 = vpop.xlane.xlu0 %2403
    %2405 = vadd.xlane.f32.xlu0 %v2377
    %v2406 = vpop.xlane.xlu0 %2405
    %2407 = vadd.xlane.f32.xlu0 %v2378
    %v2408 = vpop.xlane.xlu0 %2407
    %2409 = vadd.xlane.f32.xlu0 %v2379
    %v2410 = vpop.xlane.xlu0 %2409
    %2411 = vadd.xlane.f32.xlu0 %v2380
    %v2412 = vpop.xlane.xlu0 %2411
    %vm2413 = vcmp.gt.f32.partialorder %v1774, 0.0
    %vm2414 = vcmp.gt.f32.partialorder %v1776, 0.0
    %vm2415 = vcmp.gt.f32.partialorder %v1778, 0.0
    %vm2416 = vcmp.gt.f32.partialorder %v1780, 0.0
    %vm2417 = vcmp.gt.f32.partialorder %v1782, 0.0
    %vm2418 = vcmp.gt.f32.partialorder %v1784, 0.0
    %vm2419 = vcmp.gt.f32.partialorder %v1786, 0.0
    %vm2420 = vcmp.gt.f32.partialorder %v1788, 0.0
    %vm2421 = vcmp.gt.f32.partialorder %v1790, 0.0
    %vm2422 = vcmp.gt.f32.partialorder %v1792, 0.0
    %vm2423 = vcmp.gt.f32.partialorder %v1794, 0.0
    %vm2424 = vcmp.gt.f32.partialorder %v1796, 0.0
    %vm2425 = vcmp.gt.f32.partialorder %v1798, 0.0
    %vm2426 = vcmp.gt.f32.partialorder %v1800, 0.0
    %vm2427 = vcmp.gt.f32.partialorder %v1802, 0.0
    %vm2428 = vcmp.gt.f32.partialorder %v1804, 0.0
    %v2429 = vsel %vm2413, %v2030, %v2382
    %v2430 = vsel %vm2414, %v2032, %v2384
    %v2431 = vsel %vm2415, %v2034, %v2386
    %v2432 = vsel %vm2416, %v2036, %v2388
    %v2433 = vsel %vm2417, %v2038, %v2390
    %v2434 = vsel %vm2418, %v2040, %v2392
    %v2435 = vsel %vm2419, %v2042, %v2394
    %v2436 = vsel %vm2420, %v2044, %v2396
    %v2437 = vsel %vm2421, %v2046, %v2398
    %v2438 = vsel %vm2422, %v2048, %v2400
    %v2439 = vsel %vm2423, %v2050, %v2402
    %v2440 = vsel %vm2424, %v2052, %v2404
    %v2441 = vsel %vm2425, %v2054, %v2406
    %v2442 = vsel %vm2426, %v2056, %v2408
    %v2443 = vsel %vm2427, %v2058, %v2410
    %v2444 = vsel %vm2428, %v2060, %v2412
    %v2445 = vadd.f32 %v2429, %v2078
    %v2446 = vadd.f32 %v2430, %v2080
    %v2447 = vadd.f32 %v2431, %v2082
    %v2448 = vadd.f32 %v2432, %v2084
    %v2449 = vadd.f32 %v2433, %v2086
    %v2450 = vadd.f32 %v2434, %v2088
    %v2451 = vadd.f32 %v2435, %v2090
    %v2452 = vadd.f32 %v2436, %v2092
    %v2453 = vadd.f32 %v2437, %v2094
    %v2454 = vadd.f32 %v2438, %v2096
    %v2455 = vadd.f32 %v2439, %v2098
    %v2456 = vadd.f32 %v2440, %v2100
    %v2457 = vadd.f32 %v2441, %v2102
    %v2458 = vadd.f32 %v2442, %v2104
    %v2459 = vadd.f32 %v2443, %v2106
    %v2460 = vadd.f32 %v2444, %v2108
    %v2461 = vrcp.pop %v2445
    %v2462 = vmul.f32 %v2429, %v2461
    %v2463 = vrcp.pop %v2446
    %v2464 = vmul.f32 %v2430, %v2463
    %v2465 = vrcp.pop %v2447
    %v2466 = vmul.f32 %v2431, %v2465
    %v2467 = vrcp.pop %v2448
    %v2468 = vmul.f32 %v2432, %v2467
    %v2469 = vrcp.pop %v2449
    %v2470 = vmul.f32 %v2433, %v2469
    %v2471 = vrcp.pop %v2450
    %v2472 = vmul.f32 %v2434, %v2471
    %v2473 = vrcp.pop %v2451
    %v2474 = vmul.f32 %v2435, %v2473
    %v2475 = vrcp.pop %v2452
    %v2476 = vmul.f32 %v2436, %v2475
    %v2477 = vrcp.pop %v2453
    %v2478 = vmul.f32 %v2437, %v2477
    %v2479 = vrcp.pop %v2454
    %v2480 = vmul.f32 %v2438, %v2479
    %v2481 = vrcp.pop %v2455
    %v2482 = vmul.f32 %v2439, %v2481
    %v2483 = vrcp.pop %v2456
    %v2484 = vmul.f32 %v2440, %v2483
    %v2485 = vrcp.pop %v2457
    %v2486 = vmul.f32 %v2441, %v2485
    %v2487 = vrcp.pop %v2458
    %v2488 = vmul.f32 %v2442, %v2487
    %v2489 = vrcp.pop %v2459
    %v2490 = vmul.f32 %v2443, %v2489
    %v2491 = vrcp.pop %v2460
    %v2492 = vmul.f32 %v2444, %v2491
    %v2493 = vlog2.pop %v2462
    %v2494 = vmul.f32 %v2493, 0.6931472
    %v2495 = vlog2.pop %v2464
    %v2496 = vmul.f32 %v2495, 0.6931472
    %v2497 = vlog2.pop %v2466
    %v2498 = vmul.f32 %v2497, 0.6931472
    %v2499 = vlog2.pop %v2468
    %v2500 = vmul.f32 %v2499, 0.6931472
    %v2501 = vlog2.pop %v2470
    %v2502 = vmul.f32 %v2501, 0.6931472
    %v2503 = vlog2.pop %v2472
    %v2504 = vmul.f32 %v2503, 0.6931472
    %v2505 = vlog2.pop %v2474
    %v2506 = vmul.f32 %v2505, 0.6931472
    %v2507 = vlog2.pop %v2476
    %v2508 = vmul.f32 %v2507, 0.6931472
    %v2509 = vlog2.pop %v2478
    %v2510 = vmul.f32 %v2509, 0.6931472
    %v2511 = vlog2.pop %v2480
    %v2512 = vmul.f32 %v2511, 0.6931472
    %v2513 = vlog2.pop %v2482
    %v2514 = vmul.f32 %v2513, 0.6931472
    %v2515 = vlog2.pop %v2484
    %v2516 = vmul.f32 %v2515, 0.6931472
    %v2517 = vlog2.pop %v2486
    %v2518 = vmul.f32 %v2517, 0.6931472
    %v2519 = vlog2.pop %v2488
    %v2520 = vmul.f32 %v2519, 0.6931472
    %v2521 = vlog2.pop %v2490
    %v2522 = vmul.f32 %v2521, 0.6931472
    %v2523 = vlog2.pop %v2492
    %v2524 = vmul.f32 %v2523, 0.6931472
    %v2525 = vsub.f32 0.0, %v2494
    %v2526 = vsub.f32 0.0, %v2496
    %v2527 = vsub.f32 0.0, %v2498
    %v2528 = vsub.f32 0.0, %v2500
    %v2529 = vsub.f32 0.0, %v2502
    %v2530 = vsub.f32 0.0, %v2504
    %v2531 = vsub.f32 0.0, %v2506
    %v2532 = vsub.f32 0.0, %v2508
    %v2533 = vsub.f32 0.0, %v2510
    %v2534 = vsub.f32 0.0, %v2512
    %v2535 = vsub.f32 0.0, %v2514
    %v2536 = vsub.f32 0.0, %v2516
    %v2537 = vsub.f32 0.0, %v2518
    %v2538 = vsub.f32 0.0, %v2520
    %v2539 = vsub.f32 0.0, %v2522
    %v2540 = vsub.f32 0.0, %v2524
    %v2541 = vsel %vm605, 1.0, 0.0
    %v2542 = vsel %vm606, 1.0, 0.0
    %v2543 = vsel %vm607, 1.0, 0.0
    %v2544 = vsel %vm608, 1.0, 0.0
    %v2545 = vsel %vm609, 1.0, 0.0
    %v2546 = vsel %vm610, 1.0, 0.0
    %v2547 = vsel %vm611, 1.0, 0.0
    %v2548 = vsel %vm612, 1.0, 0.0
    %v2549 = vsel %vm613, 1.0, 0.0
    %v2550 = vsel %vm614, 1.0, 0.0
    %v2551 = vsel %vm615, 1.0, 0.0
    %v2552 = vsel %vm616, 1.0, 0.0
    %v2553 = vsel %vm617, 1.0, 0.0
    %v2554 = vsel %vm618, 1.0, 0.0
    %v2555 = vsel %vm619, 1.0, 0.0
    %v2556 = vsel %vm620, 1.0, 0.0
    %2557 = vadd.xlane.f32.xlu0 %v2541
    %v2558 = vpop.xlane.xlu0 %2557
    %2559 = vadd.xlane.f32.xlu0 %v2542
    %v2560 = vpop.xlane.xlu0 %2559
    %2561 = vadd.xlane.f32.xlu0 %v2543
    %v2562 = vpop.xlane.xlu0 %2561
    %2563 = vadd.xlane.f32.xlu0 %v2544
    %v2564 = vpop.xlane.xlu0 %2563
    %2565 = vadd.xlane.f32.xlu0 %v2545
    %v2566 = vpop.xlane.xlu0 %2565
    %2567 = vadd.xlane.f32.xlu0 %v2546
    %v2568 = vpop.xlane.xlu0 %2567
    %2569 = vadd.xlane.f32.xlu0 %v2547
    %v2570 = vpop.xlane.xlu0 %2569
    %2571 = vadd.xlane.f32.xlu0 %v2548
    %v2572 = vpop.xlane.xlu0 %2571
    %2573 = vadd.xlane.f32.xlu0 %v2549
    %v2574 = vpop.xlane.xlu0 %2573
    %2575 = vadd.xlane.f32.xlu0 %v2550
    %v2576 = vpop.xlane.xlu0 %2575
    %2577 = vadd.xlane.f32.xlu0 %v2551
    %v2578 = vpop.xlane.xlu0 %2577
    %2579 = vadd.xlane.f32.xlu0 %v2552
    %v2580 = vpop.xlane.xlu0 %2579
    %2581 = vadd.xlane.f32.xlu0 %v2553
    %v2582 = vpop.xlane.xlu0 %2581
    %2583 = vadd.xlane.f32.xlu0 %v2554
    %v2584 = vpop.xlane.xlu0 %2583
    %2585 = vadd.xlane.f32.xlu0 %v2555
    %v2586 = vpop.xlane.xlu0 %2585
    %2587 = vadd.xlane.f32.xlu0 %v2556
    %v2588 = vpop.xlane.xlu0 %2587
    %v2589 = vsel %vm621, 1.0, 0.0
    %v2590 = vsel %vm622, 1.0, 0.0
    %v2591 = vsel %vm623, 1.0, 0.0
    %v2592 = vsel %vm624, 1.0, 0.0
    %v2593 = vsel %vm625, 1.0, 0.0
    %v2594 = vsel %vm626, 1.0, 0.0
    %v2595 = vsel %vm627, 1.0, 0.0
    %v2596 = vsel %vm628, 1.0, 0.0
    %v2597 = vsel %vm629, 1.0, 0.0
    %v2598 = vsel %vm630, 1.0, 0.0
    %v2599 = vsel %vm631, 1.0, 0.0
    %v2600 = vsel %vm632, 1.0, 0.0
    %v2601 = vsel %vm633, 1.0, 0.0
    %v2602 = vsel %vm634, 1.0, 0.0
    %v2603 = vsel %vm635, 1.0, 0.0
    %v2604 = vsel %vm636, 1.0, 0.0
    %2605 = vadd.xlane.f32.xlu0 %v2589
    %v2606 = vpop.xlane.xlu0 %2605
    %2607 = vadd.xlane.f32.xlu0 %v2590
    %v2608 = vpop.xlane.xlu0 %2607
    %2609 = vadd.xlane.f32.xlu0 %v2591
    %v2610 = vpop.xlane.xlu0 %2609
    %2611 = vadd.xlane.f32.xlu0 %v2592
    %v2612 = vpop.xlane.xlu0 %2611
    %2613 = vadd.xlane.f32.xlu0 %v2593
    %v2614 = vpop.xlane.xlu0 %2613
    %2615 = vadd.xlane.f32.xlu0 %v2594
    %v2616 = vpop.xlane.xlu0 %2615
    %2617 = vadd.xlane.f32.xlu0 %v2595
    %v2618 = vpop.xlane.xlu0 %2617
    %2619 = vadd.xlane.f32.xlu0 %v2596
    %v2620 = vpop.xlane.xlu0 %2619
    %2621 = vadd.xlane.f32.xlu0 %v2597
    %v2622 = vpop.xlane.xlu0 %2621
    %2623 = vadd.xlane.f32.xlu0 %v2598
    %v2624 = vpop.xlane.xlu0 %2623
    %2625 = vadd.xlane.f32.xlu0 %v2599
    %v2626 = vpop.xlane.xlu0 %2625
    %2627 = vadd.xlane.f32.xlu0 %v2600
    %v2628 = vpop.xlane.xlu0 %2627
    %2629 = vadd.xlane.f32.xlu0 %v2601
    %v2630 = vpop.xlane.xlu0 %2629
    %2631 = vadd.xlane.f32.xlu0 %v2602
    %v2632 = vpop.xlane.xlu0 %2631
    %2633 = vadd.xlane.f32.xlu0 %v2603
    %v2634 = vpop.xlane.xlu0 %2633
    %2635 = vadd.xlane.f32.xlu0 %v2604
    %v2636 = vpop.xlane.xlu0 %2635
    %v2637 = vsub.f32 %v2606, 96.0
    %v2638 = vsub.f32 %v2608, 96.0
    %v2639 = vsub.f32 %v2610, 96.0
    %v2640 = vsub.f32 %v2612, 96.0
    %v2641 = vsub.f32 %v2614, 96.0
    %v2642 = vsub.f32 %v2616, 96.0
    %v2643 = vsub.f32 %v2618, 96.0
    %v2644 = vsub.f32 %v2620, 96.0
    %v2645 = vsub.f32 %v2622, 96.0
    %v2646 = vsub.f32 %v2624, 96.0
    %v2647 = vsub.f32 %v2626, 96.0
    %v2648 = vsub.f32 %v2628, 96.0
    %v2649 = vsub.f32 %v2630, 96.0
    %v2650 = vsub.f32 %v2632, 96.0
    %v2651 = vsub.f32 %v2634, 96.0
    %v2652 = vsub.f32 %v2636, 96.0
    %vm2653 = vcmp.gt.f32.partialorder %v2558, 0.0
    %vm2654 = vcmp.gt.f32.partialorder %v2560, 0.0
    %vm2655 = vcmp.gt.f32.partialorder %v2562, 0.0
    %vm2656 = vcmp.gt.f32.partialorder %v2564, 0.0
    %vm2657 = vcmp.gt.f32.partialorder %v2566, 0.0
    %vm2658 = vcmp.gt.f32.partialorder %v2568, 0.0
    %vm2659 = vcmp.gt.f32.partialorder %v2570, 0.0
    %vm2660 = vcmp.gt.f32.partialorder %v2572, 0.0
    %vm2661 = vcmp.gt.f32.partialorder %v2574, 0.0
    %vm2662 = vcmp.gt.f32.partialorder %v2576, 0.0
    %vm2663 = vcmp.gt.f32.partialorder %v2578, 0.0
    %vm2664 = vcmp.gt.f32.partialorder %v2580, 0.0
    %vm2665 = vcmp.gt.f32.partialorder %v2582, 0.0
    %vm2666 = vcmp.gt.f32.partialorder %v2584, 0.0
    %vm2667 = vcmp.gt.f32.partialorder %v2586, 0.0
    %vm2668 = vcmp.gt.f32.partialorder %v2588, 0.0
    %vm2669 = vcmp.gt.f32.partialorder %v2637, 0.0
    %vm2670 = vcmp.gt.f32.partialorder %v2638, 0.0
    %vm2671 = vcmp.gt.f32.partialorder %v2639, 0.0
    %vm2672 = vcmp.gt.f32.partialorder %v2640, 0.0
    %vm2673 = vcmp.gt.f32.partialorder %v2641, 0.0
    %vm2674 = vcmp.gt.f32.partialorder %v2642, 0.0
    %vm2675 = vcmp.gt.f32.partialorder %v2643, 0.0
    %vm2676 = vcmp.gt.f32.partialorder %v2644, 0.0
    %vm2677 = vcmp.gt.f32.partialorder %v2645, 0.0
    %vm2678 = vcmp.gt.f32.partialorder %v2646, 0.0
    %vm2679 = vcmp.gt.f32.partialorder %v2647, 0.0
    %vm2680 = vcmp.gt.f32.partialorder %v2648, 0.0
    %vm2681 = vcmp.gt.f32.partialorder %v2649, 0.0
    %vm2682 = vcmp.gt.f32.partialorder %v2650, 0.0
    %vm2683 = vcmp.gt.f32.partialorder %v2651, 0.0
    %vm2684 = vcmp.gt.f32.partialorder %v2652, 0.0
    %vm2685 = vmand %vm2653, %vm2669
    %vm2686 = vmand %vm2654, %vm2670
    %vm2687 = vmand %vm2655, %vm2671
    %vm2688 = vmand %vm2656, %vm2672
    %vm2689 = vmand %vm2657, %vm2673
    %vm2690 = vmand %vm2658, %vm2674
    %vm2691 = vmand %vm2659, %vm2675
    %vm2692 = vmand %vm2660, %vm2676
    %vm2693 = vmand %vm2661, %vm2677
    %vm2694 = vmand %vm2662, %vm2678
    %vm2695 = vmand %vm2663, %vm2679
    %vm2696 = vmand %vm2664, %vm2680
    %vm2697 = vmand %vm2665, %vm2681
    %vm2698 = vmand %vm2666, %vm2682
    %vm2699 = vmand %vm2667, %vm2683
    %vm2700 = vmand %vm2668, %vm2684
    %vm2701 = vcmp.lt.s32.totalorder %v455, 32
    %vm2702 = vcmp.lt.s32.totalorder %v456, 32
    %vm2703 = vcmp.lt.s32.totalorder %v457, 32
    %vm2704 = vcmp.lt.s32.totalorder %v458, 32
    %vm2705 = vcmp.lt.s32.totalorder %v459, 32
    %vm2706 = vcmp.lt.s32.totalorder %v460, 32
    %vm2707 = vcmp.lt.s32.totalorder %v461, 32
    %vm2708 = vcmp.lt.s32.totalorder %v462, 32
    %vm2709 = vcmp.lt.s32.totalorder %v463, 32
    %vm2710 = vcmp.lt.s32.totalorder %v464, 32
    %vm2711 = vcmp.lt.s32.totalorder %v465, 32
    %vm2712 = vcmp.lt.s32.totalorder %v466, 32
    %vm2713 = vcmp.lt.s32.totalorder %v467, 32
    %vm2714 = vcmp.lt.s32.totalorder %v468, 32
    %vm2715 = vcmp.lt.s32.totalorder %v469, 32
    %vm2716 = vcmp.lt.s32.totalorder %v470, 32
    %vm2717 = vmand %vm2685, %vm2701
    %vm2718 = vmand %vm2686, %vm2702
    %vm2719 = vmand %vm2687, %vm2703
    %vm2720 = vmand %vm2688, %vm2704
    %vm2721 = vmand %vm2689, %vm2705
    %vm2722 = vmand %vm2690, %vm2706
    %vm2723 = vmand %vm2691, %vm2707
    %vm2724 = vmand %vm2692, %vm2708
    %vm2725 = vmand %vm2693, %vm2709
    %vm2726 = vmand %vm2694, %vm2710
    %vm2727 = vmand %vm2695, %vm2711
    %vm2728 = vmand %vm2696, %vm2712
    %vm2729 = vmand %vm2697, %vm2713
    %vm2730 = vmand %vm2698, %vm2714
    %vm2731 = vmand %vm2699, %vm2715
    %vm2732 = vmand %vm2700, %vm2716
    %v2733 = vsel %vm2413, %v1774, 1.0
    %v2734 = vsel %vm2414, %v1776, 1.0
    %v2735 = vsel %vm2415, %v1778, 1.0
    %v2736 = vsel %vm2416, %v1780, 1.0
    %v2737 = vsel %vm2417, %v1782, 1.0
    %v2738 = vsel %vm2418, %v1784, 1.0
    %v2739 = vsel %vm2419, %v1786, 1.0
    %v2740 = vsel %vm2420, %v1788, 1.0
    %v2741 = vsel %vm2421, %v1790, 1.0
    %v2742 = vsel %vm2422, %v1792, 1.0
    %v2743 = vsel %vm2423, %v1794, 1.0
    %v2744 = vsel %vm2424, %v1796, 1.0
    %v2745 = vsel %vm2425, %v1798, 1.0
    %v2746 = vsel %vm2426, %v1800, 1.0
    %v2747 = vsel %vm2427, %v1802, 1.0
    %v2748 = vsel %vm2428, %v1804, 1.0
    %vm2749 = vcmp.gt.f32.partialorder %v2733, %v1822
    %vm2750 = vcmp.gt.f32.partialorder %v2734, %v1824
    %vm2751 = vcmp.gt.f32.partialorder %v2735, %v1826
    %vm2752 = vcmp.gt.f32.partialorder %v2736, %v1828
    %vm2753 = vcmp.gt.f32.partialorder %v2737, %v1830
    %vm2754 = vcmp.gt.f32.partialorder %v2738, %v1832
    %vm2755 = vcmp.gt.f32.partialorder %v2739, %v1834
    %vm2756 = vcmp.gt.f32.partialorder %v2740, %v1836
    %vm2757 = vcmp.gt.f32.partialorder %v2741, %v1838
    %vm2758 = vcmp.gt.f32.partialorder %v2742, %v1840
    %vm2759 = vcmp.gt.f32.partialorder %v2743, %v1842
    %vm2760 = vcmp.gt.f32.partialorder %v2744, %v1844
    %vm2761 = vcmp.gt.f32.partialorder %v2745, %v1846
    %vm2762 = vcmp.gt.f32.partialorder %v2746, %v1848
    %vm2763 = vcmp.gt.f32.partialorder %v2747, %v1850
    %vm2764 = vcmp.gt.f32.partialorder %v2748, %v1852
    %v2765 = vsel %vm2749, 1.0, 0.0
    %v2766 = vsel %vm2750, 1.0, 0.0
    %v2767 = vsel %vm2751, 1.0, 0.0
    %v2768 = vsel %vm2752, 1.0, 0.0
    %v2769 = vsel %vm2753, 1.0, 0.0
    %v2770 = vsel %vm2754, 1.0, 0.0
    %v2771 = vsel %vm2755, 1.0, 0.0
    %v2772 = vsel %vm2756, 1.0, 0.0
    %v2773 = vsel %vm2757, 1.0, 0.0
    %v2774 = vsel %vm2758, 1.0, 0.0
    %v2775 = vsel %vm2759, 1.0, 0.0
    %v2776 = vsel %vm2760, 1.0, 0.0
    %v2777 = vsel %vm2761, 1.0, 0.0
    %v2778 = vsel %vm2762, 1.0, 0.0
    %v2779 = vsel %vm2763, 1.0, 0.0
    %v2780 = vsel %vm2764, 1.0, 0.0
    %v2781 = vsel %vm2717, %v2525, 0.0
    %v2782 = vsel %vm2718, %v2526, 0.0
    %v2783 = vsel %vm2719, %v2527, 0.0
    %v2784 = vsel %vm2720, %v2528, 0.0
    %v2785 = vsel %vm2721, %v2529, 0.0
    %v2786 = vsel %vm2722, %v2530, 0.0
    %v2787 = vsel %vm2723, %v2531, 0.0
    %v2788 = vsel %vm2724, %v2532, 0.0
    %v2789 = vsel %vm2725, %v2533, 0.0
    %v2790 = vsel %vm2726, %v2534, 0.0
    %v2791 = vsel %vm2727, %v2535, 0.0
    %v2792 = vsel %vm2728, %v2536, 0.0
    %v2793 = vsel %vm2729, %v2537, 0.0
    %v2794 = vsel %vm2730, %v2538, 0.0
    %v2795 = vsel %vm2731, %v2539, 0.0
    %v2796 = vsel %vm2732, %v2540, 0.0
    %v2797 = vsel %vm2717, %v2765, 0.0
    %v2798 = vsel %vm2718, %v2766, 0.0
    %v2799 = vsel %vm2719, %v2767, 0.0
    %v2800 = vsel %vm2720, %v2768, 0.0
    %v2801 = vsel %vm2721, %v2769, 0.0
    %v2802 = vsel %vm2722, %v2770, 0.0
    %v2803 = vsel %vm2723, %v2771, 0.0
    %v2804 = vsel %vm2724, %v2772, 0.0
    %v2805 = vsel %vm2725, %v2773, 0.0
    %v2806 = vsel %vm2726, %v2774, 0.0
    %v2807 = vsel %vm2727, %v2775, 0.0
    %v2808 = vsel %vm2728, %v2776, 0.0
    %v2809 = vsel %vm2729, %v2777, 0.0
    %v2810 = vsel %vm2730, %v2778, 0.0
    %v2811 = vsel %vm2731, %v2779, 0.0
    %v2812 = vsel %vm2732, %v2780, 0.0
    %v2813 = vsel %vm2717, %v1774, 0.0
    %v2814 = vsel %vm2718, %v1776, 0.0
    %v2815 = vsel %vm2719, %v1778, 0.0
    %v2816 = vsel %vm2720, %v1780, 0.0
    %v2817 = vsel %vm2721, %v1782, 0.0
    %v2818 = vsel %vm2722, %v1784, 0.0
    %v2819 = vsel %vm2723, %v1786, 0.0
    %v2820 = vsel %vm2724, %v1788, 0.0
    %v2821 = vsel %vm2725, %v1790, 0.0
    %v2822 = vsel %vm2726, %v1792, 0.0
    %v2823 = vsel %vm2727, %v1794, 0.0
    %v2824 = vsel %vm2728, %v1796, 0.0
    %v2825 = vsel %vm2729, %v1798, 0.0
    %v2826 = vsel %vm2730, %v1800, 0.0
    %v2827 = vsel %vm2731, %v1802, 0.0
    %v2828 = vsel %vm2732, %v1804, 0.0
    %v2829 = vsel %vm2717, %v1822, 0.0
    %v2830 = vsel %vm2718, %v1824, 0.0
    %v2831 = vsel %vm2719, %v1826, 0.0
    %v2832 = vsel %vm2720, %v1828, 0.0
    %v2833 = vsel %vm2721, %v1830, 0.0
    %v2834 = vsel %vm2722, %v1832, 0.0
    %v2835 = vsel %vm2723, %v1834, 0.0
    %v2836 = vsel %vm2724, %v1836, 0.0
    %v2837 = vsel %vm2725, %v1838, 0.0
    %v2838 = vsel %vm2726, %v1840, 0.0
    %v2839 = vsel %vm2727, %v1842, 0.0
    %v2840 = vsel %vm2728, %v1844, 0.0
    %v2841 = vsel %vm2729, %v1846, 0.0
    %v2842 = vsel %vm2730, %v1848, 0.0
    %v2843 = vsel %vm2731, %v1850, 0.0
    %v2844 = vsel %vm2732, %v1852, 0.0
    %vm2845 = vcmp.eq.s32.totalorder %v436, 0
    %v2846 = vsel %vm2845, %v2781, 0.0
    %v2847 = vsel %vm2845, %v2782, 0.0
    %v2848 = vsel %vm2845, %v2783, 0.0
    %v2849 = vsel %vm2845, %v2784, 0.0
    %v2850 = vsel %vm2845, %v2785, 0.0
    %v2851 = vsel %vm2845, %v2786, 0.0
    %v2852 = vsel %vm2845, %v2787, 0.0
    %v2853 = vsel %vm2845, %v2788, 0.0
    %v2854 = vsel %vm2845, %v2789, 0.0
    %v2855 = vsel %vm2845, %v2790, 0.0
    %v2856 = vsel %vm2845, %v2791, 0.0
    %v2857 = vsel %vm2845, %v2792, 0.0
    %v2858 = vsel %vm2845, %v2793, 0.0
    %v2859 = vsel %vm2845, %v2794, 0.0
    %v2860 = vsel %vm2845, %v2795, 0.0
    %v2861 = vsel %vm2845, %v2796, 0.0
    %vm2862 = vcmp.eq.s32.totalorder %v436, 1
    %v2863 = vsel %vm2862, %v2797, %v2846
    %v2864 = vsel %vm2862, %v2798, %v2847
    %v2865 = vsel %vm2862, %v2799, %v2848
    %v2866 = vsel %vm2862, %v2800, %v2849
    %v2867 = vsel %vm2862, %v2801, %v2850
    %v2868 = vsel %vm2862, %v2802, %v2851
    %v2869 = vsel %vm2862, %v2803, %v2852
    %v2870 = vsel %vm2862, %v2804, %v2853
    %v2871 = vsel %vm2862, %v2805, %v2854
    %v2872 = vsel %vm2862, %v2806, %v2855
    %v2873 = vsel %vm2862, %v2807, %v2856
    %v2874 = vsel %vm2862, %v2808, %v2857
    %v2875 = vsel %vm2862, %v2809, %v2858
    %v2876 = vsel %vm2862, %v2810, %v2859
    %v2877 = vsel %vm2862, %v2811, %v2860
    %v2878 = vsel %vm2862, %v2812, %v2861
    %vm2879 = vcmp.eq.s32.totalorder %v436, 2
    %v2880 = vsel %vm2879, %v2813, %v2863
    %v2881 = vsel %vm2879, %v2814, %v2864
    %v2882 = vsel %vm2879, %v2815, %v2865
    %v2883 = vsel %vm2879, %v2816, %v2866
    %v2884 = vsel %vm2879, %v2817, %v2867
    %v2885 = vsel %vm2879, %v2818, %v2868
    %v2886 = vsel %vm2879, %v2819, %v2869
    %v2887 = vsel %vm2879, %v2820, %v2870
    %v2888 = vsel %vm2879, %v2821, %v2871
    %v2889 = vsel %vm2879, %v2822, %v2872
    %v2890 = vsel %vm2879, %v2823, %v2873
    %v2891 = vsel %vm2879, %v2824, %v2874
    %v2892 = vsel %vm2879, %v2825, %v2875
    %v2893 = vsel %vm2879, %v2826, %v2876
    %v2894 = vsel %vm2879, %v2827, %v2877
    %v2895 = vsel %vm2879, %v2828, %v2878
    %vm2896 = vcmp.eq.s32.totalorder %v436, 3
    %v2897 = vsel %vm2896, %v2829, %v2880
    %v2898 = vsel %vm2896, %v2830, %v2881
    %v2899 = vsel %vm2896, %v2831, %v2882
    %v2900 = vsel %vm2896, %v2832, %v2883
    %v2901 = vsel %vm2896, %v2833, %v2884
    %v2902 = vsel %vm2896, %v2834, %v2885
    %v2903 = vsel %vm2896, %v2835, %v2886
    %v2904 = vsel %vm2896, %v2836, %v2887
    %v2905 = vsel %vm2896, %v2837, %v2888
    %v2906 = vsel %vm2896, %v2838, %v2889
    %v2907 = vsel %vm2896, %v2839, %v2890
    %v2908 = vsel %vm2896, %v2840, %v2891
    %v2909 = vsel %vm2896, %v2841, %v2892
    %v2910 = vsel %vm2896, %v2842, %v2893
    %v2911 = vsel %vm2896, %v2843, %v2894
    %v2912 = vsel %vm2896, %v2844, %v2895
    %2913 = vst [vmem:[#allocation2] sm:$0xff] %v2897
    %2914 = vst [vmem:[#allocation2 + $0x8] sm:$0xff] %v2898
    %2915 = vst [vmem:[#allocation2 + $0x10] sm:$0xff] %v2899
    %2916 = vst [vmem:[#allocation2 + $0x18] sm:$0xff] %v2900
    %2917 = vst [vmem:[#allocation2 + $0x20] sm:$0xff] %v2901
    %2918 = vst [vmem:[#allocation2 + $0x28] sm:$0xff] %v2902
    %2919 = vst [vmem:[#allocation2 + $0x30] sm:$0xff] %v2903
    %2920 = vst [vmem:[#allocation2 + $0x38] sm:$0xff] %v2904
    %2921 = vst [vmem:[#allocation2 + $0x40] sm:$0xff] %v2905
    %2922 = vst [vmem:[#allocation2 + $0x48] sm:$0xff] %v2906
    %2923 = vst [vmem:[#allocation2 + $0x50] sm:$0xff] %v2907
    %2924 = vst [vmem:[#allocation2 + $0x58] sm:$0xff] %v2908
    %2925 = vst [vmem:[#allocation2 + $0x60] sm:$0xff] %v2909
    %2926 = vst [vmem:[#allocation2 + $0x68] sm:$0xff] %v2910
    %2927 = vst [vmem:[#allocation2 + $0x70] sm:$0xff] %v2911
    %2928 = vst [vmem:[#allocation2 + $0x78] sm:$0xff] %v2912
    // Predicated region
    $region26: #{tpu_custom_call.1} parent=1 // pred_check
      _
    $region27: #{tpu_custom_call.1} parent=1 // pred_check_branch
      %2930 = sbr.rel (0) target = $region29
    $region28: #{tpu_custom_call.1} parent=1 // pred_region
      %s2932 = ssub.s32 2048, 2048
      %2933 = vsyncadd [#allocation3], %s2932
      %s2934 = sshll.u32 [#allocation2], 4
      %s2935 = int_to_ptr.vmem [resolvable:$true] %s2934
      %2940 = dma.vmem_to_hbm [thread:$0]  %s2935, 2048, %s6, [#allocation3], 128, 128, 8
    $region29: #{tpu_custom_call.1} parent=1 // pred_fallthru
      _
    // Predicated region
    $region30: #{tpu_custom_call.1} parent=1 // pred_check
      _
    $region31: #{tpu_custom_call.1} parent=1 // pred_check_branch
      %2942 = sbr.rel (0) target = $region33
    $region32: #{tpu_custom_call.1} parent=1 // pred_region
      %2943 = dma.done [#allocation3], 2048
    $region33: #{tpu_custom_call.1} parent=1 // pred_fallthru
      _
    %2944 = vsyncpa [#allocation3], 1

</llo_original>
